<compile_context>
chip_gen: v7x
topology: tpu7x:2x2x1
jax: 0.10.0
libtpu: 0.0.40
codegen_flags: <defaults>
</compile_context>

<pallas_src>
import jax
import jax.numpy as jnp
from jax.experimental import pallas as pl
from jax.experimental.pallas import tpu as pltpu

LANE = 128     # vreg lane width
SUBLANE = 8    # sublane granularity for the batch tile


def _round_up(x, m):
    return ((x + m - 1) // m) * m


def _device_kind():
    try:
        return jax.devices()[0].device_kind.lower()
    except Exception:
        return ""


def _num_tensorcores(device_kind):
    """Best-effort TensorCore count per chip (only used for tile sizing)."""
    if "v7" in device_kind:
        return 2                                     # v7x: 2 TCs share the 'parallel' axis
    if ("v4" in device_kind or "v5p" in device_kind) and "lite" not in device_kind:
        return 2                                     # megacore chips
    return 1                                         # v5e / v6e: single TensorCore


def _pad_dim(dim, device_kind):
    """Lane padding target: 128 for narrow dims; 256-aligned for wide dims on v6e/v7x."""
    if dim <= LANE:
        return LANE
    if "v5e" in device_kind or "v5 lite" in device_kind:
        return _round_up(dim, LANE)                  # v5e MXU is 128x128
    return _round_up(dim, 2 * LANE)                  # v6e/v7x MXU is 256-wide


def _make_mlp_kernel(n_hidden):
    """Fused MLP kernel: n_hidden x (matmul + bias + relu), then output matmul + bias."""

    def kernel(*refs):
        # refs = [x_ref, (w_ref, b_ref) * n_hidden, wo_ref, bo_ref, o_ref]
        x_ref = refs[0]
        o_ref = refs[-1]
        h = x_ref[...]
        idx = 1
        for _ in range(n_hidden):
            w = refs[idx][...]
            b = refs[idx + 1][...]
            idx += 2
            h = jnp.maximum(
                jnp.dot(h.astype(w.dtype), w, preferred_element_type=jnp.float32) + b,
                0.0,
            )
        wo = refs[idx][...]
        bo = refs[idx + 1][...]
        o_ref[...] = (
            jnp.dot(h.astype(wo.dtype), wo, preferred_element_type=jnp.float32) + bo
        )

    return kernel


def linear_model_forward(x, params, *, max_block_b=1024, compute_dtype=None,
                         return_padded=False):
    """Fused forward pass of LinearModel.

    x:      (B, n_inputs) float32
    params: list of (W, b) pairs, one per hidden layer plus the output layer,
            with W of shape (in_features, out_features) and b of shape (out_features,).
    """
    x = jnp.asarray(x, jnp.float32)
    B, n_in = x.shape
    n_hidden = len(params) - 1
    true_dims = [n_in] + [int(w.shape[1]) for (w, _) in params]
    n_out = true_dims[-1]

    device_kind = _device_kind()

    # bf16 MXU feed (f32 accumulation) only pays off for genuinely wide layers;
    # the toy model stays exact f32.
    if compute_dtype is None:
        compute_dtype = jnp.bfloat16 if max(true_dims) > 256 else jnp.float32

    # --- Pad *output* feature dims to lane multiples (exact through bias(0)+ReLU).
    #     The input feature dim keeps its true width: Mosaic pads vregs, not HBM. ---
    padded = []
    fan_in_p = n_in
    for (w, b) in params:
        w = jnp.asarray(w, jnp.float32)
        b = jnp.asarray(b, jnp.float32)
        out_p = _pad_dim(int(w.shape[1]), device_kind)
        w_p = jnp.pad(w, ((0, fan_in_p - w.shape[0]), (0, out_p - w.shape[1])))
        b_p = jnp.pad(b, (0, out_p - b.shape[0])).reshape(1, out_p)
        padded.append((w_p.astype(compute_dtype), b_p))
        fan_in_p = out_p
    n_out_p = fan_in_p

    # --- Generation-aware batch tile: one grid step per TensorCore for small batches,
    #     capped for large ones.  Batch is row-padded (only) to a tile multiple. ---
    n_cores = _num_tensorcores(device_kind)
    B8 = _round_up(B, SUBLANE)
    block_b = min(_round_up(pl.cdiv(B8, n_cores), SUBLANE),
                  _round_up(max_block_b, SUBLANE))
    B_p = _round_up(B, block_b)
    x_p = x if B_p == B else jnp.pad(x, ((0, B_p - B), (0, 0)))
    grid = (B_p // block_b,)

    flat_args = [x_p]
    for (w_p, b_p) in padded:
        flat_args.append(w_p)
        flat_args.append(b_p)

    # --- Scheduling hints from TRUE (unpadded) dims. ---
    flops = 2 * B * sum(true_dims[k] * true_dims[k + 1]
                        for k in range(len(true_dims) - 1))
    param_bytes = 4 * sum(true_dims[k] * true_dims[k + 1] + true_dims[k + 1]
                          for k in range(len(true_dims) - 1))
    bytes_accessed = 4 * B * (n_in + n_out) + param_bytes
    cost = pl.CostEstimate(flops=flops, transcendentals=0,
                           bytes_accessed=bytes_accessed)

    def _build_call(single_buffer_weights):
        wb_kwargs = ({"pipeline_mode": pl.Buffered(1)}
                     if single_buffer_weights else {})
        in_specs = [pl.BlockSpec((block_b, n_in), lambda i: (i, 0))]
        for (w_p, b_p) in padded:
            # Constant index_map: weight/bias blocks stay resident in VMEM across steps.
            in_specs.append(pl.BlockSpec(w_p.shape, lambda i: (0, 0), **wb_kwargs))
            in_specs.append(pl.BlockSpec(b_p.shape, lambda i: (0, 0), **wb_kwargs))
        out_specs = pl.BlockSpec((block_b, n_out_p), lambda i: (i, 0))

        # VMEM budget ~2x actual need (x/out double-buffered, weights as configured).
        w_bufs = 1 if single_buffer_weights else 2
        w_item = jnp.dtype(compute_dtype).itemsize
        vmem_needed = (
            2 * block_b * n_in * 4
            + 2 * block_b * n_out_p * 4
            + w_bufs * sum(int(w.size) * w_item + int(b.size) * 4
                           for (w, b) in padded)
        )
        vmem_limit = int(min(max(2 * vmem_needed, 2 * 2**20), 48 * 2**20))

        return pl.pallas_call(
            _make_mlp_kernel(n_hidden),
            out_shape=jax.ShapeDtypeStruct((B_p, n_out_p), jnp.float32),
            grid=grid,
            in_specs=in_specs,
            out_specs=out_specs,
            compiler_params=pltpu.CompilerParams(
                dimension_semantics=("parallel",),
                vmem_limit_bytes=vmem_limit,
            ),
            cost_estimate=cost,
        )

    try:
        out_padded = _build_call(single_buffer_weights=True)(*flat_args)
    except Exception:
        # Some jax versions reject pl.Buffered(1); fall back to default double-buffering.
        out_padded = _build_call(single_buffer_weights=False)(*flat_args)

    if return_padded:
        # Lane-dense padded slab (B_p, n_out_p): lets a fused consumer skip the
        # extra HBM round-trip of the slice below.
        return out_padded
    return out_padded[:B, :n_out]


def init_linear_params(key, in_features, out_features):
    """Deterministic init mimicking nn.Linear default (uniform +/- 1/sqrt(fan_in))."""
    kw, kb = jax.random.split(key)
    bound = 1.0 / jnp.sqrt(jnp.float32(in_features))
    # Stored already transposed: (in_features, out_features).
    w = jax.random.uniform(kw, (in_features, out_features), jnp.float32, -bound, bound)
    b = jax.random.uniform(kb, (out_features,), jnp.float32, -bound, bound)
    return w, b


def reference_forward(x, params):
    h = x
    for (w, b) in params[:-1]:
        h = jnp.maximum(h @ w + b, 0.0)
    wo, bo = params[-1]
    return h @ wo + bo


# TODO(synk): training utilities of LinearModel (Adam optimizer, MSE loss, save/load)
# are host-side PyTorch plumbing with no Pallas equivalent; only forward() is implemented.

if __name__ == "__main__":
    # Equivalent of LinearModel('LinearModel0', lr=0.001, n_outputs=1, n_inputs=10, 32, 16)
    # -> net_depth=2, n_layer_1=32, n_layer_2=16, n_outputs=1.
    n_inputs = 10
    hidden = (32, 16)
    n_outputs = 1
    batch = 512   # 1 grid step on v5e/v6e, 2 (one per TensorCore) on v7x

    key = jax.random.PRNGKey(0)
    keys = jax.random.split(key, len(hidden) + 2)

    params = []
    fan_in = n_inputs
    for i, h in enumerate(hidden):
        params.append(init_linear_params(keys[i], fan_in, h))
        fan_in = h
    params.append(init_linear_params(keys[len(hidden)], fan_in, n_outputs))

    x = jax.random.normal(keys[-1], (batch, n_inputs), dtype=jnp.float32)

    out = linear_model_forward(x, params)
    out = jax.block_until_ready(out)

    ref = reference_forward(x, params)
    assert out.shape == (batch, n_outputs)
    assert jnp.allclose(out, ref, atol=1e-4, rtol=1e-4), "kernel mismatch vs reference"

    print("KERNEL_OK")
</pallas_src>

<mosaic_0001>
module attributes {stable_mosaic.version = 11 : i64} {
  func.func @kernel(%arg0: i32, %arg1: memref<512x10xf32, #tpu.memory_space<vmem>>, %arg2: memref<10x128xf32, #tpu.memory_space<vmem>>, %arg3: memref<1x128xf32, #tpu.memory_space<vmem>>, %arg4: memref<128x128xf32, #tpu.memory_space<vmem>>, %arg5: memref<1x128xf32, #tpu.memory_space<vmem>>, %arg6: memref<128x128xf32, #tpu.memory_space<vmem>>, %arg7: memref<1x128xf32, #tpu.memory_space<vmem>>, %arg8: memref<512x128xf32, #tpu.memory_space<vmem>>) attributes {dimension_semantics = [#tpu.dimension_semantics<parallel>], iteration_bounds = array<i64: 1>, scalar_prefetch = 0 : i64, scratch_operands = 0 : i64, tpu.core_type = #tpu.core_type<tc>, window_params = [{transform_indices = @transform_0, window_bounds = array<i64: 512, 10>}, {pipeline_mode = #tpu.pipeline_mode<synchronous>, transform_indices = @transform_1, window_bounds = array<i64: 10, 128>}, {pipeline_mode = #tpu.pipeline_mode<synchronous>, transform_indices = @transform_2, window_bounds = array<i64: 1, 128>}, {pipeline_mode = #tpu.pipeline_mode<synchronous>, transform_indices = @transform_3, window_bounds = array<i64: 128, 128>}, {pipeline_mode = #tpu.pipeline_mode<synchronous>, transform_indices = @transform_4, window_bounds = array<i64: 1, 128>}, {pipeline_mode = #tpu.pipeline_mode<synchronous>, transform_indices = @transform_5, window_bounds = array<i64: 128, 128>}, {pipeline_mode = #tpu.pipeline_mode<synchronous>, transform_indices = @transform_6, window_bounds = array<i64: 1, 128>}, {transform_indices = @transform_7, window_bounds = array<i64: 512, 128>}]} {
    %c0 = arith.constant 0 : index
    %c0_0 = arith.constant 0 : index
    %0 = vector.load %arg1[%c0, %c0_0] : memref<512x10xf32, #tpu.memory_space<vmem>>, vector<512x10xf32>
    %c0_1 = arith.constant 0 : index
    %c0_2 = arith.constant 0 : index
    %1 = vector.load %arg2[%c0_1, %c0_2] : memref<10x128xf32, #tpu.memory_space<vmem>>, vector<10x128xf32>
    %c0_3 = arith.constant 0 : index
    %c0_4 = arith.constant 0 : index
    %2 = vector.load %arg3[%c0_3, %c0_4] : memref<1x128xf32, #tpu.memory_space<vmem>>, vector<1x128xf32>
    %cst = arith.constant dense<0.000000e+00> : vector<512x128xf32>
    %3 = tpu.matmul %0, %1, %cst {dimension_numbers = #tpu.dot_dimension_numbers<[1], [0], [0], [1], [0, 0, 1, 1], [], []>} : vector<512x10xf32>, vector<10x128xf32>, vector<512x128xf32> -> vector<512x128xf32>
    %4 = vector.broadcast %2 : vector<1x128xf32> to vector<512x128xf32>
    %5 = arith.addf %3, %4 : vector<512x128xf32>
    %cst_5 = arith.constant 0.000000e+00 : f32
    %6 = vector.broadcast %cst_5 : f32 to vector<512x128xf32>
    %7 = arith.maximumf %5, %6 : vector<512x128xf32>
    %c0_6 = arith.constant 0 : index
    %c0_7 = arith.constant 0 : index
    %8 = vector.load %arg4[%c0_6, %c0_7] : memref<128x128xf32, #tpu.memory_space<vmem>>, vector<128x128xf32>
    %c0_8 = arith.constant 0 : index
    %c0_9 = arith.constant 0 : index
    %9 = vector.load %arg5[%c0_8, %c0_9] : memref<1x128xf32, #tpu.memory_space<vmem>>, vector<1x128xf32>
    %cst_10 = arith.constant dense<0.000000e+00> : vector<512x128xf32>
    %10 = tpu.matmul %7, %8, %cst_10 {dimension_numbers = #tpu.dot_dimension_numbers<[1], [0], [0], [1], [0, 0, 1, 1], [], []>} : vector<512x128xf32>, vector<128x128xf32>, vector<512x128xf32> -> vector<512x128xf32>
    %11 = vector.broadcast %9 : vector<1x128xf32> to vector<512x128xf32>
    %12 = arith.addf %10, %11 : vector<512x128xf32>
    %cst_11 = arith.constant 0.000000e+00 : f32
    %13 = vector.broadcast %cst_11 : f32 to vector<512x128xf32>
    %14 = arith.maximumf %12, %13 : vector<512x128xf32>
    %c0_12 = arith.constant 0 : index
    %c0_13 = arith.constant 0 : index
    %15 = vector.load %arg6[%c0_12, %c0_13] : memref<128x128xf32, #tpu.memory_space<vmem>>, vector<128x128xf32>
    %c0_14 = arith.constant 0 : index
    %c0_15 = arith.constant 0 : index
    %16 = vector.load %arg7[%c0_14, %c0_15] : memref<1x128xf32, #tpu.memory_space<vmem>>, vector<1x128xf32>
    %cst_16 = arith.constant dense<0.000000e+00> : vector<512x128xf32>
    %17 = tpu.matmul %14, %15, %cst_16 {dimension_numbers = #tpu.dot_dimension_numbers<[1], [0], [0], [1], [0, 0, 1, 1], [], []>} : vector<512x128xf32>, vector<128x128xf32>, vector<512x128xf32> -> vector<512x128xf32>
    %18 = vector.broadcast %16 : vector<1x128xf32> to vector<512x128xf32>
    %19 = arith.addf %17, %18 : vector<512x128xf32>
    %c0_17 = arith.constant 0 : index
    %c0_18 = arith.constant 0 : index
    %20 = vector.load %arg8[%c0_17, %c0_18] : memref<512x128xf32, #tpu.memory_space<vmem>>, vector<512x128xf32>
    tpu.vector_store %arg8[%c0_17, %c0_18], %19 {strides = array<i32>} : memref<512x128xf32, #tpu.memory_space<vmem>>, vector<512x128xf32>,
    return
  }
  func.func @transform_0(%arg0: i32) -> (i32, i32) {
    %c0_i32 = arith.constant 0 : i32
    %c0_i32_0 = arith.constant 0 : i32
    return %arg0, %c0_i32 : i32, i32
  }
  func.func @transform_1(%arg0: i32) -> (i32, i32) {
    %c0_i32 = arith.constant 0 : i32
    %c0_i32_0 = arith.constant 0 : i32
    %c0_i32_1 = arith.constant 0 : i32
    return %c0_i32, %c0_i32_0 : i32, i32
  }
  func.func @transform_2(%arg0: i32) -> (i32, i32) {
    %c0_i32 = arith.constant 0 : i32
    %c0_i32_0 = arith.constant 0 : i32
    %c0_i32_1 = arith.constant 0 : i32
    return %c0_i32, %c0_i32_0 : i32, i32
  }
  func.func @transform_3(%arg0: i32) -> (i32, i32) {
    %c0_i32 = arith.constant 0 : i32
    %c0_i32_0 = arith.constant 0 : i32
    %c0_i32_1 = arith.constant 0 : i32
    return %c0_i32, %c0_i32_0 : i32, i32
  }
  func.func @transform_4(%arg0: i32) -> (i32, i32) {
    %c0_i32 = arith.constant 0 : i32
    %c0_i32_0 = arith.constant 0 : i32
    %c0_i32_1 = arith.constant 0 : i32
    return %c0_i32, %c0_i32_0 : i32, i32
  }
  func.func @transform_5(%arg0: i32) -> (i32, i32) {
    %c0_i32 = arith.constant 0 : i32
    %c0_i32_0 = arith.constant 0 : i32
    %c0_i32_1 = arith.constant 0 : i32
    return %c0_i32, %c0_i32_0 : i32, i32
  }
  func.func @transform_6(%arg0: i32) -> (i32, i32) {
    %c0_i32 = arith.constant 0 : i32
    %c0_i32_0 = arith.constant 0 : i32
    %c0_i32_1 = arith.constant 0 : i32
    return %c0_i32, %c0_i32_0 : i32, i32
  }
  func.func @transform_7(%arg0: i32) -> (i32, i32) {
    %c0_i32 = arith.constant 0 : i32
    %c0_i32_0 = arith.constant 0 : i32
    return %arg0, %c0_i32 : i32, i32
  }
}

module attributes {stable_mosaic.version = 11 : i64} {
  func.func @kernel(%arg0: i32, %arg1: memref<512x10xf32, #tpu.memory_space<vmem>>, %arg2: memref<10x128xf32, #tpu.memory_space<vmem>>, %arg3: memref<1x128xf32, #tpu.memory_space<vmem>>, %arg4: memref<128x128xf32, #tpu.memory_space<vmem>>, %arg5: memref<1x128xf32, #tpu.memory_space<vmem>>, %arg6: memref<128x128xf32, #tpu.memory_space<vmem>>, %arg7: memref<1x128xf32, #tpu.memory_space<vmem>>, %arg8: memref<512x128xf32, #tpu.memory_space<vmem>>) attributes {dimension_semantics = [#tpu.dimension_semantics<parallel>], iteration_bounds = array<i64: 1>, scalar_prefetch = 0 : i64, scratch_operands = 0 : i64, tpu.core_type = #tpu.core_type<tc>, window_params = [{transform_indices = @transform_0, window_bounds = array<i64: 512, 10>}, {pipeline_mode = #tpu.pipeline_mode<synchronous>, transform_indices = @transform_1, window_bounds = array<i64: 10, 128>}, {pipeline_mode = #tpu.pipeline_mode<synchronous>, transform_indices = @transform_2, window_bounds = array<i64: 1, 128>}, {pipeline_mode = #tpu.pipeline_mode<synchronous>, transform_indices = @transform_3, window_bounds = array<i64: 128, 128>}, {pipeline_mode = #tpu.pipeline_mode<synchronous>, transform_indices = @transform_4, window_bounds = array<i64: 1, 128>}, {pipeline_mode = #tpu.pipeline_mode<synchronous>, transform_indices = @transform_5, window_bounds = array<i64: 128, 128>}, {pipeline_mode = #tpu.pipeline_mode<synchronous>, transform_indices = @transform_6, window_bounds = array<i64: 1, 128>}, {transform_indices = @transform_7, window_bounds = array<i64: 512, 128>}]} {
    %c0 = arith.constant 0 : index
    %c0_0 = arith.constant 0 : index
    %0 = vector.load %arg1[%c0, %c0_0] : memref<512x10xf32, #tpu.memory_space<vmem>>, vector<512x10xf32>
    %c0_1 = arith.constant 0 : index
    %c0_2 = arith.constant 0 : index
    %1 = vector.load %arg2[%c0_1, %c0_2] : memref<10x128xf32, #tpu.memory_space<vmem>>, vector<10x128xf32>
    %c0_3 = arith.constant 0 : index
    %c0_4 = arith.constant 0 : index
    %2 = vector.load %arg3[%c0_3, %c0_4] : memref<1x128xf32, #tpu.memory_space<vmem>>, vector<1x128xf32>
    %cst = arith.constant dense<0.000000e+00> : vector<512x128xf32>
    %3 = tpu.matmul %0, %1, %cst {dimension_numbers = #tpu.dot_dimension_numbers<[1], [0], [0], [1], [0, 0, 1, 1], [], []>} : vector<512x10xf32>, vector<10x128xf32>, vector<512x128xf32> -> vector<512x128xf32>
    %4 = vector.broadcast %2 : vector<1x128xf32> to vector<512x128xf32>
    %5 = arith.addf %3, %4 : vector<512x128xf32>
    %cst_5 = arith.constant 0.000000e+00 : f32
    %6 = vector.broadcast %cst_5 : f32 to vector<512x128xf32>
    %7 = arith.maximumf %5, %6 : vector<512x128xf32>
    %c0_6 = arith.constant 0 : index
    %c0_7 = arith.constant 0 : index
    %8 = vector.load %arg4[%c0_6, %c0_7] : memref<128x128xf32, #tpu.memory_space<vmem>>, vector<128x128xf32>
    %c0_8 = arith.constant 0 : index
    %c0_9 = arith.constant 0 : index
    %9 = vector.load %arg5[%c0_8, %c0_9] : memref<1x128xf32, #tpu.memory_space<vmem>>, vector<1x128xf32>
    %cst_10 = arith.constant dense<0.000000e+00> : vector<512x128xf32>
    %10 = tpu.matmul %7, %8, %cst_10 {dimension_numbers = #tpu.dot_dimension_numbers<[1], [0], [0], [1], [0, 0, 1, 1], [], []>} : vector<512x128xf32>, vector<128x128xf32>, vector<512x128xf32> -> vector<512x128xf32>
    %11 = vector.broadcast %9 : vector<1x128xf32> to vector<512x128xf32>
    %12 = arith.addf %10, %11 : vector<512x128xf32>
    %cst_11 = arith.constant 0.000000e+00 : f32
    %13 = vector.broadcast %cst_11 : f32 to vector<512x128xf32>
    %14 = arith.maximumf %12, %13 : vector<512x128xf32>
    %c0_12 = arith.constant 0 : index
    %c0_13 = arith.constant 0 : index
    %15 = vector.load %arg6[%c0_12, %c0_13] : memref<128x128xf32, #tpu.memory_space<vmem>>, vector<128x128xf32>
    %c0_14 = arith.constant 0 : index
    %c0_15 = arith.constant 0 : index
    %16 = vector.load %arg7[%c0_14, %c0_15] : memref<1x128xf32, #tpu.memory_space<vmem>>, vector<1x128xf32>
    %cst_16 = arith.constant dense<0.000000e+00> : vector<512x128xf32>
    %17 = tpu.matmul %14, %15, %cst_16 {dimension_numbers = #tpu.dot_dimension_numbers<[1], [0], [0], [1], [0, 0, 1, 1], [], []>} : vector<512x128xf32>, vector<128x128xf32>, vector<512x128xf32> -> vector<512x128xf32>
    %18 = vector.broadcast %16 : vector<1x128xf32> to vector<512x128xf32>
    %19 = arith.addf %17, %18 : vector<512x128xf32>
    %c0_17 = arith.constant 0 : index
    %c0_18 = arith.constant 0 : index
    %20 = vector.load %arg8[%c0_17, %c0_18] : memref<512x128xf32, #tpu.memory_space<vmem>>, vector<512x128xf32>
    tpu.vector_store %arg8[%c0_17, %c0_18], %19 {strides = array<i32>} : memref<512x128xf32, #tpu.memory_space<vmem>>, vector<512x128xf32>,
    return
  }
  func.func @transform_0(%arg0: i32) -> (i32, i32) {
    %c0_i32 = arith.constant 0 : i32
    %c0_i32_0 = arith.constant 0 : i32
    return %arg0, %c0_i32 : i32, i32
  }
  func.func @transform_1(%arg0: i32) -> (i32, i32) {
    %c0_i32 = arith.constant 0 : i32
    %c0_i32_0 = arith.constant 0 : i32
    %c0_i32_1 = arith.constant 0 : i32
    return %c0_i32, %c0_i32_0 : i32, i32
  }
  func.func @transform_2(%arg0: i32) -> (i32, i32) {
    %c0_i32 = arith.constant 0 : i32
    %c0_i32_0 = arith.constant 0 : i32
    %c0_i32_1 = arith.constant 0 : i32
    return %c0_i32, %c0_i32_0 : i32, i32
  }
  func.func @transform_3(%arg0: i32) -> (i32, i32) {
    %c0_i32 = arith.constant 0 : i32
    %c0_i32_0 = arith.constant 0 : i32
    %c0_i32_1 = arith.constant 0 : i32
    return %c0_i32, %c0_i32_0 : i32, i32
  }
  func.func @transform_4(%arg0: i32) -> (i32, i32) {
    %c0_i32 = arith.constant 0 : i32
    %c0_i32_0 = arith.constant 0 : i32
    %c0_i32_1 = arith.constant 0 : i32
    return %c0_i32, %c0_i32_0 : i32, i32
  }
  func.func @transform_5(%arg0: i32) -> (i32, i32) {
    %c0_i32 = arith.constant 0 : i32
    %c0_i32_0 = arith.constant 0 : i32
    %c0_i32_1 = arith.constant 0 : i32
    return %c0_i32, %c0_i32_0 : i32, i32
  }
  func.func @transform_6(%arg0: i32) -> (i32, i32) {
    %c0_i32 = arith.constant 0 : i32
    %c0_i32_0 = arith.constant 0 : i32
    %c0_i32_1 = arith.constant 0 : i32
    return %c0_i32, %c0_i32_0 : i32, i32
  }
  func.func @transform_7(%arg0: i32) -> (i32, i32) {
    %c0_i32 = arith.constant 0 : i32
    %c0_i32_0 = arith.constant 0 : i32
    return %arg0, %c0_i32 : i32, i32
  }
}

</mosaic_0001>

<llo_original>
// kernel: tpu_custom_call.1
$region0: #{tpu_custom_call.1}
  #allocation0 [shape = 'u32[]', space=smem, size = 0x4, offset = 0x4, fixed_abs, tag = 'smem constant byte address 0x4 - core index']
  #allocation1 [shape = 'u32[144,128]{1,0:T(1,128)}', space=vmem, size = 0x12000, scoped, tag = 'internal scratch']
  %s0 = inlined_call_operand.vmem [shape: f32[512,10], index: 0, kind: input, shape index: {}]
  %s1 = inlined_call_operand.vmem [shape: f32[10,128], index: 1, kind: input, shape index: {}]
  %s2 = inlined_call_operand.vmem [shape: f32[1,128], index: 2, kind: input, shape index: {}]
  %s3 = inlined_call_operand.vmem [shape: f32[128,128], index: 3, kind: input, shape index: {}]
  %s4 = inlined_call_operand.vmem [shape: f32[1,128], index: 4, kind: input, shape index: {}]
  %s5 = inlined_call_operand.vmem [shape: f32[128,128], index: 5, kind: input, shape index: {}]
  %s6 = inlined_call_operand.vmem [shape: f32[1,128], index: 6, kind: input, shape index: {}]
  %s7 = inlined_call_operand.hbm [shape: f32[512,128], index: 7, kind: output, shape index: {}]
  %s8 = sld [smem:[#allocation0]]
  $region38: #{tpu_custom_call.1} parent=0
    _
  %s10 = ssub.s32 1, %s8
  %s11 = scalar_select 0, %s10, %s8
  $region1: #{tpu_custom_call.1} parent=0
    #allocation2 [shape = 'u8[262144]{0}', space=vmem, size = 0x40000, scoped, tag = 'output window, operand 0, single buffered']
    #allocation3 [shape = 's32[1]{0}', space=sflag, size = 0x4, scoped, tag = 'scoped memory for tpu_custom_call.1']
    %12 = vsyncpa [#allocation3], 0
    // Predicated region
    $region2: #{tpu_custom_call.1} parent=1 // pred_check
      _
    $region3: #{tpu_custom_call.1} parent=1 // pred_check_branch
      %14 = sbr.rel (0) target = $region5
    $region4: #{tpu_custom_call.1} parent=1 // pred_region
      _
    $region5: #{tpu_custom_call.1} parent=1 // pred_fallthru
      _
    // Predicated region
    $region6: #{tpu_custom_call.1} parent=1 // pred_check
      _
    $region7: #{tpu_custom_call.1} parent=1 // pred_check_branch
      %16 = sbr.rel (0) target = $region9
    $region8: #{tpu_custom_call.1} parent=1 // pred_region
      _
    $region9: #{tpu_custom_call.1} parent=1 // pred_fallthru
      _
    // Predicated region
    $region10: #{tpu_custom_call.1} parent=1 // pred_check
      _
    $region11: #{tpu_custom_call.1} parent=1 // pred_check_branch
      %18 = sbr.rel (0) target = $region13
    $region12: #{tpu_custom_call.1} parent=1 // pred_region
      _
    $region13: #{tpu_custom_call.1} parent=1 // pred_fallthru
      _
    // Predicated region
    $region14: #{tpu_custom_call.1} parent=1 // pred_check
      _
    $region15: #{tpu_custom_call.1} parent=1 // pred_check_branch
      %20 = sbr.rel (0) target = $region17
    $region16: #{tpu_custom_call.1} parent=1 // pred_region
      _
    $region17: #{tpu_custom_call.1} parent=1 // pred_fallthru
      _
    // Predicated region
    $region18: #{tpu_custom_call.1} parent=1 // pred_check
      _
    $region19: #{tpu_custom_call.1} parent=1 // pred_check_branch
      %22 = sbr.rel (0) target = $region21
    $region20: #{tpu_custom_call.1} parent=1 // pred_region
      _
    $region21: #{tpu_custom_call.1} parent=1 // pred_fallthru
      _
    // Predicated region
    $region22: #{tpu_custom_call.1} parent=1 // pred_check
      _
    $region23: #{tpu_custom_call.1} parent=1 // pred_check_branch
      %24 = sbr.rel (0) target = $region25
    $region24: #{tpu_custom_call.1} parent=1 // pred_region
      _
    $region25: #{tpu_custom_call.1} parent=1 // pred_fallthru
      _
    // Predicated region
    $region26: #{tpu_custom_call.1} parent=1 // pred_check
      _
    $region27: #{tpu_custom_call.1} parent=1 // pred_check_branch
      %26 = sbr.rel (0) target = $region29
    $region28: #{tpu_custom_call.1} parent=1 // pred_region
      _
    $region29: #{tpu_custom_call.1} parent=1 // pred_fallthru
      _
    %v27 = vld [vmem:[%s0] sm:$0xff]
    %v28 = vld [vmem:[%s0 + $0x8] sm:$0xff]
    %v29 = vld [vmem:[%s0 + $0x10] sm:$0xff]
    %v30 = vld [vmem:[%s0 + $0x18] sm:$0xff]
    %v31 = vld [vmem:[%s0 + $0x20] sm:$0xff]
    %v32 = vld [vmem:[%s0 + $0x28] sm:$0xff]
    %v33 = vld [vmem:[%s0 + $0x30] sm:$0xff]
    %v34 = vld [vmem:[%s0 + $0x38] sm:$0xff]
    %v35 = vld [vmem:[%s0 + $0x40] sm:$0xff]
    %v36 = vld [vmem:[%s0 + $0x48] sm:$0xff]
    %v37 = vld [vmem:[%s0 + $0x50] sm:$0xff]
    %v38 = vld [vmem:[%s0 + $0x58] sm:$0xff]
    %v39 = vld [vmem:[%s0 + $0x60] sm:$0xff]
    %v40 = vld [vmem:[%s0 + $0x68] sm:$0xff]
    %v41 = vld [vmem:[%s0 + $0x70] sm:$0xff]
    %v42 = vld [vmem:[%s0 + $0x78] sm:$0xff]
    %v43 = vld [vmem:[%s0 + $0x80] sm:$0xff]
    %v44 = vld [vmem:[%s0 + $0x88] sm:$0xff]
    %v45 = vld [vmem:[%s0 + $0x90] sm:$0xff]
    %v46 = vld [vmem:[%s0 + $0x98] sm:$0xff]
    %v47 = vld [vmem:[%s0 + $0xa0] sm:$0xff]
    %v48 = vld [vmem:[%s0 + $0xa8] sm:$0xff]
    %v49 = vld [vmem:[%s0 + $0xb0] sm:$0xff]
    %v50 = vld [vmem:[%s0 + $0xb8] sm:$0xff]
    %v51 = vld [vmem:[%s0 + $0xc0] sm:$0xff]
    %v52 = vld [vmem:[%s0 + $0xc8] sm:$0xff]
    %v53 = vld [vmem:[%s0 + $0xd0] sm:$0xff]
    %v54 = vld [vmem:[%s0 + $0xd8] sm:$0xff]
    %v55 = vld [vmem:[%s0 + $0xe0] sm:$0xff]
    %v56 = vld [vmem:[%s0 + $0xe8] sm:$0xff]
    %v57 = vld [vmem:[%s0 + $0xf0] sm:$0xff]
    %v58 = vld [vmem:[%s0 + $0xf8] sm:$0xff]
    %v59 = vld [vmem:[%s0 + $0x100] sm:$0xff]
    %v60 = vld [vmem:[%s0 + $0x108] sm:$0xff]
    %v61 = vld [vmem:[%s0 + $0x110] sm:$0xff]
    %v62 = vld [vmem:[%s0 + $0x118] sm:$0xff]
    %v63 = vld [vmem:[%s0 + $0x120] sm:$0xff]
    %v64 = vld [vmem:[%s0 + $0x128] sm:$0xff]
    %v65 = vld [vmem:[%s0 + $0x130] sm:$0xff]
    %v66 = vld [vmem:[%s0 + $0x138] sm:$0xff]
    %v67 = vld [vmem:[%s0 + $0x140] sm:$0xff]
    %v68 = vld [vmem:[%s0 + $0x148] sm:$0xff]
    %v69 = vld [vmem:[%s0 + $0x150] sm:$0xff]
    %v70 = vld [vmem:[%s0 + $0x158] sm:$0xff]
    %v71 = vld [vmem:[%s0 + $0x160] sm:$0xff]
    %v72 = vld [vmem:[%s0 + $0x168] sm:$0xff]
    %v73 = vld [vmem:[%s0 + $0x170] sm:$0xff]
    %v74 = vld [vmem:[%s0 + $0x178] sm:$0xff]
    %v75 = vld [vmem:[%s0 + $0x180] sm:$0xff]
    %v76 = vld [vmem:[%s0 + $0x188] sm:$0xff]
    %v77 = vld [vmem:[%s0 + $0x190] sm:$0xff]
    %v78 = vld [vmem:[%s0 + $0x198] sm:$0xff]
    %v79 = vld [vmem:[%s0 + $0x1a0] sm:$0xff]
    %v80 = vld [vmem:[%s0 + $0x1a8] sm:$0xff]
    %v81 = vld [vmem:[%s0 + $0x1b0] sm:$0xff]
    %v82 = vld [vmem:[%s0 + $0x1b8] sm:$0xff]
    %v83 = vld [vmem:[%s0 + $0x1c0] sm:$0xff]
    %v84 = vld [vmem:[%s0 + $0x1c8] sm:$0xff]
    %v85 = vld [vmem:[%s0 + $0x1d0] sm:$0xff]
    %v86 = vld [vmem:[%s0 + $0x1d8] sm:$0xff]
    %v87 = vld [vmem:[%s0 + $0x1e0] sm:$0xff]
    %v88 = vld [vmem:[%s0 + $0x1e8] sm:$0xff]
    %v89 = vld [vmem:[%s0 + $0x1f0] sm:$0xff]
    %v90 = vld [vmem:[%s0 + $0x1f8] sm:$0xff]
    %v91 = vld [vmem:[%s1] sm:$0xff]
    %v92 = vld [vmem:[%s1 + $0x8] sm:$0x3]
    %v93 = vld [vmem:[%s2] sm:$0x1]
    %v95 = vlaneseq
    %v96 = vshrl.u32 %v95, 7
    %v97 = vsub.s32 0, %v96
    %v98 = vrot.slane %v93, %v97
    %vm100 = vcmask 80896
    %v102 = vsel %vm100, %v27, 0
    %v105 = vsel %vm100, %v28, 0
    %v108 = vsel %vm100, %v29, 0
    %v111 = vsel %vm100, %v30, 0
    %v114 = vsel %vm100, %v31, 0
    %v117 = vsel %vm100, %v32, 0
    %v120 = vsel %vm100, %v33, 0
    %v123 = vsel %vm100, %v34, 0
    %v126 = vsel %vm100, %v35, 0
    %v129 = vsel %vm100, %v36, 0
    %v132 = vsel %vm100, %v37, 0
    %v135 = vsel %vm100, %v38, 0
    %v138 = vsel %vm100, %v39, 0
    %v141 = vsel %vm100, %v40, 0
    %v144 = vsel %vm100, %v41, 0
    %v147 = vsel %vm100, %v42, 0
    %v150 = vsel %vm100, %v43, 0
    %v153 = vsel %vm100, %v44, 0
    %v156 = vsel %vm100, %v45, 0
    %v159 = vsel %vm100, %v46, 0
    %v162 = vsel %vm100, %v47, 0
    %v165 = vsel %vm100, %v48, 0
    %v168 = vsel %vm100, %v49, 0
    %v171 = vsel %vm100, %v50, 0
    %v174 = vsel %vm100, %v51, 0
    %v177 = vsel %vm100, %v52, 0
    %v180 = vsel %vm100, %v53, 0
    %v183 = vsel %vm100, %v54, 0
    %v186 = vsel %vm100, %v55, 0
    %v189 = vsel %vm100, %v56, 0
    %v192 = vsel %vm100, %v57, 0
    %v195 = vsel %vm100, %v58, 0
    %v198 = vsel %vm100, %v59, 0
    %v201 = vsel %vm100, %v60, 0
    %v204 = vsel %vm100, %v61, 0
    %v207 = vsel %vm100, %v62, 0
    %v210 = vsel %vm100, %v63, 0
    %v213 = vsel %vm100, %v64, 0
    %v216 = vsel %vm100, %v65, 0
    %v219 = vsel %vm100, %v66, 0
    %v222 = vsel %vm100, %v67, 0
    %v225 = vsel %vm100, %v68, 0
    %v228 = vsel %vm100, %v69, 0
    %v231 = vsel %vm100, %v70, 0
    %v234 = vsel %vm100, %v71, 0
    %v237 = vsel %vm100, %v72, 0
    %v240 = vsel %vm100, %v73, 0
    %v243 = vsel %vm100, %v74, 0
    %v246 = vsel %vm100, %v75, 0
    %v249 = vsel %vm100, %v76, 0
    %v252 = vsel %vm100, %v77, 0
    %v255 = vsel %vm100, %v78, 0
    %v258 = vsel %vm100, %v79, 0
    %v261 = vsel %vm100, %v80, 0
    %v264 = vsel %vm100, %v81, 0
    %v267 = vsel %vm100, %v82, 0
    %v270 = vsel %vm100, %v83, 0
    %v273 = vsel %vm100, %v84, 0
    %v276 = vsel %vm100, %v85, 0
    %v279 = vsel %vm100, %v86, 0
    %v282 = vsel %vm100, %v87, 0
    %v285 = vsel %vm100, %v88, 0
    %v288 = vsel %vm100, %v89, 0
    %v291 = vsel %vm100, %v90, 0
    %vm293 = vcmask 1041408
    %v295 = vsel %vm293, %v92, 0
    %297 = vmatprep.subr.mxu0 0.0
    %298 = vmatpush1.msra.mxu0 %v91
    %299 = vmatprep.subr.mxu0 0.0
    %300 = vmatpush1.msra.mxu0 %v295
    %301 = vmatprep.subr.mxu0 0.0
    %302 = vmatpush1.msra.mxu0 0.0
    %303 = vmatprep.subr.mxu0 0.0
    %304 = vmatpush1.msra.mxu0 0.0
    %305 = vmatprep.subr.mxu0 0.0
    %306 = vmatpush1.msra.mxu0 0.0
    %307 = vmatprep.subr.mxu0 0.0
    %308 = vmatpush1.msra.mxu0 0.0
    %309 = vmatprep.subr.mxu0 0.0
    %310 = vmatpush1.msra.mxu0 0.0
    %311 = vmatprep.subr.mxu0 0.0
    %312 = vmatpush1.msra.mxu0 0.0
    %313 = vmatprep.subr.mxu0 0.0
    %314 = vmatpush1.msra.mxu0 0.0
    %315 = vmatprep.subr.mxu0 0.0
    %316 = vmatpush1.msra.mxu0 0.0
    %317 = vmatprep.subr.mxu0 0.0
    %318 = vmatpush1.msra.mxu0 0.0
    %319 = vmatprep.subr.mxu0 0.0
    %320 = vmatpush1.msra.mxu0 0.0
    %321 = vmatprep.subr.mxu0 0.0
    %322 = vmatpush1.msra.mxu0 0.0
    %323 = vmatprep.subr.mxu0 0.0
    %324 = vmatpush1.msra.mxu0 0.0
    %325 = vmatprep.subr.mxu0 0.0
    %326 = vmatpush1.msra.mxu0 0.0
    %327 = vmatprep.subr.mxu0 0.0
    %328 = vmatpush1.msra.mxu0 0.0
    %329 = vmatprep.subr.mxu0 0.0
    %330 = vmatpush1.msra.mxu0 0.0
    %331 = vmatprep.subr.mxu0 0.0
    %332 = vmatpush1.msra.mxu0 0.0
    %333 = vmatprep.subr.mxu0 0.0
    %334 = vmatpush1.msra.mxu0 0.0
    %335 = vmatprep.subr.mxu0 0.0
    %336 = vmatpush1.msra.mxu0 0.0
    %337 = vmatprep.subr.mxu0 0.0
    %338 = vmatpush1.msra.mxu0 0.0
    %339 = vmatprep.subr.mxu0 0.0
    %340 = vmatpush1.msra.mxu0 0.0
    %341 = vmatprep.subr.mxu0 0.0
    %342 = vmatpush1.msra.mxu0 0.0
    %343 = vmatprep.subr.mxu0 0.0
    %344 = vmatpush1.msra.mxu0 0.0
    %345 = vmatprep.subr.mxu0 0.0
    %346 = vmatpush1.msra.mxu0 0.0
    %347 = vmatprep.subr.mxu0 0.0
    %348 = vmatpush1.msra.mxu0 0.0
    %349 = vmatprep.subr.mxu0 0.0
    %350 = vmatpush1.msra.mxu0 0.0
    %351 = vmatprep.subr.mxu0 0.0
    %352 = vmatpush1.msra.mxu0 0.0
    %353 = vmatprep.subr.mxu0 0.0
    %354 = vmatpush1.msra.mxu0 0.0
    %355 = vmatprep.subr.mxu0 0.0
    %356 = vmatpush1.msra.mxu0 0.0
    %357 = vmatprep.subr.mxu0 0.0
    %358 = vmatpush1.msra.mxu0 0.0
    %359 = vmatprep.subr.mxu0 0.0
    %360 = vmatpush1.msra.mxu0 0.0
    %361 = vmatprep.mubr.f32.mxu0 0.0
    %362 = vmatmul.mubr.f32.gmra.mrb[0].mxu0 %v102
    %v363 = vpop.f32.mrb[0].mxu0
    %v364 = vadd.f32 %v98, %v363
    %v365 = vpop.f32.mrb[0].mxu0
    %366 = vmatprep.mubr.f32.mxu0 0.0
    %367 = vmatmul.mubr.f32.gmra.mrb[0].mxu0 %v105
    %v368 = vpop.f32.mrb[0].mxu0
    %v369 = vadd.f32 %v98, %v368
    %v370 = vpop.f32.mrb[0].mxu0
    %371 = vmatprep.mubr.f32.mxu0 0.0
    %372 = vmatmul.mubr.f32.gmra.mrb[0].mxu0 %v108
    %v373 = vpop.f32.mrb[0].mxu0
    %v374 = vadd.f32 %v98, %v373
    %v375 = vpop.f32.mrb[0].mxu0
    %376 = vmatprep.mubr.f32.mxu0 0.0
    %377 = vmatmul.mubr.f32.gmra.mrb[0].mxu0 %v111
    %v378 = vpop.f32.mrb[0].mxu0
    %v379 = vadd.f32 %v98, %v378
    %v380 = vpop.f32.mrb[0].mxu0
    %381 = vmatprep.mubr.f32.mxu0 0.0
    %382 = vmatmul.mubr.f32.gmra.mrb[0].mxu0 %v114
    %v383 = vpop.f32.mrb[0].mxu0
    %v384 = vadd.f32 %v98, %v383
    %v385 = vpop.f32.mrb[0].mxu0
    %386 = vmatprep.mubr.f32.mxu0 0.0
    %387 = vmatmul.mubr.f32.gmra.mrb[0].mxu0 %v117
    %v388 = vpop.f32.mrb[0].mxu0
    %v389 = vadd.f32 %v98, %v388
    %v390 = vpop.f32.mrb[0].mxu0
    %391 = vmatprep.mubr.f32.mxu0 0.0
    %392 = vmatmul.mubr.f32.gmra.mrb[0].mxu0 %v120
    %v393 = vpop.f32.mrb[0].mxu0
    %v394 = vadd.f32 %v98, %v393
    %v395 = vpop.f32.mrb[0].mxu0
    %396 = vmatprep.mubr.f32.mxu0 0.0
    %397 = vmatmul.mubr.f32.gmra.mrb[0].mxu0 %v123
    %v398 = vpop.f32.mrb[0].mxu0
    %v399 = vadd.f32 %v98, %v398
    %v400 = vpop.f32.mrb[0].mxu0
    %401 = vmatprep.mubr.f32.mxu0 0.0
    %402 = vmatmul.mubr.f32.gmra.mrb[0].mxu0 %v126
    %v403 = vpop.f32.mrb[0].mxu0
    %v404 = vadd.f32 %v98, %v403
    %v405 = vpop.f32.mrb[0].mxu0
    %406 = vmatprep.mubr.f32.mxu0 0.0
    %407 = vmatmul.mubr.f32.gmra.mrb[0].mxu0 %v129
    %v408 = vpop.f32.mrb[0].mxu0
    %v409 = vadd.f32 %v98, %v408
    %v410 = vpop.f32.mrb[0].mxu0
    %411 = vmatprep.mubr.f32.mxu0 0.0
    %412 = vmatmul.mubr.f32.gmra.mrb[0].mxu0 %v132
    %v413 = vpop.f32.mrb[0].mxu0
    %v414 = vadd.f32 %v98, %v413
    %v415 = vpop.f32.mrb[0].mxu0
    %416 = vmatprep.mubr.f32.mxu0 0.0
    %417 = vmatmul.mubr.f32.gmra.mrb[0].mxu0 %v135
    %v418 = vpop.f32.mrb[0].mxu0
    %v419 = vadd.f32 %v98, %v418
    %v420 = vpop.f32.mrb[0].mxu0
    %421 = vmatprep.mubr.f32.mxu0 0.0
    %422 = vmatmul.mubr.f32.gmra.mrb[0].mxu0 %v138
    %v423 = vpop.f32.mrb[0].mxu0
    %v424 = vadd.f32 %v98, %v423
    %v425 = vpop.f32.mrb[0].mxu0
    %426 = vmatprep.mubr.f32.mxu0 0.0
    %427 = vmatmul.mubr.f32.gmra.mrb[0].mxu0 %v141
    %v428 = vpop.f32.mrb[0].mxu0
    %v429 = vadd.f32 %v98, %v428
    %v430 = vpop.f32.mrb[0].mxu0
    %431 = vmatprep.mubr.f32.mxu0 0.0
    %432 = vmatmul.mubr.f32.gmra.mrb[0].mxu0 %v144
    %v433 = vpop.f32.mrb[0].mxu0
    %v434 = vadd.f32 %v98, %v433
    %v435 = vpop.f32.mrb[0].mxu0
    %436 = vmatprep.mubr.f32.mxu0 0.0
    %437 = vmatmul.mubr.f32.gmra.mrb[0].mxu0 %v147
    %v438 = vpop.f32.mrb[0].mxu0
    %v439 = vadd.f32 %v98, %v438
    %v440 = vpop.f32.mrb[0].mxu0
    %441 = vmatprep.mubr.f32.mxu0 0.0
    %442 = vmatmul.mubr.f32.gmra.mrb[0].mxu0 %v150
    %v443 = vpop.f32.mrb[0].mxu0
    %v444 = vadd.f32 %v98, %v443
    %v445 = vpop.f32.mrb[0].mxu0
    %446 = vmatprep.mubr.f32.mxu0 0.0
    %447 = vmatmul.mubr.f32.gmra.mrb[0].mxu0 %v153
    %v448 = vpop.f32.mrb[0].mxu0
    %v449 = vadd.f32 %v98, %v448
    %v450 = vpop.f32.mrb[0].mxu0
    %451 = vmatprep.mubr.f32.mxu0 0.0
    %452 = vmatmul.mubr.f32.gmra.mrb[0].mxu0 %v156
    %v453 = vpop.f32.mrb[0].mxu0
    %v454 = vadd.f32 %v98, %v453
    %v455 = vpop.f32.mrb[0].mxu0
    %456 = vmatprep.mubr.f32.mxu0 0.0
    %457 = vmatmul.mubr.f32.gmra.mrb[0].mxu0 %v159
    %v458 = vpop.f32.mrb[0].mxu0
    %v459 = vadd.f32 %v98, %v458
    %v460 = vpop.f32.mrb[0].mxu0
    %461 = vmatprep.mubr.f32.mxu0 0.0
    %462 = vmatmul.mubr.f32.gmra.mrb[0].mxu0 %v162
    %v463 = vpop.f32.mrb[0].mxu0
    %v464 = vadd.f32 %v98, %v463
    %v465 = vpop.f32.mrb[0].mxu0
    %466 = vmatprep.mubr.f32.mxu0 0.0
    %467 = vmatmul.mubr.f32.gmra.mrb[0].mxu0 %v165
    %v468 = vpop.f32.mrb[0].mxu0
    %v469 = vadd.f32 %v98, %v468
    %v470 = vpop.f32.mrb[0].mxu0
    %471 = vmatprep.mubr.f32.mxu0 0.0
    %472 = vmatmul.mubr.f32.gmra.mrb[0].mxu0 %v168
    %v473 = vpop.f32.mrb[0].mxu0
    %v474 = vadd.f32 %v98, %v473
    %v475 = vpop.f32.mrb[0].mxu0
    %476 = vmatprep.mubr.f32.mxu0 0.0
    %477 = vmatmul.mubr.f32.gmra.mrb[0].mxu0 %v171
    %v478 = vpop.f32.mrb[0].mxu0
    %v479 = vadd.f32 %v98, %v478
    %v480 = vpop.f32.mrb[0].mxu0
    %481 = vmatprep.mubr.f32.mxu0 0.0
    %482 = vmatmul.mubr.f32.gmra.mrb[0].mxu0 %v174
    %v483 = vpop.f32.mrb[0].mxu0
    %v484 = vadd.f32 %v98, %v483
    %v485 = vpop.f32.mrb[0].mxu0
    %486 = vmatprep.mubr.f32.mxu0 0.0
    %487 = vmatmul.mubr.f32.gmra.mrb[0].mxu0 %v177
    %v488 = vpop.f32.mrb[0].mxu0
    %v489 = vadd.f32 %v98, %v488
    %v490 = vpop.f32.mrb[0].mxu0
    %491 = vmatprep.mubr.f32.mxu0 0.0
    %492 = vmatmul.mubr.f32.gmra.mrb[0].mxu0 %v180
    %v493 = vpop.f32.mrb[0].mxu0
    %v494 = vadd.f32 %v98, %v493
    %v495 = vpop.f32.mrb[0].mxu0
    %496 = vmatprep.mubr.f32.mxu0 0.0
    %497 = vmatmul.mubr.f32.gmra.mrb[0].mxu0 %v183
    %v498 = vpop.f32.mrb[0].mxu0
    %v499 = vadd.f32 %v98, %v498
    %v500 = vpop.f32.mrb[0].mxu0
    %501 = vmatprep.mubr.f32.mxu0 0.0
    %502 = vmatmul.mubr.f32.gmra.mrb[0].mxu0 %v186
    %v503 = vpop.f32.mrb[0].mxu0
    %v504 = vadd.f32 %v98, %v503
    %v505 = vpop.f32.mrb[0].mxu0
    %506 = vmatprep.mubr.f32.mxu0 0.0
    %507 = vmatmul.mubr.f32.gmra.mrb[0].mxu0 %v189
    %v508 = vpop.f32.mrb[0].mxu0
    %v509 = vadd.f32 %v98, %v508
    %v510 = vpop.f32.mrb[0].mxu0
    %511 = vmatprep.mubr.f32.mxu0 0.0
    %512 = vmatmul.mubr.f32.gmra.mrb[0].mxu0 %v192
    %v513 = vpop.f32.mrb[0].mxu0
    %v514 = vadd.f32 %v98, %v513
    %v515 = vpop.f32.mrb[0].mxu0
    %516 = vmatprep.mubr.f32.mxu0 0.0
    %517 = vmatmul.mubr.f32.gmra.mrb[0].mxu0 %v195
    %v518 = vpop.f32.mrb[0].mxu0
    %v519 = vadd.f32 %v98, %v518
    %v520 = vpop.f32.mrb[0].mxu0
    %521 = vmatprep.mubr.f32.mxu0 0.0
    %522 = vmatmul.mubr.f32.gmra.mrb[0].mxu0 %v198
    %v523 = vpop.f32.mrb[0].mxu0
    %v524 = vadd.f32 %v98, %v523
    %v525 = vpop.f32.mrb[0].mxu0
    %526 = vmatprep.mubr.f32.mxu0 0.0
    %527 = vmatmul.mubr.f32.gmra.mrb[0].mxu0 %v201
    %v528 = vpop.f32.mrb[0].mxu0
    %v529 = vadd.f32 %v98, %v528
    %v530 = vpop.f32.mrb[0].mxu0
    %531 = vmatprep.mubr.f32.mxu0 0.0
    %532 = vmatmul.mubr.f32.gmra.mrb[0].mxu0 %v204
    %v533 = vpop.f32.mrb[0].mxu0
    %v534 = vadd.f32 %v98, %v533
    %v535 = vpop.f32.mrb[0].mxu0
    %536 = vmatprep.mubr.f32.mxu0 0.0
    %537 = vmatmul.mubr.f32.gmra.mrb[0].mxu0 %v207
    %v538 = vpop.f32.mrb[0].mxu0
    %v539 = vadd.f32 %v98, %v538
    %v540 = vpop.f32.mrb[0].mxu0
    %541 = vmatprep.mubr.f32.mxu0 0.0
    %542 = vmatmul.mubr.f32.gmra.mrb[0].mxu0 %v210
    %v543 = vpop.f32.mrb[0].mxu0
    %v544 = vadd.f32 %v98, %v543
    %v545 = vpop.f32.mrb[0].mxu0
    %546 = vmatprep.mubr.f32.mxu0 0.0
    %547 = vmatmul.mubr.f32.gmra.mrb[0].mxu0 %v213
    %v548 = vpop.f32.mrb[0].mxu0
    %v549 = vadd.f32 %v98, %v548
    %v550 = vpop.f32.mrb[0].mxu0
    %551 = vmatprep.mubr.f32.mxu0 0.0
    %552 = vmatmul.mubr.f32.gmra.mrb[0].mxu0 %v216
    %v553 = vpop.f32.mrb[0].mxu0
    %v554 = vadd.f32 %v98, %v553
    %v555 = vpop.f32.mrb[0].mxu0
    %556 = vmatprep.mubr.f32.mxu0 0.0
    %557 = vmatmul.mubr.f32.gmra.mrb[0].mxu0 %v219
    %v558 = vpop.f32.mrb[0].mxu0
    %v559 = vadd.f32 %v98, %v558
    %v560 = vpop.f32.mrb[0].mxu0
    %561 = vmatprep.mubr.f32.mxu0 0.0
    %562 = vmatmul.mubr.f32.gmra.mrb[0].mxu0 %v222
    %v563 = vpop.f32.mrb[0].mxu0
    %v564 = vadd.f32 %v98, %v563
    %v565 = vpop.f32.mrb[0].mxu0
    %566 = vmatprep.mubr.f32.mxu0 0.0
    %567 = vmatmul.mubr.f32.gmra.mrb[0].mxu0 %v225
    %v568 = vpop.f32.mrb[0].mxu0
    %v569 = vadd.f32 %v98, %v568
    %v570 = vpop.f32.mrb[0].mxu0
    %571 = vmatprep.mubr.f32.mxu0 0.0
    %572 = vmatmul.mubr.f32.gmra.mrb[0].mxu0 %v228
    %v573 = vpop.f32.mrb[0].mxu0
    %v574 = vadd.f32 %v98, %v573
    %v575 = vpop.f32.mrb[0].mxu0
    %576 = vmatprep.mubr.f32.mxu0 0.0
    %577 = vmatmul.mubr.f32.gmra.mrb[0].mxu0 %v231
    %v578 = vpop.f32.mrb[0].mxu0
    %v579 = vadd.f32 %v98, %v578
    %v580 = vpop.f32.mrb[0].mxu0
    %581 = vmatprep.mubr.f32.mxu0 0.0
    %582 = vmatmul.mubr.f32.gmra.mrb[0].mxu0 %v234
    %v583 = vpop.f32.mrb[0].mxu0
    %v584 = vadd.f32 %v98, %v583
    %v585 = vpop.f32.mrb[0].mxu0
    %586 = vmatprep.mubr.f32.mxu0 0.0
    %587 = vmatmul.mubr.f32.gmra.mrb[0].mxu0 %v237
    %v588 = vpop.f32.mrb[0].mxu0
    %v589 = vadd.f32 %v98, %v588
    %v590 = vpop.f32.mrb[0].mxu0
    %591 = vmatprep.mubr.f32.mxu0 0.0
    %592 = vmatmul.mubr.f32.gmra.mrb[0].mxu0 %v240
    %v593 = vpop.f32.mrb[0].mxu0
    %v594 = vadd.f32 %v98, %v593
    %v595 = vpop.f32.mrb[0].mxu0
    %596 = vmatprep.mubr.f32.mxu0 0.0
    %597 = vmatmul.mubr.f32.gmra.mrb[0].mxu0 %v243
    %v598 = vpop.f32.mrb[0].mxu0
    %v599 = vadd.f32 %v98, %v598
    %v600 = vpop.f32.mrb[0].mxu0
    %601 = vmatprep.mubr.f32.mxu0 0.0
    %602 = vmatmul.mubr.f32.gmra.mrb[0].mxu0 %v246
    %v603 = vpop.f32.mrb[0].mxu0
    %v604 = vadd.f32 %v98, %v603
    %v605 = vpop.f32.mrb[0].mxu0
    %606 = vmatprep.mubr.f32.mxu0 0.0
    %607 = vmatmul.mubr.f32.gmra.mrb[0].mxu0 %v249
    %v608 = vpop.f32.mrb[0].mxu0
    %v609 = vadd.f32 %v98, %v608
    %v610 = vpop.f32.mrb[0].mxu0
    %611 = vmatprep.mubr.f32.mxu0 0.0
    %612 = vmatmul.mubr.f32.gmra.mrb[0].mxu0 %v252
    %v613 = vpop.f32.mrb[0].mxu0
    %v614 = vadd.f32 %v98, %v613
    %v615 = vpop.f32.mrb[0].mxu0
    %616 = vmatprep.mubr.f32.mxu0 0.0
    %617 = vmatmul.mubr.f32.gmra.mrb[0].mxu0 %v255
    %v618 = vpop.f32.mrb[0].mxu0
    %v619 = vadd.f32 %v98, %v618
    %v620 = vpop.f32.mrb[0].mxu0
    %621 = vmatprep.mubr.f32.mxu0 0.0
    %622 = vmatmul.mubr.f32.gmra.mrb[0].mxu0 %v258
    %v623 = vpop.f32.mrb[0].mxu0
    %v624 = vadd.f32 %v98, %v623
    %v625 = vpop.f32.mrb[0].mxu0
    %626 = vmatprep.mubr.f32.mxu0 0.0
    %627 = vmatmul.mubr.f32.gmra.mrb[0].mxu0 %v261
    %v628 = vpop.f32.mrb[0].mxu0
    %v629 = vadd.f32 %v98, %v628
    %v630 = vpop.f32.mrb[0].mxu0
    %631 = vmatprep.mubr.f32.mxu0 0.0
    %632 = vmatmul.mubr.f32.gmra.mrb[0].mxu0 %v264
    %v633 = vpop.f32.mrb[0].mxu0
    %v634 = vadd.f32 %v98, %v633
    %v635 = vpop.f32.mrb[0].mxu0
    %636 = vmatprep.mubr.f32.mxu0 0.0
    %637 = vmatmul.mubr.f32.gmra.mrb[0].mxu0 %v267
    %v638 = vpop.f32.mrb[0].mxu0
    %v639 = vadd.f32 %v98, %v638
    %v640 = vpop.f32.mrb[0].mxu0
    %641 = vmatprep.mubr.f32.mxu0 0.0
    %642 = vmatmul.mubr.f32.gmra.mrb[0].mxu0 %v270
    %v643 = vpop.f32.mrb[0].mxu0
    %v644 = vadd.f32 %v98, %v643
    %v645 = vpop.f32.mrb[0].mxu0
    %646 = vmatprep.mubr.f32.mxu0 0.0
    %647 = vmatmul.mubr.f32.gmra.mrb[0].mxu0 %v273
    %v648 = vpop.f32.mrb[0].mxu0
    %v649 = vadd.f32 %v98, %v648
    %v650 = vpop.f32.mrb[0].mxu0
    %651 = vmatprep.mubr.f32.mxu0 0.0
    %652 = vmatmul.mubr.f32.gmra.mrb[0].mxu0 %v276
    %v653 = vpop.f32.mrb[0].mxu0
    %v654 = vadd.f32 %v98, %v653
    %v655 = vpop.f32.mrb[0].mxu0
    %656 = vmatprep.mubr.f32.mxu0 0.0
    %657 = vmatmul.mubr.f32.gmra.mrb[0].mxu0 %v279
    %v658 = vpop.f32.mrb[0].mxu0
    %v659 = vadd.f32 %v98, %v658
    %v660 = vpop.f32.mrb[0].mxu0
    %661 = vmatprep.mubr.f32.mxu0 0.0
    %662 = vmatmul.mubr.f32.gmra.mrb[0].mxu0 %v282
    %v663 = vpop.f32.mrb[0].mxu0
    %v664 = vadd.f32 %v98, %v663
    %v665 = vpop.f32.mrb[0].mxu0
    %666 = vmatprep.mubr.f32.mxu0 0.0
    %667 = vmatmul.mubr.f32.gmra.mrb[0].mxu0 %v285
    %v668 = vpop.f32.mrb[0].mxu0
    %v669 = vadd.f32 %v98, %v668
    %v670 = vpop.f32.mrb[0].mxu0
    %671 = vmatprep.mubr.f32.mxu0 0.0
    %672 = vmatmul.mubr.f32.gmra.mrb[0].mxu0 %v288
    %v673 = vpop.f32.mrb[0].mxu0
    %v674 = vadd.f32 %v98, %v673
    %v675 = vpop.f32.mrb[0].mxu0
    %676 = vmatprep.mubr.f32.mxu0 0.0
    %677 = vmatmul.mubr.f32.gmra.mrb[0].mxu0 %v291
    %v678 = vpop.f32.mrb[0].mxu0
    %v679 = vadd.f32 %v98, %v678
    %v680 = vpop.f32.mrb[0].mxu0
    %681 = vdwg.mxu0
    %v682 = vmax.f32 %v364, 0.0
    %v683 = vmax.f32 %v369, 0.0
    %v684 = vmax.f32 %v374, 0.0
    %v685 = vmax.f32 %v379, 0.0
    %v686 = vmax.f32 %v384, 0.0
    %v687 = vmax.f32 %v389, 0.0
    %v688 = vmax.f32 %v394, 0.0
    %v689 = vmax.f32 %v399, 0.0
    %v690 = vmax.f32 %v404, 0.0
    %v691 = vmax.f32 %v409, 0.0
    %v692 = vmax.f32 %v414, 0.0
    %v693 = vmax.f32 %v419, 0.0
    %v694 = vmax.f32 %v424, 0.0
    %v695 = vmax.f32 %v429, 0.0
    %v696 = vmax.f32 %v434, 0.0
    %v697 = vmax.f32 %v439, 0.0
    %v698 = vmax.f32 %v444, 0.0
    %v699 = vmax.f32 %v449, 0.0
    %v700 = vmax.f32 %v454, 0.0
    %v701 = vmax.f32 %v459, 0.0
    %v702 = vmax.f32 %v464, 0.0
    %v703 = vmax.f32 %v469, 0.0
    %v704 = vmax.f32 %v474, 0.0
    %v705 = vmax.f32 %v479, 0.0
    %v706 = vmax.f32 %v484, 0.0
    %v707 = vmax.f32 %v489, 0.0
    %v708 = vmax.f32 %v494, 0.0
    %v709 = vmax.f32 %v499, 0.0
    %v710 = vmax.f32 %v504, 0.0
    %v711 = vmax.f32 %v509, 0.0
    %v712 = vmax.f32 %v514, 0.0
    %v713 = vmax.f32 %v519, 0.0
    %v714 = vmax.f32 %v524, 0.0
    %v715 = vmax.f32 %v529, 0.0
    %v716 = vmax.f32 %v534, 0.0
    %v717 = vmax.f32 %v539, 0.0
    %v718 = vmax.f32 %v544, 0.0
    %v719 = vmax.f32 %v549, 0.0
    %v720 = vmax.f32 %v554, 0.0
    %v721 = vmax.f32 %v559, 0.0
    %v722 = vmax.f32 %v564, 0.0
    %v723 = vmax.f32 %v569, 0.0
    %v724 = vmax.f32 %v574, 0.0
    %v725 = vmax.f32 %v579, 0.0
    %v726 = vmax.f32 %v584, 0.0
    %v727 = vmax.f32 %v589, 0.0
    %v728 = vmax.f32 %v594, 0.0
    %v729 = vmax.f32 %v599, 0.0
    %v730 = vmax.f32 %v604, 0.0
    %v731 = vmax.f32 %v609, 0.0
    %v732 = vmax.f32 %v614, 0.0
    %v733 = vmax.f32 %v619, 0.0
    %v734 = vmax.f32 %v624, 0.0
    %v735 = vmax.f32 %v629, 0.0
    %v736 = vmax.f32 %v634, 0.0
    %v737 = vmax.f32 %v639, 0.0
    %v738 = vmax.f32 %v644, 0.0
    %v739 = vmax.f32 %v649, 0.0
    %v740 = vmax.f32 %v654, 0.0
    %v741 = vmax.f32 %v659, 0.0
    %v742 = vmax.f32 %v664, 0.0
    %v743 = vmax.f32 %v669, 0.0
    %v744 = vmax.f32 %v674, 0.0
    %v745 = vmax.f32 %v679, 0.0
    %v746 = vld [vmem:[%s3] sm:$0xff]
    %v747 = vld [vmem:[%s3 + $0x8] sm:$0xff]
    %v748 = vld [vmem:[%s3 + $0x10] sm:$0xff]
    %v749 = vld [vmem:[%s3 + $0x18] sm:$0xff]
    %v750 = vld [vmem:[%s3 + $0x20] sm:$0xff]
    %v751 = vld [vmem:[%s3 + $0x28] sm:$0xff]
    %v752 = vld [vmem:[%s3 + $0x30] sm:$0xff]
    %v753 = vld [vmem:[%s3 + $0x38] sm:$0xff]
    %v754 = vld [vmem:[%s3 + $0x40] sm:$0xff]
    %v755 = vld [vmem:[%s3 + $0x48] sm:$0xff]
    %v756 = vld [vmem:[%s3 + $0x50] sm:$0xff]
    %v757 = vld [vmem:[%s3 + $0x58] sm:$0xff]
    %v758 = vld [vmem:[%s3 + $0x60] sm:$0xff]
    %v759 = vld [vmem:[%s3 + $0x68] sm:$0xff]
    %v760 = vld [vmem:[%s3 + $0x70] sm:$0xff]
    %v761 = vld [vmem:[%s3 + $0x78] sm:$0xff]
    %v762 = vld [vmem:[%s4] sm:$0x1]
    %v764 = vlaneseq
    %v765 = vshrl.u32 %v764, 7
    %v766 = vsub.s32 0, %v765
    %v767 = vrot.slane %v762, %v766
    %769 = vmatprep.subr.mxu0 0.0
    %770 = vmatpush1.msra.mxu0 %v746
    %771 = vmatprep.subr.mxu0 0.0
    %772 = vmatpush1.msra.mxu0 %v747
    %773 = vmatprep.subr.mxu0 0.0
    %774 = vmatpush1.msra.mxu0 %v748
    %775 = vmatprep.subr.mxu0 0.0
    %776 = vmatpush1.msra.mxu0 %v749
    %777 = vmatprep.subr.mxu0 0.0
    %778 = vmatpush1.msra.mxu0 %v750
    %779 = vmatprep.subr.mxu0 0.0
    %780 = vmatpush1.msra.mxu0 %v751
    %781 = vmatprep.subr.mxu0 0.0
    %782 = vmatpush1.msra.mxu0 %v752
    %783 = vmatprep.subr.mxu0 0.0
    %784 = vmatpush1.msra.mxu0 %v753
    %785 = vmatprep.subr.mxu0 0.0
    %786 = vmatpush1.msra.mxu0 %v754
    %787 = vmatprep.subr.mxu0 0.0
    %788 = vmatpush1.msra.mxu0 %v755
    %789 = vmatprep.subr.mxu0 0.0
    %790 = vmatpush1.msra.mxu0 %v756
    %791 = vmatprep.subr.mxu0 0.0
    %792 = vmatpush1.msra.mxu0 %v757
    %793 = vmatprep.subr.mxu0 0.0
    %794 = vmatpush1.msra.mxu0 %v758
    %795 = vmatprep.subr.mxu0 0.0
    %796 = vmatpush1.msra.mxu0 %v759
    %797 = vmatprep.subr.mxu0 0.0
    %798 = vmatpush1.msra.mxu0 %v760
    %799 = vmatprep.subr.mxu0 0.0
    %800 = vmatpush1.msra.mxu0 %v761
    %801 = vmatprep.subr.mxu0 0.0
    %802 = vmatpush1.msra.mxu0 0.0
    %803 = vmatprep.subr.mxu0 0.0
    %804 = vmatpush1.msra.mxu0 0.0
    %805 = vmatprep.subr.mxu0 0.0
    %806 = vmatpush1.msra.mxu0 0.0
    %807 = vmatprep.subr.mxu0 0.0
    %808 = vmatpush1.msra.mxu0 0.0
    %809 = vmatprep.subr.mxu0 0.0
    %810 = vmatpush1.msra.mxu0 0.0
    %811 = vmatprep.subr.mxu0 0.0
    %812 = vmatpush1.msra.mxu0 0.0
    %813 = vmatprep.subr.mxu0 0.0
    %814 = vmatpush1.msra.mxu0 0.0
    %815 = vmatprep.subr.mxu0 0.0
    %816 = vmatpush1.msra.mxu0 0.0
    %817 = vmatprep.subr.mxu0 0.0
    %818 = vmatpush1.msra.mxu0 0.0
    %819 = vmatprep.subr.mxu0 0.0
    %820 = vmatpush1.msra.mxu0 0.0
    %821 = vmatprep.subr.mxu0 0.0
    %822 = vmatpush1.msra.mxu0 0.0
    %823 = vmatprep.subr.mxu0 0.0
    %824 = vmatpush1.msra.mxu0 0.0
    %825 = vmatprep.subr.mxu0 0.0
    %826 = vmatpush1.msra.mxu0 0.0
    %827 = vmatprep.subr.mxu0 0.0
    %828 = vmatpush1.msra.mxu0 0.0
    %829 = vmatprep.subr.mxu0 0.0
    %830 = vmatpush1.msra.mxu0 0.0
    %831 = vmatprep.subr.mxu0 0.0
    %832 = vmatpush1.msra.mxu0 0.0
    %833 = vmatprep.mubr.f32.mxu0 0.0
    %834 = vmatmul.mubr.f32.gmra.mrb[0].mxu0 %v682
    %v835 = vpop.f32.mrb[0].mxu0
    %v836 = vadd.f32 %v767, %v835
    %v837 = vpop.f32.mrb[0].mxu0
    %838 = vmatprep.mubr.f32.mxu0 0.0
    %839 = vmatmul.mubr.f32.gmra.mrb[0].mxu0 %v683
    %v840 = vpop.f32.mrb[0].mxu0
    %v841 = vadd.f32 %v767, %v840
    %v842 = vpop.f32.mrb[0].mxu0
    %843 = vmatprep.mubr.f32.mxu0 0.0
    %844 = vmatmul.mubr.f32.gmra.mrb[0].mxu0 %v684
    %v845 = vpop.f32.mrb[0].mxu0
    %v846 = vadd.f32 %v767, %v845
    %v847 = vpop.f32.mrb[0].mxu0
    %848 = vmatprep.mubr.f32.mxu0 0.0
    %849 = vmatmul.mubr.f32.gmra.mrb[0].mxu0 %v685
    %v850 = vpop.f32.mrb[0].mxu0
    %v851 = vadd.f32 %v767, %v850
    %v852 = vpop.f32.mrb[0].mxu0
    %853 = vmatprep.mubr.f32.mxu0 0.0
    %854 = vmatmul.mubr.f32.gmra.mrb[0].mxu0 %v686
    %v855 = vpop.f32.mrb[0].mxu0
    %v856 = vadd.f32 %v767, %v855
    %v857 = vpop.f32.mrb[0].mxu0
    %858 = vmatprep.mubr.f32.mxu0 0.0
    %859 = vmatmul.mubr.f32.gmra.mrb[0].mxu0 %v687
    %v860 = vpop.f32.mrb[0].mxu0
    %v861 = vadd.f32 %v767, %v860
    %v862 = vpop.f32.mrb[0].mxu0
    %863 = vmatprep.mubr.f32.mxu0 0.0
    %864 = vmatmul.mubr.f32.gmra.mrb[0].mxu0 %v688
    %v865 = vpop.f32.mrb[0].mxu0
    %v866 = vadd.f32 %v767, %v865
    %v867 = vpop.f32.mrb[0].mxu0
    %868 = vmatprep.mubr.f32.mxu0 0.0
    %869 = vmatmul.mubr.f32.gmra.mrb[0].mxu0 %v689
    %v870 = vpop.f32.mrb[0].mxu0
    %v871 = vadd.f32 %v767, %v870
    %v872 = vpop.f32.mrb[0].mxu0
    %873 = vmatprep.mubr.f32.mxu0 0.0
    %874 = vmatmul.mubr.f32.gmra.mrb[0].mxu0 %v690
    %v875 = vpop.f32.mrb[0].mxu0
    %v876 = vadd.f32 %v767, %v875
    %v877 = vpop.f32.mrb[0].mxu0
    %878 = vmatprep.mubr.f32.mxu0 0.0
    %879 = vmatmul.mubr.f32.gmra.mrb[0].mxu0 %v691
    %v880 = vpop.f32.mrb[0].mxu0
    %v881 = vadd.f32 %v767, %v880
    %v882 = vpop.f32.mrb[0].mxu0
    %883 = vmatprep.mubr.f32.mxu0 0.0
    %884 = vmatmul.mubr.f32.gmra.mrb[0].mxu0 %v692
    %v885 = vpop.f32.mrb[0].mxu0
    %v886 = vadd.f32 %v767, %v885
    %v887 = vpop.f32.mrb[0].mxu0
    %888 = vmatprep.mubr.f32.mxu0 0.0
    %889 = vmatmul.mubr.f32.gmra.mrb[0].mxu0 %v693
    %v890 = vpop.f32.mrb[0].mxu0
    %v891 = vadd.f32 %v767, %v890
    %v892 = vpop.f32.mrb[0].mxu0
    %893 = vmatprep.mubr.f32.mxu0 0.0
    %894 = vmatmul.mubr.f32.gmra.mrb[0].mxu0 %v694
    %v895 = vpop.f32.mrb[0].mxu0
    %v896 = vadd.f32 %v767, %v895
    %v897 = vpop.f32.mrb[0].mxu0
    %898 = vmatprep.mubr.f32.mxu0 0.0
    %899 = vmatmul.mubr.f32.gmra.mrb[0].mxu0 %v695
    %v900 = vpop.f32.mrb[0].mxu0
    %v901 = vadd.f32 %v767, %v900
    %v902 = vpop.f32.mrb[0].mxu0
    %903 = vmatprep.mubr.f32.mxu0 0.0
    %904 = vmatmul.mubr.f32.gmra.mrb[0].mxu0 %v696
    %v905 = vpop.f32.mrb[0].mxu0
    %v906 = vadd.f32 %v767, %v905
    %v907 = vpop.f32.mrb[0].mxu0
    %908 = vmatprep.mubr.f32.mxu0 0.0
    %909 = vmatmul.mubr.f32.gmra.mrb[0].mxu0 %v697
    %v910 = vpop.f32.mrb[0].mxu0
    %v911 = vadd.f32 %v767, %v910
    %v912 = vpop.f32.mrb[0].mxu0
    %913 = vmatprep.mubr.f32.mxu0 0.0
    %914 = vmatmul.mubr.f32.gmra.mrb[0].mxu0 %v698
    %v915 = vpop.f32.mrb[0].mxu0
    %v916 = vadd.f32 %v767, %v915
    %v917 = vpop.f32.mrb[0].mxu0
    %918 = vmatprep.mubr.f32.mxu0 0.0
    %919 = vmatmul.mubr.f32.gmra.mrb[0].mxu0 %v699
    %v920 = vpop.f32.mrb[0].mxu0
    %v921 = vadd.f32 %v767, %v920
    %v922 = vpop.f32.mrb[0].mxu0
    %923 = vmatprep.mubr.f32.mxu0 0.0
    %924 = vmatmul.mubr.f32.gmra.mrb[0].mxu0 %v700
    %v925 = vpop.f32.mrb[0].mxu0
    %v926 = vadd.f32 %v767, %v925
    %v927 = vpop.f32.mrb[0].mxu0
    %928 = vmatprep.mubr.f32.mxu0 0.0
    %929 = vmatmul.mubr.f32.gmra.mrb[0].mxu0 %v701
    %v930 = vpop.f32.mrb[0].mxu0
    %v931 = vadd.f32 %v767, %v930
    %v932 = vpop.f32.mrb[0].mxu0
    %933 = vmatprep.mubr.f32.mxu0 0.0
    %934 = vmatmul.mubr.f32.gmra.mrb[0].mxu0 %v702
    %v935 = vpop.f32.mrb[0].mxu0
    %v936 = vadd.f32 %v767, %v935
    %v937 = vpop.f32.mrb[0].mxu0
    %938 = vmatprep.mubr.f32.mxu0 0.0
    %939 = vmatmul.mubr.f32.gmra.mrb[0].mxu0 %v703
    %v940 = vpop.f32.mrb[0].mxu0
    %v941 = vadd.f32 %v767, %v940
    %v942 = vpop.f32.mrb[0].mxu0
    %943 = vmatprep.mubr.f32.mxu0 0.0
    %944 = vmatmul.mubr.f32.gmra.mrb[0].mxu0 %v704
    %v945 = vpop.f32.mrb[0].mxu0
    %v946 = vadd.f32 %v767, %v945
    %v947 = vpop.f32.mrb[0].mxu0
    %948 = vmatprep.mubr.f32.mxu0 0.0
    %949 = vmatmul.mubr.f32.gmra.mrb[0].mxu0 %v705
    %v950 = vpop.f32.mrb[0].mxu0
    %v951 = vadd.f32 %v767, %v950
    %v952 = vpop.f32.mrb[0].mxu0
    %953 = vmatprep.mubr.f32.mxu0 0.0
    %954 = vmatmul.mubr.f32.gmra.mrb[0].mxu0 %v706
    %v955 = vpop.f32.mrb[0].mxu0
    %v956 = vadd.f32 %v767, %v955
    %v957 = vpop.f32.mrb[0].mxu0
    %958 = vmatprep.mubr.f32.mxu0 0.0
    %959 = vmatmul.mubr.f32.gmra.mrb[0].mxu0 %v707
    %v960 = vpop.f32.mrb[0].mxu0
    %v961 = vadd.f32 %v767, %v960
    %v962 = vpop.f32.mrb[0].mxu0
    %963 = vmatprep.mubr.f32.mxu0 0.0
    %964 = vmatmul.mubr.f32.gmra.mrb[0].mxu0 %v708
    %v965 = vpop.f32.mrb[0].mxu0
    %v966 = vadd.f32 %v767, %v965
    %v967 = vpop.f32.mrb[0].mxu0
    %968 = vmatprep.mubr.f32.mxu0 0.0
    %969 = vmatmul.mubr.f32.gmra.mrb[0].mxu0 %v709
    %v970 = vpop.f32.mrb[0].mxu0
    %v971 = vadd.f32 %v767, %v970
    %v972 = vpop.f32.mrb[0].mxu0
    %973 = vmatprep.mubr.f32.mxu0 0.0
    %974 = vmatmul.mubr.f32.gmra.mrb[0].mxu0 %v710
    %v975 = vpop.f32.mrb[0].mxu0
    %v976 = vadd.f32 %v767, %v975
    %v977 = vpop.f32.mrb[0].mxu0
    %978 = vmatprep.mubr.f32.mxu0 0.0
    %979 = vmatmul.mubr.f32.gmra.mrb[0].mxu0 %v711
    %v980 = vpop.f32.mrb[0].mxu0
    %v981 = vadd.f32 %v767, %v980
    %v982 = vpop.f32.mrb[0].mxu0
    %983 = vmatprep.mubr.f32.mxu0 0.0
    %984 = vmatmul.mubr.f32.gmra.mrb[0].mxu0 %v712
    %v985 = vpop.f32.mrb[0].mxu0
    %v986 = vadd.f32 %v767, %v985
    %v987 = vpop.f32.mrb[0].mxu0
    %988 = vmatprep.mubr.f32.mxu0 0.0
    %989 = vmatmul.mubr.f32.gmra.mrb[0].mxu0 %v713
    %v990 = vpop.f32.mrb[0].mxu0
    %v991 = vadd.f32 %v767, %v990
    %v992 = vpop.f32.mrb[0].mxu0
    %993 = vmatprep.mubr.f32.mxu0 0.0
    %994 = vmatmul.mubr.f32.gmra.mrb[0].mxu0 %v714
    %v995 = vpop.f32.mrb[0].mxu0
    %v996 = vadd.f32 %v767, %v995
    %v997 = vpop.f32.mrb[0].mxu0
    %998 = vmatprep.mubr.f32.mxu0 0.0
    %999 = vmatmul.mubr.f32.gmra.mrb[0].mxu0 %v715
    %v1000 = vpop.f32.mrb[0].mxu0
    %v1001 = vadd.f32 %v767, %v1000
    %v1002 = vpop.f32.mrb[0].mxu0
    %1003 = vmatprep.mubr.f32.mxu0 0.0
    %1004 = vmatmul.mubr.f32.gmra.mrb[0].mxu0 %v716
    %v1005 = vpop.f32.mrb[0].mxu0
    %v1006 = vadd.f32 %v767, %v1005
    %v1007 = vpop.f32.mrb[0].mxu0
    %1008 = vmatprep.mubr.f32.mxu0 0.0
    %1009 = vmatmul.mubr.f32.gmra.mrb[0].mxu0 %v717
    %v1010 = vpop.f32.mrb[0].mxu0
    %v1011 = vadd.f32 %v767, %v1010
    %v1012 = vpop.f32.mrb[0].mxu0
    %1013 = vmatprep.mubr.f32.mxu0 0.0
    %1014 = vmatmul.mubr.f32.gmra.mrb[0].mxu0 %v718
    %v1015 = vpop.f32.mrb[0].mxu0
    %v1016 = vadd.f32 %v767, %v1015
    %v1017 = vpop.f32.mrb[0].mxu0
    %1018 = vmatprep.mubr.f32.mxu0 0.0
    %1019 = vmatmul.mubr.f32.gmra.mrb[0].mxu0 %v719
    %v1020 = vpop.f32.mrb[0].mxu0
    %v1021 = vadd.f32 %v767, %v1020
    %v1022 = vpop.f32.mrb[0].mxu0
    %1023 = vmatprep.mubr.f32.mxu0 0.0
    %1024 = vmatmul.mubr.f32.gmra.mrb[0].mxu0 %v720
    %v1025 = vpop.f32.mrb[0].mxu0
    %v1026 = vadd.f32 %v767, %v1025
    %v1027 = vpop.f32.mrb[0].mxu0
    %1028 = vmatprep.mubr.f32.mxu0 0.0
    %1029 = vmatmul.mubr.f32.gmra.mrb[0].mxu0 %v721
    %v1030 = vpop.f32.mrb[0].mxu0
    %v1031 = vadd.f32 %v767, %v1030
    %v1032 = vpop.f32.mrb[0].mxu0
    %1033 = vmatprep.mubr.f32.mxu0 0.0
    %1034 = vmatmul.mubr.f32.gmra.mrb[0].mxu0 %v722
    %v1035 = vpop.f32.mrb[0].mxu0
    %v1036 = vadd.f32 %v767, %v1035
    %v1037 = vpop.f32.mrb[0].mxu0
    %1038 = vmatprep.mubr.f32.mxu0 0.0
    %1039 = vmatmul.mubr.f32.gmra.mrb[0].mxu0 %v723
    %v1040 = vpop.f32.mrb[0].mxu0
    %v1041 = vadd.f32 %v767, %v1040
    %v1042 = vpop.f32.mrb[0].mxu0
    %1043 = vmatprep.mubr.f32.mxu0 0.0
    %1044 = vmatmul.mubr.f32.gmra.mrb[0].mxu0 %v724
    %v1045 = vpop.f32.mrb[0].mxu0
    %v1046 = vadd.f32 %v767, %v1045
    %v1047 = vpop.f32.mrb[0].mxu0
    %1048 = vmatprep.mubr.f32.mxu0 0.0
    %1049 = vmatmul.mubr.f32.gmra.mrb[0].mxu0 %v725
    %v1050 = vpop.f32.mrb[0].mxu0
    %v1051 = vadd.f32 %v767, %v1050
    %v1052 = vpop.f32.mrb[0].mxu0
    %1053 = vmatprep.mubr.f32.mxu0 0.0
    %1054 = vmatmul.mubr.f32.gmra.mrb[0].mxu0 %v726
    %v1055 = vpop.f32.mrb[0].mxu0
    %v1056 = vadd.f32 %v767, %v1055
    %v1057 = vpop.f32.mrb[0].mxu0
    %1058 = vmatprep.mubr.f32.mxu0 0.0
    %1059 = vmatmul.mubr.f32.gmra.mrb[0].mxu0 %v727
    %v1060 = vpop.f32.mrb[0].mxu0
    %v1061 = vadd.f32 %v767, %v1060
    %v1062 = vpop.f32.mrb[0].mxu0
    %1063 = vmatprep.mubr.f32.mxu0 0.0
    %1064 = vmatmul.mubr.f32.gmra.mrb[0].mxu0 %v728
    %v1065 = vpop.f32.mrb[0].mxu0
    %v1066 = vadd.f32 %v767, %v1065
    %v1067 = vpop.f32.mrb[0].mxu0
    %1068 = vmatprep.mubr.f32.mxu0 0.0
    %1069 = vmatmul.mubr.f32.gmra.mrb[0].mxu0 %v729
    %v1070 = vpop.f32.mrb[0].mxu0
    %v1071 = vadd.f32 %v767, %v1070
    %v1072 = vpop.f32.mrb[0].mxu0
    %1073 = vmatprep.mubr.f32.mxu0 0.0
    %1074 = vmatmul.mubr.f32.gmra.mrb[0].mxu0 %v730
    %v1075 = vpop.f32.mrb[0].mxu0
    %v1076 = vadd.f32 %v767, %v1075
    %v1077 = vpop.f32.mrb[0].mxu0
    %1078 = vmatprep.mubr.f32.mxu0 0.0
    %1079 = vmatmul.mubr.f32.gmra.mrb[0].mxu0 %v731
    %v1080 = vpop.f32.mrb[0].mxu0
    %v1081 = vadd.f32 %v767, %v1080
    %v1082 = vpop.f32.mrb[0].mxu0
    %1083 = vmatprep.mubr.f32.mxu0 0.0
    %1084 = vmatmul.mubr.f32.gmra.mrb[0].mxu0 %v732
    %v1085 = vpop.f32.mrb[0].mxu0
    %v1086 = vadd.f32 %v767, %v1085
    %v1087 = vpop.f32.mrb[0].mxu0
    %1088 = vmatprep.mubr.f32.mxu0 0.0
    %1089 = vmatmul.mubr.f32.gmra.mrb[0].mxu0 %v733
    %v1090 = vpop.f32.mrb[0].mxu0
    %v1091 = vadd.f32 %v767, %v1090
    %v1092 = vpop.f32.mrb[0].mxu0
    %1093 = vmatprep.mubr.f32.mxu0 0.0
    %1094 = vmatmul.mubr.f32.gmra.mrb[0].mxu0 %v734
    %v1095 = vpop.f32.mrb[0].mxu0
    %v1096 = vadd.f32 %v767, %v1095
    %v1097 = vpop.f32.mrb[0].mxu0
    %1098 = vmatprep.mubr.f32.mxu0 0.0
    %1099 = vmatmul.mubr.f32.gmra.mrb[0].mxu0 %v735
    %v1100 = vpop.f32.mrb[0].mxu0
    %v1101 = vadd.f32 %v767, %v1100
    %v1102 = vpop.f32.mrb[0].mxu0
    %1103 = vmatprep.mubr.f32.mxu0 0.0
    %1104 = vmatmul.mubr.f32.gmra.mrb[0].mxu0 %v736
    %v1105 = vpop.f32.mrb[0].mxu0
    %v1106 = vadd.f32 %v767, %v1105
    %v1107 = vpop.f32.mrb[0].mxu0
    %1108 = vmatprep.mubr.f32.mxu0 0.0
    %1109 = vmatmul.mubr.f32.gmra.mrb[0].mxu0 %v737
    %v1110 = vpop.f32.mrb[0].mxu0
    %v1111 = vadd.f32 %v767, %v1110
    %v1112 = vpop.f32.mrb[0].mxu0
    %1113 = vmatprep.mubr.f32.mxu0 0.0
    %1114 = vmatmul.mubr.f32.gmra.mrb[0].mxu0 %v738
    %v1115 = vpop.f32.mrb[0].mxu0
    %v1116 = vadd.f32 %v767, %v1115
    %v1117 = vpop.f32.mrb[0].mxu0
    %1118 = vmatprep.mubr.f32.mxu0 0.0
    %1119 = vmatmul.mubr.f32.gmra.mrb[0].mxu0 %v739
    %v1120 = vpop.f32.mrb[0].mxu0
    %v1121 = vadd.f32 %v767, %v1120
    %v1122 = vpop.f32.mrb[0].mxu0
    %1123 = vmatprep.mubr.f32.mxu0 0.0
    %1124 = vmatmul.mubr.f32.gmra.mrb[0].mxu0 %v740
    %v1125 = vpop.f32.mrb[0].mxu0
    %v1126 = vadd.f32 %v767, %v1125
    %v1127 = vpop.f32.mrb[0].mxu0
    %1128 = vmatprep.mubr.f32.mxu0 0.0
    %1129 = vmatmul.mubr.f32.gmra.mrb[0].mxu0 %v741
    %v1130 = vpop.f32.mrb[0].mxu0
    %v1131 = vadd.f32 %v767, %v1130
    %v1132 = vpop.f32.mrb[0].mxu0
    %1133 = vmatprep.mubr.f32.mxu0 0.0
    %1134 = vmatmul.mubr.f32.gmra.mrb[0].mxu0 %v742
    %v1135 = vpop.f32.mrb[0].mxu0
    %v1136 = vadd.f32 %v767, %v1135
    %v1137 = vpop.f32.mrb[0].mxu0
    %1138 = vmatprep.mubr.f32.mxu0 0.0
    %1139 = vmatmul.mubr.f32.gmra.mrb[0].mxu0 %v743
    %v1140 = vpop.f32.mrb[0].mxu0
    %v1141 = vadd.f32 %v767, %v1140
    %v1142 = vpop.f32.mrb[0].mxu0
    %1143 = vmatprep.mubr.f32.mxu0 0.0
    %1144 = vmatmul.mubr.f32.gmra.mrb[0].mxu0 %v744
    %v1145 = vpop.f32.mrb[0].mxu0
    %v1146 = vadd.f32 %v767, %v1145
    %v1147 = vpop.f32.mrb[0].mxu0
    %1148 = vmatprep.mubr.f32.mxu0 0.0
    %1149 = vmatmul.mubr.f32.gmra.mrb[0].mxu0 %v745
    %v1150 = vpop.f32.mrb[0].mxu0
    %v1151 = vadd.f32 %v767, %v1150
    %v1152 = vpop.f32.mrb[0].mxu0
    %1153 = vdwg.mxu0
    %v1154 = vmax.f32 %v836, 0.0
    %v1155 = vmax.f32 %v841, 0.0
    %v1156 = vmax.f32 %v846, 0.0
    %v1157 = vmax.f32 %v851, 0.0
    %v1158 = vmax.f32 %v856, 0.0
    %v1159 = vmax.f32 %v861, 0.0
    %v1160 = vmax.f32 %v866, 0.0
    %v1161 = vmax.f32 %v871, 0.0
    %v1162 = vmax.f32 %v876, 0.0
    %v1163 = vmax.f32 %v881, 0.0
    %v1164 = vmax.f32 %v886, 0.0
    %v1165 = vmax.f32 %v891, 0.0
    %v1166 = vmax.f32 %v896, 0.0
    %v1167 = vmax.f32 %v901, 0.0
    %v1168 = vmax.f32 %v906, 0.0
    %v1169 = vmax.f32 %v911, 0.0
    %v1170 = vmax.f32 %v916, 0.0
    %v1171 = vmax.f32 %v921, 0.0
    %v1172 = vmax.f32 %v926, 0.0
    %v1173 = vmax.f32 %v931, 0.0
    %v1174 = vmax.f32 %v936, 0.0
    %v1175 = vmax.f32 %v941, 0.0
    %v1176 = vmax.f32 %v946, 0.0
    %v1177 = vmax.f32 %v951, 0.0
    %v1178 = vmax.f32 %v956, 0.0
    %v1179 = vmax.f32 %v961, 0.0
    %v1180 = vmax.f32 %v966, 0.0
    %v1181 = vmax.f32 %v971, 0.0
    %v1182 = vmax.f32 %v976, 0.0
    %v1183 = vmax.f32 %v981, 0.0
    %v1184 = vmax.f32 %v986, 0.0
    %v1185 = vmax.f32 %v991, 0.0
    %v1186 = vmax.f32 %v996, 0.0
    %v1187 = vmax.f32 %v1001, 0.0
    %v1188 = vmax.f32 %v1006, 0.0
    %v1189 = vmax.f32 %v1011, 0.0
    %v1190 = vmax.f32 %v1016, 0.0
    %v1191 = vmax.f32 %v1021, 0.0
    %v1192 = vmax.f32 %v1026, 0.0
    %v1193 = vmax.f32 %v1031, 0.0
    %v1194 = vmax.f32 %v1036, 0.0
    %v1195 = vmax.f32 %v1041, 0.0
    %v1196 = vmax.f32 %v1046, 0.0
    %v1197 = vmax.f32 %v1051, 0.0
    %v1198 = vmax.f32 %v1056, 0.0
    %v1199 = vmax.f32 %v1061, 0.0
    %v1200 = vmax.f32 %v1066, 0.0
    %v1201 = vmax.f32 %v1071, 0.0
    %v1202 = vmax.f32 %v1076, 0.0
    %v1203 = vmax.f32 %v1081, 0.0
    %v1204 = vmax.f32 %v1086, 0.0
    %v1205 = vmax.f32 %v1091, 0.0
    %v1206 = vmax.f32 %v1096, 0.0
    %v1207 = vmax.f32 %v1101, 0.0
    %v1208 = vmax.f32 %v1106, 0.0
    %v1209 = vmax.f32 %v1111, 0.0
    %v1210 = vmax.f32 %v1116, 0.0
    %v1211 = vmax.f32 %v1121, 0.0
    %v1212 = vmax.f32 %v1126, 0.0
    %v1213 = vmax.f32 %v1131, 0.0
    %v1214 = vmax.f32 %v1136, 0.0
    %v1215 = vmax.f32 %v1141, 0.0
    %v1216 = vmax.f32 %v1146, 0.0
    %v1217 = vmax.f32 %v1151, 0.0
    %v1218 = vld [vmem:[%s5] sm:$0xff]
    %v1219 = vld [vmem:[%s5 + $0x8] sm:$0xff]
    %v1220 = vld [vmem:[%s5 + $0x10] sm:$0xff]
    %v1221 = vld [vmem:[%s5 + $0x18] sm:$0xff]
    %v1222 = vld [vmem:[%s5 + $0x20] sm:$0xff]
    %v1223 = vld [vmem:[%s5 + $0x28] sm:$0xff]
    %v1224 = vld [vmem:[%s5 + $0x30] sm:$0xff]
    %v1225 = vld [vmem:[%s5 + $0x38] sm:$0xff]
    %v1226 = vld [vmem:[%s5 + $0x40] sm:$0xff]
    %v1227 = vld [vmem:[%s5 + $0x48] sm:$0xff]
    %v1228 = vld [vmem:[%s5 + $0x50] sm:$0xff]
    %v1229 = vld [vmem:[%s5 + $0x58] sm:$0xff]
    %v1230 = vld [vmem:[%s5 + $0x60] sm:$0xff]
    %v1231 = vld [vmem:[%s5 + $0x68] sm:$0xff]
    %v1232 = vld [vmem:[%s5 + $0x70] sm:$0xff]
    %v1233 = vld [vmem:[%s5 + $0x78] sm:$0xff]
    %v1234 = vld [vmem:[%s6] sm:$0x1]
    %v1236 = vlaneseq
    %v1237 = vshrl.u32 %v1236, 7
    %v1238 = vsub.s32 0, %v1237
    %v1239 = vrot.slane %v1234, %v1238
    %1241 = vmatprep.subr.mxu0 0.0
    %1242 = vmatpush1.msra.mxu0 %v1218
    %1243 = vmatprep.subr.mxu0 0.0
    %1244 = vmatpush1.msra.mxu0 %v1219
    %1245 = vmatprep.subr.mxu0 0.0
    %1246 = vmatpush1.msra.mxu0 %v1220
    %1247 = vmatprep.subr.mxu0 0.0
    %1248 = vmatpush1.msra.mxu0 %v1221
    %1249 = vmatprep.subr.mxu0 0.0
    %1250 = vmatpush1.msra.mxu0 %v1222
    %1251 = vmatprep.subr.mxu0 0.0
    %1252 = vmatpush1.msra.mxu0 %v1223
    %1253 = vmatprep.subr.mxu0 0.0
    %1254 = vmatpush1.msra.mxu0 %v1224
    %1255 = vmatprep.subr.mxu0 0.0
    %1256 = vmatpush1.msra.mxu0 %v1225
    %1257 = vmatprep.subr.mxu0 0.0
    %1258 = vmatpush1.msra.mxu0 %v1226
    %1259 = vmatprep.subr.mxu0 0.0
    %1260 = vmatpush1.msra.mxu0 %v1227
    %1261 = vmatprep.subr.mxu0 0.0
    %1262 = vmatpush1.msra.mxu0 %v1228
    %1263 = vmatprep.subr.mxu0 0.0
    %1264 = vmatpush1.msra.mxu0 %v1229
    %1265 = vmatprep.subr.mxu0 0.0
    %1266 = vmatpush1.msra.mxu0 %v1230
    %1267 = vmatprep.subr.mxu0 0.0
    %1268 = vmatpush1.msra.mxu0 %v1231
    %1269 = vmatprep.subr.mxu0 0.0
    %1270 = vmatpush1.msra.mxu0 %v1232
    %1271 = vmatprep.subr.mxu0 0.0
    %1272 = vmatpush1.msra.mxu0 %v1233
    %1273 = vmatprep.subr.mxu0 0.0
    %1274 = vmatpush1.msra.mxu0 0.0
    %1275 = vmatprep.subr.mxu0 0.0
    %1276 = vmatpush1.msra.mxu0 0.0
    %1277 = vmatprep.subr.mxu0 0.0
    %1278 = vmatpush1.msra.mxu0 0.0
    %1279 = vmatprep.subr.mxu0 0.0
    %1280 = vmatpush1.msra.mxu0 0.0
    %1281 = vmatprep.subr.mxu0 0.0
    %1282 = vmatpush1.msra.mxu0 0.0
    %1283 = vmatprep.subr.mxu0 0.0
    %1284 = vmatpush1.msra.mxu0 0.0
    %1285 = vmatprep.subr.mxu0 0.0
    %1286 = vmatpush1.msra.mxu0 0.0
    %1287 = vmatprep.subr.mxu0 0.0
    %1288 = vmatpush1.msra.mxu0 0.0
    %1289 = vmatprep.subr.mxu0 0.0
    %1290 = vmatpush1.msra.mxu0 0.0
    %1291 = vmatprep.subr.mxu0 0.0
    %1292 = vmatpush1.msra.mxu0 0.0
    %1293 = vmatprep.subr.mxu0 0.0
    %1294 = vmatpush1.msra.mxu0 0.0
    %1295 = vmatprep.subr.mxu0 0.0
    %1296 = vmatpush1.msra.mxu0 0.0
    %1297 = vmatprep.subr.mxu0 0.0
    %1298 = vmatpush1.msra.mxu0 0.0
    %1299 = vmatprep.subr.mxu0 0.0
    %1300 = vmatpush1.msra.mxu0 0.0
    %1301 = vmatprep.subr.mxu0 0.0
    %1302 = vmatpush1.msra.mxu0 0.0
    %1303 = vmatprep.subr.mxu0 0.0
    %1304 = vmatpush1.msra.mxu0 0.0
    %1305 = vmatprep.mubr.f32.mxu0 0.0
    %1306 = vmatmul.mubr.f32.gmra.mrb[0].mxu0 %v1154
    %v1307 = vpop.f32.mrb[0].mxu0
    %v1308 = vadd.f32 %v1239, %v1307
    %v1309 = vpop.f32.mrb[0].mxu0
    %1310 = vmatprep.mubr.f32.mxu0 0.0
    %1311 = vmatmul.mubr.f32.gmra.mrb[0].mxu0 %v1155
    %v1312 = vpop.f32.mrb[0].mxu0
    %v1313 = vadd.f32 %v1239, %v1312
    %v1314 = vpop.f32.mrb[0].mxu0
    %1315 = vmatprep.mubr.f32.mxu0 0.0
    %1316 = vmatmul.mubr.f32.gmra.mrb[0].mxu0 %v1156
    %v1317 = vpop.f32.mrb[0].mxu0
    %v1318 = vadd.f32 %v1239, %v1317
    %v1319 = vpop.f32.mrb[0].mxu0
    %1320 = vmatprep.mubr.f32.mxu0 0.0
    %1321 = vmatmul.mubr.f32.gmra.mrb[0].mxu0 %v1157
    %v1322 = vpop.f32.mrb[0].mxu0
    %v1323 = vadd.f32 %v1239, %v1322
    %v1324 = vpop.f32.mrb[0].mxu0
    %1325 = vmatprep.mubr.f32.mxu0 0.0
    %1326 = vmatmul.mubr.f32.gmra.mrb[0].mxu0 %v1158
    %v1327 = vpop.f32.mrb[0].mxu0
    %v1328 = vadd.f32 %v1239, %v1327
    %v1329 = vpop.f32.mrb[0].mxu0
    %1330 = vmatprep.mubr.f32.mxu0 0.0
    %1331 = vmatmul.mubr.f32.gmra.mrb[0].mxu0 %v1159
    %v1332 = vpop.f32.mrb[0].mxu0
    %v1333 = vadd.f32 %v1239, %v1332
    %v1334 = vpop.f32.mrb[0].mxu0
    %1335 = vmatprep.mubr.f32.mxu0 0.0
    %1336 = vmatmul.mubr.f32.gmra.mrb[0].mxu0 %v1160
    %v1337 = vpop.f32.mrb[0].mxu0
    %v1338 = vadd.f32 %v1239, %v1337
    %v1339 = vpop.f32.mrb[0].mxu0
    %1340 = vmatprep.mubr.f32.mxu0 0.0
    %1341 = vmatmul.mubr.f32.gmra.mrb[0].mxu0 %v1161
    %v1342 = vpop.f32.mrb[0].mxu0
    %v1343 = vadd.f32 %v1239, %v1342
    %v1344 = vpop.f32.mrb[0].mxu0
    %1345 = vmatprep.mubr.f32.mxu0 0.0
    %1346 = vmatmul.mubr.f32.gmra.mrb[0].mxu0 %v1162
    %v1347 = vpop.f32.mrb[0].mxu0
    %v1348 = vadd.f32 %v1239, %v1347
    %v1349 = vpop.f32.mrb[0].mxu0
    %1350 = vmatprep.mubr.f32.mxu0 0.0
    %1351 = vmatmul.mubr.f32.gmra.mrb[0].mxu0 %v1163
    %v1352 = vpop.f32.mrb[0].mxu0
    %v1353 = vadd.f32 %v1239, %v1352
    %v1354 = vpop.f32.mrb[0].mxu0
    %1355 = vmatprep.mubr.f32.mxu0 0.0
    %1356 = vmatmul.mubr.f32.gmra.mrb[0].mxu0 %v1164
    %v1357 = vpop.f32.mrb[0].mxu0
    %v1358 = vadd.f32 %v1239, %v1357
    %v1359 = vpop.f32.mrb[0].mxu0
    %1360 = vmatprep.mubr.f32.mxu0 0.0
    %1361 = vmatmul.mubr.f32.gmra.mrb[0].mxu0 %v1165
    %v1362 = vpop.f32.mrb[0].mxu0
    %v1363 = vadd.f32 %v1239, %v1362
    %v1364 = vpop.f32.mrb[0].mxu0
    %1365 = vmatprep.mubr.f32.mxu0 0.0
    %1366 = vmatmul.mubr.f32.gmra.mrb[0].mxu0 %v1166
    %v1367 = vpop.f32.mrb[0].mxu0
    %v1368 = vadd.f32 %v1239, %v1367
    %v1369 = vpop.f32.mrb[0].mxu0
    %1370 = vmatprep.mubr.f32.mxu0 0.0
    %1371 = vmatmul.mubr.f32.gmra.mrb[0].mxu0 %v1167
    %v1372 = vpop.f32.mrb[0].mxu0
    %v1373 = vadd.f32 %v1239, %v1372
    %v1374 = vpop.f32.mrb[0].mxu0
    %1375 = vmatprep.mubr.f32.mxu0 0.0
    %1376 = vmatmul.mubr.f32.gmra.mrb[0].mxu0 %v1168
    %v1377 = vpop.f32.mrb[0].mxu0
    %v1378 = vadd.f32 %v1239, %v1377
    %v1379 = vpop.f32.mrb[0].mxu0
    %1380 = vmatprep.mubr.f32.mxu0 0.0
    %1381 = vmatmul.mubr.f32.gmra.mrb[0].mxu0 %v1169
    %v1382 = vpop.f32.mrb[0].mxu0
    %v1383 = vadd.f32 %v1239, %v1382
    %v1384 = vpop.f32.mrb[0].mxu0
    %1385 = vmatprep.mubr.f32.mxu0 0.0
    %1386 = vmatmul.mubr.f32.gmra.mrb[0].mxu0 %v1170
    %v1387 = vpop.f32.mrb[0].mxu0
    %v1388 = vadd.f32 %v1239, %v1387
    %v1389 = vpop.f32.mrb[0].mxu0
    %1390 = vmatprep.mubr.f32.mxu0 0.0
    %1391 = vmatmul.mubr.f32.gmra.mrb[0].mxu0 %v1171
    %v1392 = vpop.f32.mrb[0].mxu0
    %v1393 = vadd.f32 %v1239, %v1392
    %v1394 = vpop.f32.mrb[0].mxu0
    %1395 = vmatprep.mubr.f32.mxu0 0.0
    %1396 = vmatmul.mubr.f32.gmra.mrb[0].mxu0 %v1172
    %v1397 = vpop.f32.mrb[0].mxu0
    %v1398 = vadd.f32 %v1239, %v1397
    %v1399 = vpop.f32.mrb[0].mxu0
    %1400 = vmatprep.mubr.f32.mxu0 0.0
    %1401 = vmatmul.mubr.f32.gmra.mrb[0].mxu0 %v1173
    %v1402 = vpop.f32.mrb[0].mxu0
    %v1403 = vadd.f32 %v1239, %v1402
    %v1404 = vpop.f32.mrb[0].mxu0
    %1405 = vmatprep.mubr.f32.mxu0 0.0
    %1406 = vmatmul.mubr.f32.gmra.mrb[0].mxu0 %v1174
    %v1407 = vpop.f32.mrb[0].mxu0
    %v1408 = vadd.f32 %v1239, %v1407
    %v1409 = vpop.f32.mrb[0].mxu0
    %1410 = vmatprep.mubr.f32.mxu0 0.0
    %1411 = vmatmul.mubr.f32.gmra.mrb[0].mxu0 %v1175
    %v1412 = vpop.f32.mrb[0].mxu0
    %v1413 = vadd.f32 %v1239, %v1412
    %v1414 = vpop.f32.mrb[0].mxu0
    %1415 = vmatprep.mubr.f32.mxu0 0.0
    %1416 = vmatmul.mubr.f32.gmra.mrb[0].mxu0 %v1176
    %v1417 = vpop.f32.mrb[0].mxu0
    %v1418 = vadd.f32 %v1239, %v1417
    %v1419 = vpop.f32.mrb[0].mxu0
    %1420 = vmatprep.mubr.f32.mxu0 0.0
    %1421 = vmatmul.mubr.f32.gmra.mrb[0].mxu0 %v1177
    %v1422 = vpop.f32.mrb[0].mxu0
    %v1423 = vadd.f32 %v1239, %v1422
    %v1424 = vpop.f32.mrb[0].mxu0
    %1425 = vmatprep.mubr.f32.mxu0 0.0
    %1426 = vmatmul.mubr.f32.gmra.mrb[0].mxu0 %v1178
    %v1427 = vpop.f32.mrb[0].mxu0
    %v1428 = vadd.f32 %v1239, %v1427
    %v1429 = vpop.f32.mrb[0].mxu0
    %1430 = vmatprep.mubr.f32.mxu0 0.0
    %1431 = vmatmul.mubr.f32.gmra.mrb[0].mxu0 %v1179
    %v1432 = vpop.f32.mrb[0].mxu0
    %v1433 = vadd.f32 %v1239, %v1432
    %v1434 = vpop.f32.mrb[0].mxu0
    %1435 = vmatprep.mubr.f32.mxu0 0.0
    %1436 = vmatmul.mubr.f32.gmra.mrb[0].mxu0 %v1180
    %v1437 = vpop.f32.mrb[0].mxu0
    %v1438 = vadd.f32 %v1239, %v1437
    %v1439 = vpop.f32.mrb[0].mxu0
    %1440 = vmatprep.mubr.f32.mxu0 0.0
    %1441 = vmatmul.mubr.f32.gmra.mrb[0].mxu0 %v1181
    %v1442 = vpop.f32.mrb[0].mxu0
    %v1443 = vadd.f32 %v1239, %v1442
    %v1444 = vpop.f32.mrb[0].mxu0
    %1445 = vmatprep.mubr.f32.mxu0 0.0
    %1446 = vmatmul.mubr.f32.gmra.mrb[0].mxu0 %v1182
    %v1447 = vpop.f32.mrb[0].mxu0
    %v1448 = vadd.f32 %v1239, %v1447
    %v1449 = vpop.f32.mrb[0].mxu0
    %1450 = vmatprep.mubr.f32.mxu0 0.0
    %1451 = vmatmul.mubr.f32.gmra.mrb[0].mxu0 %v1183
    %v1452 = vpop.f32.mrb[0].mxu0
    %v1453 = vadd.f32 %v1239, %v1452
    %v1454 = vpop.f32.mrb[0].mxu0
    %1455 = vmatprep.mubr.f32.mxu0 0.0
    %1456 = vmatmul.mubr.f32.gmra.mrb[0].mxu0 %v1184
    %v1457 = vpop.f32.mrb[0].mxu0
    %v1458 = vadd.f32 %v1239, %v1457
    %v1459 = vpop.f32.mrb[0].mxu0
    %1460 = vmatprep.mubr.f32.mxu0 0.0
    %1461 = vmatmul.mubr.f32.gmra.mrb[0].mxu0 %v1185
    %v1462 = vpop.f32.mrb[0].mxu0
    %v1463 = vadd.f32 %v1239, %v1462
    %v1464 = vpop.f32.mrb[0].mxu0
    %1465 = vmatprep.mubr.f32.mxu0 0.0
    %1466 = vmatmul.mubr.f32.gmra.mrb[0].mxu0 %v1186
    %v1467 = vpop.f32.mrb[0].mxu0
    %v1468 = vadd.f32 %v1239, %v1467
    %v1469 = vpop.f32.mrb[0].mxu0
    %1470 = vmatprep.mubr.f32.mxu0 0.0
    %1471 = vmatmul.mubr.f32.gmra.mrb[0].mxu0 %v1187
    %v1472 = vpop.f32.mrb[0].mxu0
    %v1473 = vadd.f32 %v1239, %v1472
    %v1474 = vpop.f32.mrb[0].mxu0
    %1475 = vmatprep.mubr.f32.mxu0 0.0
    %1476 = vmatmul.mubr.f32.gmra.mrb[0].mxu0 %v1188
    %v1477 = vpop.f32.mrb[0].mxu0
    %v1478 = vadd.f32 %v1239, %v1477
    %v1479 = vpop.f32.mrb[0].mxu0
    %1480 = vmatprep.mubr.f32.mxu0 0.0
    %1481 = vmatmul.mubr.f32.gmra.mrb[0].mxu0 %v1189
    %v1482 = vpop.f32.mrb[0].mxu0
    %v1483 = vadd.f32 %v1239, %v1482
    %v1484 = vpop.f32.mrb[0].mxu0
    %1485 = vmatprep.mubr.f32.mxu0 0.0
    %1486 = vmatmul.mubr.f32.gmra.mrb[0].mxu0 %v1190
    %v1487 = vpop.f32.mrb[0].mxu0
    %v1488 = vadd.f32 %v1239, %v1487
    %v1489 = vpop.f32.mrb[0].mxu0
    %1490 = vmatprep.mubr.f32.mxu0 0.0
    %1491 = vmatmul.mubr.f32.gmra.mrb[0].mxu0 %v1191
    %v1492 = vpop.f32.mrb[0].mxu0
    %v1493 = vadd.f32 %v1239, %v1492
    %v1494 = vpop.f32.mrb[0].mxu0
    %1495 = vmatprep.mubr.f32.mxu0 0.0
    %1496 = vmatmul.mubr.f32.gmra.mrb[0].mxu0 %v1192
    %v1497 = vpop.f32.mrb[0].mxu0
    %v1498 = vadd.f32 %v1239, %v1497
    %v1499 = vpop.f32.mrb[0].mxu0
    %1500 = vmatprep.mubr.f32.mxu0 0.0
    %1501 = vmatmul.mubr.f32.gmra.mrb[0].mxu0 %v1193
    %v1502 = vpop.f32.mrb[0].mxu0
    %v1503 = vadd.f32 %v1239, %v1502
    %v1504 = vpop.f32.mrb[0].mxu0
    %1505 = vmatprep.mubr.f32.mxu0 0.0
    %1506 = vmatmul.mubr.f32.gmra.mrb[0].mxu0 %v1194
    %v1507 = vpop.f32.mrb[0].mxu0
    %v1508 = vadd.f32 %v1239, %v1507
    %v1509 = vpop.f32.mrb[0].mxu0
    %1510 = vmatprep.mubr.f32.mxu0 0.0
    %1511 = vmatmul.mubr.f32.gmra.mrb[0].mxu0 %v1195
    %v1512 = vpop.f32.mrb[0].mxu0
    %v1513 = vadd.f32 %v1239, %v1512
    %v1514 = vpop.f32.mrb[0].mxu0
    %1515 = vmatprep.mubr.f32.mxu0 0.0
    %1516 = vmatmul.mubr.f32.gmra.mrb[0].mxu0 %v1196
    %v1517 = vpop.f32.mrb[0].mxu0
    %v1518 = vadd.f32 %v1239, %v1517
    %v1519 = vpop.f32.mrb[0].mxu0
    %1520 = vmatprep.mubr.f32.mxu0 0.0
    %1521 = vmatmul.mubr.f32.gmra.mrb[0].mxu0 %v1197
    %v1522 = vpop.f32.mrb[0].mxu0
    %v1523 = vadd.f32 %v1239, %v1522
    %v1524 = vpop.f32.mrb[0].mxu0
    %1525 = vmatprep.mubr.f32.mxu0 0.0
    %1526 = vmatmul.mubr.f32.gmra.mrb[0].mxu0 %v1198
    %v1527 = vpop.f32.mrb[0].mxu0
    %v1528 = vadd.f32 %v1239, %v1527
    %v1529 = vpop.f32.mrb[0].mxu0
    %1530 = vmatprep.mubr.f32.mxu0 0.0
    %1531 = vmatmul.mubr.f32.gmra.mrb[0].mxu0 %v1199
    %v1532 = vpop.f32.mrb[0].mxu0
    %v1533 = vadd.f32 %v1239, %v1532
    %v1534 = vpop.f32.mrb[0].mxu0
    %1535 = vmatprep.mubr.f32.mxu0 0.0
    %1536 = vmatmul.mubr.f32.gmra.mrb[0].mxu0 %v1200
    %v1537 = vpop.f32.mrb[0].mxu0
    %v1538 = vadd.f32 %v1239, %v1537
    %v1539 = vpop.f32.mrb[0].mxu0
    %1540 = vmatprep.mubr.f32.mxu0 0.0
    %1541 = vmatmul.mubr.f32.gmra.mrb[0].mxu0 %v1201
    %v1542 = vpop.f32.mrb[0].mxu0
    %v1543 = vadd.f32 %v1239, %v1542
    %v1544 = vpop.f32.mrb[0].mxu0
    %1545 = vmatprep.mubr.f32.mxu0 0.0
    %1546 = vmatmul.mubr.f32.gmra.mrb[0].mxu0 %v1202
    %v1547 = vpop.f32.mrb[0].mxu0
    %v1548 = vadd.f32 %v1239, %v1547
    %v1549 = vpop.f32.mrb[0].mxu0
    %1550 = vmatprep.mubr.f32.mxu0 0.0
    %1551 = vmatmul.mubr.f32.gmra.mrb[0].mxu0 %v1203
    %v1552 = vpop.f32.mrb[0].mxu0
    %v1553 = vadd.f32 %v1239, %v1552
    %v1554 = vpop.f32.mrb[0].mxu0
    %1555 = vmatprep.mubr.f32.mxu0 0.0
    %1556 = vmatmul.mubr.f32.gmra.mrb[0].mxu0 %v1204
    %v1557 = vpop.f32.mrb[0].mxu0
    %v1558 = vadd.f32 %v1239, %v1557
    %v1559 = vpop.f32.mrb[0].mxu0
    %1560 = vmatprep.mubr.f32.mxu0 0.0
    %1561 = vmatmul.mubr.f32.gmra.mrb[0].mxu0 %v1205
    %v1562 = vpop.f32.mrb[0].mxu0
    %v1563 = vadd.f32 %v1239, %v1562
    %v1564 = vpop.f32.mrb[0].mxu0
    %1565 = vmatprep.mubr.f32.mxu0 0.0
    %1566 = vmatmul.mubr.f32.gmra.mrb[0].mxu0 %v1206
    %v1567 = vpop.f32.mrb[0].mxu0
    %v1568 = vadd.f32 %v1239, %v1567
    %v1569 = vpop.f32.mrb[0].mxu0
    %1570 = vmatprep.mubr.f32.mxu0 0.0
    %1571 = vmatmul.mubr.f32.gmra.mrb[0].mxu0 %v1207
    %v1572 = vpop.f32.mrb[0].mxu0
    %v1573 = vadd.f32 %v1239, %v1572
    %v1574 = vpop.f32.mrb[0].mxu0
    %1575 = vmatprep.mubr.f32.mxu0 0.0
    %1576 = vmatmul.mubr.f32.gmra.mrb[0].mxu0 %v1208
    %v1577 = vpop.f32.mrb[0].mxu0
    %v1578 = vadd.f32 %v1239, %v1577
    %v1579 = vpop.f32.mrb[0].mxu0
    %1580 = vmatprep.mubr.f32.mxu0 0.0
    %1581 = vmatmul.mubr.f32.gmra.mrb[0].mxu0 %v1209
    %v1582 = vpop.f32.mrb[0].mxu0
    %v1583 = vadd.f32 %v1239, %v1582
    %v1584 = vpop.f32.mrb[0].mxu0
    %1585 = vmatprep.mubr.f32.mxu0 0.0
    %1586 = vmatmul.mubr.f32.gmra.mrb[0].mxu0 %v1210
    %v1587 = vpop.f32.mrb[0].mxu0
    %v1588 = vadd.f32 %v1239, %v1587
    %v1589 = vpop.f32.mrb[0].mxu0
    %1590 = vmatprep.mubr.f32.mxu0 0.0
    %1591 = vmatmul.mubr.f32.gmra.mrb[0].mxu0 %v1211
    %v1592 = vpop.f32.mrb[0].mxu0
    %v1593 = vadd.f32 %v1239, %v1592
    %v1594 = vpop.f32.mrb[0].mxu0
    %1595 = vmatprep.mubr.f32.mxu0 0.0
    %1596 = vmatmul.mubr.f32.gmra.mrb[0].mxu0 %v1212
    %v1597 = vpop.f32.mrb[0].mxu0
    %v1598 = vadd.f32 %v1239, %v1597
    %v1599 = vpop.f32.mrb[0].mxu0
    %1600 = vmatprep.mubr.f32.mxu0 0.0
    %1601 = vmatmul.mubr.f32.gmra.mrb[0].mxu0 %v1213
    %v1602 = vpop.f32.mrb[0].mxu0
    %v1603 = vadd.f32 %v1239, %v1602
    %v1604 = vpop.f32.mrb[0].mxu0
    %1605 = vmatprep.mubr.f32.mxu0 0.0
    %1606 = vmatmul.mubr.f32.gmra.mrb[0].mxu0 %v1214
    %v1607 = vpop.f32.mrb[0].mxu0
    %v1608 = vadd.f32 %v1239, %v1607
    %v1609 = vpop.f32.mrb[0].mxu0
    %1610 = vmatprep.mubr.f32.mxu0 0.0
    %1611 = vmatmul.mubr.f32.gmra.mrb[0].mxu0 %v1215
    %v1612 = vpop.f32.mrb[0].mxu0
    %v1613 = vadd.f32 %v1239, %v1612
    %v1614 = vpop.f32.mrb[0].mxu0
    %1615 = vmatprep.mubr.f32.mxu0 0.0
    %1616 = vmatmul.mubr.f32.gmra.mrb[0].mxu0 %v1216
    %v1617 = vpop.f32.mrb[0].mxu0
    %v1618 = vadd.f32 %v1239, %v1617
    %v1619 = vpop.f32.mrb[0].mxu0
    %1620 = vmatprep.mubr.f32.mxu0 0.0
    %1621 = vmatmul.mubr.f32.gmra.mrb[0].mxu0 %v1217
    %v1622 = vpop.f32.mrb[0].mxu0
    %v1623 = vadd.f32 %v1239, %v1622
    %v1624 = vpop.f32.mrb[0].mxu0
    %1625 = vdwg.mxu0
    %1626 = vst [vmem:[#allocation2] sm:$0xff] %v1308
    %1627 = vst [vmem:[#allocation2 + $0x8] sm:$0xff] %v1313
    %1628 = vst [vmem:[#allocation2 + $0x10] sm:$0xff] %v1318
    %1629 = vst [vmem:[#allocation2 + $0x18] sm:$0xff] %v1323
    %1630 = vst [vmem:[#allocation2 + $0x20] sm:$0xff] %v1328
    %1631 = vst [vmem:[#allocation2 + $0x28] sm:$0xff] %v1333
    %1632 = vst [vmem:[#allocation2 + $0x30] sm:$0xff] %v1338
    %1633 = vst [vmem:[#allocation2 + $0x38] sm:$0xff] %v1343
    %1634 = vst [vmem:[#allocation2 + $0x40] sm:$0xff] %v1348
    %1635 = vst [vmem:[#allocation2 + $0x48] sm:$0xff] %v1353
    %1636 = vst [vmem:[#allocation2 + $0x50] sm:$0xff] %v1358
    %1637 = vst [vmem:[#allocation2 + $0x58] sm:$0xff] %v1363
    %1638 = vst [vmem:[#allocation2 + $0x60] sm:$0xff] %v1368
    %1639 = vst [vmem:[#allocation2 + $0x68] sm:$0xff] %v1373
    %1640 = vst [vmem:[#allocation2 + $0x70] sm:$0xff] %v1378
    %1641 = vst [vmem:[#allocation2 + $0x78] sm:$0xff] %v1383
    %1642 = vst [vmem:[#allocation2 + $0x80] sm:$0xff] %v1388
    %1643 = vst [vmem:[#allocation2 + $0x88] sm:$0xff] %v1393
    %1644 = vst [vmem:[#allocation2 + $0x90] sm:$0xff] %v1398
    %1645 = vst [vmem:[#allocation2 + $0x98] sm:$0xff] %v1403
    %1646 = vst [vmem:[#allocation2 + $0xa0] sm:$0xff] %v1408
    %1647 = vst [vmem:[#allocation2 + $0xa8] sm:$0xff] %v1413
    %1648 = vst [vmem:[#allocation2 + $0xb0] sm:$0xff] %v1418
    %1649 = vst [vmem:[#allocation2 + $0xb8] sm:$0xff] %v1423
    %1650 = vst [vmem:[#allocation2 + $0xc0] sm:$0xff] %v1428
    %1651 = vst [vmem:[#allocation2 + $0xc8] sm:$0xff] %v1433
    %1652 = vst [vmem:[#allocation2 + $0xd0] sm:$0xff] %v1438
    %1653 = vst [vmem:[#allocation2 + $0xd8] sm:$0xff] %v1443
    %1654 = vst [vmem:[#allocation2 + $0xe0] sm:$0xff] %v1448
    %1655 = vst [vmem:[#allocation2 + $0xe8] sm:$0xff] %v1453
    %1656 = vst [vmem:[#allocation2 + $0xf0] sm:$0xff] %v1458
    %1657 = vst [vmem:[#allocation2 + $0xf8] sm:$0xff] %v1463
    %1658 = vst [vmem:[#allocation2 + $0x100] sm:$0xff] %v1468
    %1659 = vst [vmem:[#allocation2 + $0x108] sm:$0xff] %v1473
    %1660 = vst [vmem:[#allocation2 + $0x110] sm:$0xff] %v1478
    %1661 = vst [vmem:[#allocation2 + $0x118] sm:$0xff] %v1483
    %1662 = vst [vmem:[#allocation2 + $0x120] sm:$0xff] %v1488
    %1663 = vst [vmem:[#allocation2 + $0x128] sm:$0xff] %v1493
    %1664 = vst [vmem:[#allocation2 + $0x130] sm:$0xff] %v1498
    %1665 = vst [vmem:[#allocation2 + $0x138] sm:$0xff] %v1503
    %1666 = vst [vmem:[#allocation2 + $0x140] sm:$0xff] %v1508
    %1667 = vst [vmem:[#allocation2 + $0x148] sm:$0xff] %v1513
    %1668 = vst [vmem:[#allocation2 + $0x150] sm:$0xff] %v1518
    %1669 = vst [vmem:[#allocation2 + $0x158] sm:$0xff] %v1523
    %1670 = vst [vmem:[#allocation2 + $0x160] sm:$0xff] %v1528
    %1671 = vst [vmem:[#allocation2 + $0x168] sm:$0xff] %v1533
    %1672 = vst [vmem:[#allocation2 + $0x170] sm:$0xff] %v1538
    %1673 = vst [vmem:[#allocation2 + $0x178] sm:$0xff] %v1543
    %1674 = vst [vmem:[#allocation2 + $0x180] sm:$0xff] %v1548
    %1675 = vst [vmem:[#allocation2 + $0x188] sm:$0xff] %v1553
    %1676 = vst [vmem:[#allocation2 + $0x190] sm:$0xff] %v1558
    %1677 = vst [vmem:[#allocation2 + $0x198] sm:$0xff] %v1563
    %1678 = vst [vmem:[#allocation2 + $0x1a0] sm:$0xff] %v1568
    %1679 = vst [vmem:[#allocation2 + $0x1a8] sm:$0xff] %v1573
    %1680 = vst [vmem:[#allocation2 + $0x1b0] sm:$0xff] %v1578
    %1681 = vst [vmem:[#allocation2 + $0x1b8] sm:$0xff] %v1583
    %1682 = vst [vmem:[#allocation2 + $0x1c0] sm:$0xff] %v1588
    %1683 = vst [vmem:[#allocation2 + $0x1c8] sm:$0xff] %v1593
    %1684 = vst [vmem:[#allocation2 + $0x1d0] sm:$0xff] %v1598
    %1685 = vst [vmem:[#allocation2 + $0x1d8] sm:$0xff] %v1603
    %1686 = vst [vmem:[#allocation2 + $0x1e0] sm:$0xff] %v1608
    %1687 = vst [vmem:[#allocation2 + $0x1e8] sm:$0xff] %v1613
    %1688 = vst [vmem:[#allocation2 + $0x1f0] sm:$0xff] %v1618
    %1689 = vst [vmem:[#allocation2 + $0x1f8] sm:$0xff] %v1623
    // Predicated region
    $region30: #{tpu_custom_call.1} parent=1 // pred_check
      _
    $region31: #{tpu_custom_call.1} parent=1 // pred_check_branch
      %1691 = sbr.rel (0) target = $region33
    $region32: #{tpu_custom_call.1} parent=1 // pred_region
      %s1693 = ssub.s32 8192, 8192
      %1694 = vsyncadd [#allocation3], %s1693
      %s1695 = sshll.u32 [#allocation2], 4
      %s1696 = int_to_ptr.vmem [resolvable:$true] %s1695
      %1701 = dma.vmem_to_hbm [thread:$0]  %s1696, 8192, %s7, [#allocation3], 128, 128, 8
    $region33: #{tpu_custom_call.1} parent=1 // pred_fallthru
      _
    // Predicated region
    $region34: #{tpu_custom_call.1} parent=1 // pred_check
      _
    $region35: #{tpu_custom_call.1} parent=1 // pred_check_branch
      %1703 = sbr.rel (0) target = $region37
    $region36: #{tpu_custom_call.1} parent=1 // pred_region
      %1704 = dma.done [#allocation3], 8192
    $region37: #{tpu_custom_call.1} parent=1 // pred_fallthru
      _
    %1705 = vsyncpa [#allocation3], 1

// kernel: tpu_custom_call.1
$region0: #{tpu_custom_call.1}
  #allocation0 [shape = 'u32[]', space=smem, size = 0x4, offset = 0x4, fixed_abs, tag = 'smem constant byte address 0x4 - core index']
  #allocation1 [shape = 'u32[144,128]{1,0:T(1,128)}', space=vmem, size = 0x12000, scoped, tag = 'internal scratch']
  %s0 = inlined_call_operand.vmem [shape: f32[512,10], index: 0, kind: input, shape index: {}]
  %s1 = inlined_call_operand.vmem [shape: f32[10,128], index: 1, kind: input, shape index: {}]
  %s2 = inlined_call_operand.vmem [shape: f32[1,128], index: 2, kind: input, shape index: {}]
  %s3 = inlined_call_operand.vmem [shape: f32[128,128], index: 3, kind: input, shape index: {}]
  %s4 = inlined_call_operand.vmem [shape: f32[1,128], index: 4, kind: input, shape index: {}]
  %s5 = inlined_call_operand.vmem [shape: f32[128,128], index: 5, kind: input, shape index: {}]
  %s6 = inlined_call_operand.vmem [shape: f32[1,128], index: 6, kind: input, shape index: {}]
  %s7 = inlined_call_operand.hbm [shape: f32[512,128], index: 7, kind: output, shape index: {}]
  %s8 = sld [smem:[#allocation0]]
  $region38: #{tpu_custom_call.1} parent=0
    _
  %s10 = ssub.s32 1, %s8
  %s11 = scalar_select 0, %s10, %s8
  $region1: #{tpu_custom_call.1} parent=0
    #allocation2 [shape = 'u8[262144]{0}', space=vmem, size = 0x40000, scoped, tag = 'output window, operand 0, single buffered']
    #allocation3 [shape = 's32[1]{0}', space=sflag, size = 0x4, scoped, tag = 'scoped memory for tpu_custom_call.1']
    %12 = vsyncpa [#allocation3], 0
    // Predicated region
    $region2: #{tpu_custom_call.1} parent=1 // pred_check
      _
    $region3: #{tpu_custom_call.1} parent=1 // pred_check_branch
      %14 = sbr.rel (0) target = $region5
    $region4: #{tpu_custom_call.1} parent=1 // pred_region
      _
    $region5: #{tpu_custom_call.1} parent=1 // pred_fallthru
      _
    // Predicated region
    $region6: #{tpu_custom_call.1} parent=1 // pred_check
      _
    $region7: #{tpu_custom_call.1} parent=1 // pred_check_branch
      %16 = sbr.rel (0) target = $region9
    $region8: #{tpu_custom_call.1} parent=1 // pred_region
      _
    $region9: #{tpu_custom_call.1} parent=1 // pred_fallthru
      _
    // Predicated region
    $region10: #{tpu_custom_call.1} parent=1 // pred_check
      _
    $region11: #{tpu_custom_call.1} parent=1 // pred_check_branch
      %18 = sbr.rel (0) target = $region13
    $region12: #{tpu_custom_call.1} parent=1 // pred_region
      _
    $region13: #{tpu_custom_call.1} parent=1 // pred_fallthru
      _
    // Predicated region
    $region14: #{tpu_custom_call.1} parent=1 // pred_check
      _
    $region15: #{tpu_custom_call.1} parent=1 // pred_check_branch
      %20 = sbr.rel (0) target = $region17
    $region16: #{tpu_custom_call.1} parent=1 // pred_region
      _
    $region17: #{tpu_custom_call.1} parent=1 // pred_fallthru
      _
    // Predicated region
    $region18: #{tpu_custom_call.1} parent=1 // pred_check
      _
    $region19: #{tpu_custom_call.1} parent=1 // pred_check_branch
      %22 = sbr.rel (0) target = $region21
    $region20: #{tpu_custom_call.1} parent=1 // pred_region
      _
    $region21: #{tpu_custom_call.1} parent=1 // pred_fallthru
      _
    // Predicated region
    $region22: #{tpu_custom_call.1} parent=1 // pred_check
      _
    $region23: #{tpu_custom_call.1} parent=1 // pred_check_branch
      %24 = sbr.rel (0) target = $region25
    $region24: #{tpu_custom_call.1} parent=1 // pred_region
      _
    $region25: #{tpu_custom_call.1} parent=1 // pred_fallthru
      _
    // Predicated region
    $region26: #{tpu_custom_call.1} parent=1 // pred_check
      _
    $region27: #{tpu_custom_call.1} parent=1 // pred_check_branch
      %26 = sbr.rel (0) target = $region29
    $region28: #{tpu_custom_call.1} parent=1 // pred_region
      _
    $region29: #{tpu_custom_call.1} parent=1 // pred_fallthru
      _
    %v27 = vld [vmem:[%s0] sm:$0xff]
    %v28 = vld [vmem:[%s0 + $0x8] sm:$0xff]
    %v29 = vld [vmem:[%s0 + $0x10] sm:$0xff]
    %v30 = vld [vmem:[%s0 + $0x18] sm:$0xff]
    %v31 = vld [vmem:[%s0 + $0x20] sm:$0xff]
    %v32 = vld [vmem:[%s0 + $0x28] sm:$0xff]
    %v33 = vld [vmem:[%s0 + $0x30] sm:$0xff]
    %v34 = vld [vmem:[%s0 + $0x38] sm:$0xff]
    %v35 = vld [vmem:[%s0 + $0x40] sm:$0xff]
    %v36 = vld [vmem:[%s0 + $0x48] sm:$0xff]
    %v37 = vld [vmem:[%s0 + $0x50] sm:$0xff]
    %v38 = vld [vmem:[%s0 + $0x58] sm:$0xff]
    %v39 = vld [vmem:[%s0 + $0x60] sm:$0xff]
    %v40 = vld [vmem:[%s0 + $0x68] sm:$0xff]
    %v41 = vld [vmem:[%s0 + $0x70] sm:$0xff]
    %v42 = vld [vmem:[%s0 + $0x78] sm:$0xff]
    %v43 = vld [vmem:[%s0 + $0x80] sm:$0xff]
    %v44 = vld [vmem:[%s0 + $0x88] sm:$0xff]
    %v45 = vld [vmem:[%s0 + $0x90] sm:$0xff]
    %v46 = vld [vmem:[%s0 + $0x98] sm:$0xff]
    %v47 = vld [vmem:[%s0 + $0xa0] sm:$0xff]
    %v48 = vld [vmem:[%s0 + $0xa8] sm:$0xff]
    %v49 = vld [vmem:[%s0 + $0xb0] sm:$0xff]
    %v50 = vld [vmem:[%s0 + $0xb8] sm:$0xff]
    %v51 = vld [vmem:[%s0 + $0xc0] sm:$0xff]
    %v52 = vld [vmem:[%s0 + $0xc8] sm:$0xff]
    %v53 = vld [vmem:[%s0 + $0xd0] sm:$0xff]
    %v54 = vld [vmem:[%s0 + $0xd8] sm:$0xff]
    %v55 = vld [vmem:[%s0 + $0xe0] sm:$0xff]
    %v56 = vld [vmem:[%s0 + $0xe8] sm:$0xff]
    %v57 = vld [vmem:[%s0 + $0xf0] sm:$0xff]
    %v58 = vld [vmem:[%s0 + $0xf8] sm:$0xff]
    %v59 = vld [vmem:[%s0 + $0x100] sm:$0xff]
    %v60 = vld [vmem:[%s0 + $0x108] sm:$0xff]
    %v61 = vld [vmem:[%s0 + $0x110] sm:$0xff]
    %v62 = vld [vmem:[%s0 + $0x118] sm:$0xff]
    %v63 = vld [vmem:[%s0 + $0x120] sm:$0xff]
    %v64 = vld [vmem:[%s0 + $0x128] sm:$0xff]
    %v65 = vld [vmem:[%s0 + $0x130] sm:$0xff]
    %v66 = vld [vmem:[%s0 + $0x138] sm:$0xff]
    %v67 = vld [vmem:[%s0 + $0x140] sm:$0xff]
    %v68 = vld [vmem:[%s0 + $0x148] sm:$0xff]
    %v69 = vld [vmem:[%s0 + $0x150] sm:$0xff]
    %v70 = vld [vmem:[%s0 + $0x158] sm:$0xff]
    %v71 = vld [vmem:[%s0 + $0x160] sm:$0xff]
    %v72 = vld [vmem:[%s0 + $0x168] sm:$0xff]
    %v73 = vld [vmem:[%s0 + $0x170] sm:$0xff]
    %v74 = vld [vmem:[%s0 + $0x178] sm:$0xff]
    %v75 = vld [vmem:[%s0 + $0x180] sm:$0xff]
    %v76 = vld [vmem:[%s0 + $0x188] sm:$0xff]
    %v77 = vld [vmem:[%s0 + $0x190] sm:$0xff]
    %v78 = vld [vmem:[%s0 + $0x198] sm:$0xff]
    %v79 = vld [vmem:[%s0 + $0x1a0] sm:$0xff]
    %v80 = vld [vmem:[%s0 + $0x1a8] sm:$0xff]
    %v81 = vld [vmem:[%s0 + $0x1b0] sm:$0xff]
    %v82 = vld [vmem:[%s0 + $0x1b8] sm:$0xff]
    %v83 = vld [vmem:[%s0 + $0x1c0] sm:$0xff]
    %v84 = vld [vmem:[%s0 + $0x1c8] sm:$0xff]
    %v85 = vld [vmem:[%s0 + $0x1d0] sm:$0xff]
    %v86 = vld [vmem:[%s0 + $0x1d8] sm:$0xff]
    %v87 = vld [vmem:[%s0 + $0x1e0] sm:$0xff]
    %v88 = vld [vmem:[%s0 + $0x1e8] sm:$0xff]
    %v89 = vld [vmem:[%s0 + $0x1f0] sm:$0xff]
    %v90 = vld [vmem:[%s0 + $0x1f8] sm:$0xff]
    %v91 = vld [vmem:[%s1] sm:$0xff]
    %v92 = vld [vmem:[%s1 + $0x8] sm:$0x3]
    %v93 = vld [vmem:[%s2] sm:$0x1]
    %v95 = vlaneseq
    %v96 = vshrl.u32 %v95, 7
    %v97 = vsub.s32 0, %v96
    %v98 = vrot.slane %v93, %v97
    %vm100 = vcmask 80896
    %v102 = vsel %vm100, %v27, 0
    %v105 = vsel %vm100, %v28, 0
    %v108 = vsel %vm100, %v29, 0
    %v111 = vsel %vm100, %v30, 0
    %v114 = vsel %vm100, %v31, 0
    %v117 = vsel %vm100, %v32, 0
    %v120 = vsel %vm100, %v33, 0
    %v123 = vsel %vm100, %v34, 0
    %v126 = vsel %vm100, %v35, 0
    %v129 = vsel %vm100, %v36, 0
    %v132 = vsel %vm100, %v37, 0
    %v135 = vsel %vm100, %v38, 0
    %v138 = vsel %vm100, %v39, 0
    %v141 = vsel %vm100, %v40, 0
    %v144 = vsel %vm100, %v41, 0
    %v147 = vsel %vm100, %v42, 0
    %v150 = vsel %vm100, %v43, 0
    %v153 = vsel %vm100, %v44, 0
    %v156 = vsel %vm100, %v45, 0
    %v159 = vsel %vm100, %v46, 0
    %v162 = vsel %vm100, %v47, 0
    %v165 = vsel %vm100, %v48, 0
    %v168 = vsel %vm100, %v49, 0
    %v171 = vsel %vm100, %v50, 0
    %v174 = vsel %vm100, %v51, 0
    %v177 = vsel %vm100, %v52, 0
    %v180 = vsel %vm100, %v53, 0
    %v183 = vsel %vm100, %v54, 0
    %v186 = vsel %vm100, %v55, 0
    %v189 = vsel %vm100, %v56, 0
    %v192 = vsel %vm100, %v57, 0
    %v195 = vsel %vm100, %v58, 0
    %v198 = vsel %vm100, %v59, 0
    %v201 = vsel %vm100, %v60, 0
    %v204 = vsel %vm100, %v61, 0
    %v207 = vsel %vm100, %v62, 0
    %v210 = vsel %vm100, %v63, 0
    %v213 = vsel %vm100, %v64, 0
    %v216 = vsel %vm100, %v65, 0
    %v219 = vsel %vm100, %v66, 0
    %v222 = vsel %vm100, %v67, 0
    %v225 = vsel %vm100, %v68, 0
    %v228 = vsel %vm100, %v69, 0
    %v231 = vsel %vm100, %v70, 0
    %v234 = vsel %vm100, %v71, 0
    %v237 = vsel %vm100, %v72, 0
    %v240 = vsel %vm100, %v73, 0
    %v243 = vsel %vm100, %v74, 0
    %v246 = vsel %vm100, %v75, 0
    %v249 = vsel %vm100, %v76, 0
    %v252 = vsel %vm100, %v77, 0
    %v255 = vsel %vm100, %v78, 0
    %v258 = vsel %vm100, %v79, 0
    %v261 = vsel %vm100, %v80, 0
    %v264 = vsel %vm100, %v81, 0
    %v267 = vsel %vm100, %v82, 0
    %v270 = vsel %vm100, %v83, 0
    %v273 = vsel %vm100, %v84, 0
    %v276 = vsel %vm100, %v85, 0
    %v279 = vsel %vm100, %v86, 0
    %v282 = vsel %vm100, %v87, 0
    %v285 = vsel %vm100, %v88, 0
    %v288 = vsel %vm100, %v89, 0
    %v291 = vsel %vm100, %v90, 0
    %vm293 = vcmask 1041408
    %v295 = vsel %vm293, %v92, 0
    %297 = vmatprep.subr.mxu0 0.0
    %298 = vmatpush1.msra.mxu0 %v91
    %299 = vmatprep.subr.mxu0 0.0
    %300 = vmatpush1.msra.mxu0 %v295
    %301 = vmatprep.subr.mxu0 0.0
    %302 = vmatpush1.msra.mxu0 0.0
    %303 = vmatprep.subr.mxu0 0.0
    %304 = vmatpush1.msra.mxu0 0.0
    %305 = vmatprep.subr.mxu0 0.0
    %306 = vmatpush1.msra.mxu0 0.0
    %307 = vmatprep.subr.mxu0 0.0
    %308 = vmatpush1.msra.mxu0 0.0
    %309 = vmatprep.subr.mxu0 0.0
    %310 = vmatpush1.msra.mxu0 0.0
    %311 = vmatprep.subr.mxu0 0.0
    %312 = vmatpush1.msra.mxu0 0.0
    %313 = vmatprep.subr.mxu0 0.0
    %314 = vmatpush1.msra.mxu0 0.0
    %315 = vmatprep.subr.mxu0 0.0
    %316 = vmatpush1.msra.mxu0 0.0
    %317 = vmatprep.subr.mxu0 0.0
    %318 = vmatpush1.msra.mxu0 0.0
    %319 = vmatprep.subr.mxu0 0.0
    %320 = vmatpush1.msra.mxu0 0.0
    %321 = vmatprep.subr.mxu0 0.0
    %322 = vmatpush1.msra.mxu0 0.0
    %323 = vmatprep.subr.mxu0 0.0
    %324 = vmatpush1.msra.mxu0 0.0
    %325 = vmatprep.subr.mxu0 0.0
    %326 = vmatpush1.msra.mxu0 0.0
    %327 = vmatprep.subr.mxu0 0.0
    %328 = vmatpush1.msra.mxu0 0.0
    %329 = vmatprep.subr.mxu0 0.0
    %330 = vmatpush1.msra.mxu0 0.0
    %331 = vmatprep.subr.mxu0 0.0
    %332 = vmatpush1.msra.mxu0 0.0
    %333 = vmatprep.subr.mxu0 0.0
    %334 = vmatpush1.msra.mxu0 0.0
    %335 = vmatprep.subr.mxu0 0.0
    %336 = vmatpush1.msra.mxu0 0.0
    %337 = vmatprep.subr.mxu0 0.0
    %338 = vmatpush1.msra.mxu0 0.0
    %339 = vmatprep.subr.mxu0 0.0
    %340 = vmatpush1.msra.mxu0 0.0
    %341 = vmatprep.subr.mxu0 0.0
    %342 = vmatpush1.msra.mxu0 0.0
    %343 = vmatprep.subr.mxu0 0.0
    %344 = vmatpush1.msra.mxu0 0.0
    %345 = vmatprep.subr.mxu0 0.0
    %346 = vmatpush1.msra.mxu0 0.0
    %347 = vmatprep.subr.mxu0 0.0
    %348 = vmatpush1.msra.mxu0 0.0
    %349 = vmatprep.subr.mxu0 0.0
    %350 = vmatpush1.msra.mxu0 0.0
    %351 = vmatprep.subr.mxu0 0.0
    %352 = vmatpush1.msra.mxu0 0.0
    %353 = vmatprep.subr.mxu0 0.0
    %354 = vmatpush1.msra.mxu0 0.0
    %355 = vmatprep.subr.mxu0 0.0
    %356 = vmatpush1.msra.mxu0 0.0
    %357 = vmatprep.subr.mxu0 0.0
    %358 = vmatpush1.msra.mxu0 0.0
    %359 = vmatprep.subr.mxu0 0.0
    %360 = vmatpush1.msra.mxu0 0.0
    %361 = vmatprep.mubr.f32.mxu0 0.0
    %362 = vmatmul.mubr.f32.gmra.mrb[0].mxu0 %v102
    %v363 = vpop.f32.mrb[0].mxu0
    %v364 = vadd.f32 %v98, %v363
    %v365 = vpop.f32.mrb[0].mxu0
    %366 = vmatprep.mubr.f32.mxu0 0.0
    %367 = vmatmul.mubr.f32.gmra.mrb[0].mxu0 %v105
    %v368 = vpop.f32.mrb[0].mxu0
    %v369 = vadd.f32 %v98, %v368
    %v370 = vpop.f32.mrb[0].mxu0
    %371 = vmatprep.mubr.f32.mxu0 0.0
    %372 = vmatmul.mubr.f32.gmra.mrb[0].mxu0 %v108
    %v373 = vpop.f32.mrb[0].mxu0
    %v374 = vadd.f32 %v98, %v373
    %v375 = vpop.f32.mrb[0].mxu0
    %376 = vmatprep.mubr.f32.mxu0 0.0
    %377 = vmatmul.mubr.f32.gmra.mrb[0].mxu0 %v111
    %v378 = vpop.f32.mrb[0].mxu0
    %v379 = vadd.f32 %v98, %v378
    %v380 = vpop.f32.mrb[0].mxu0
    %381 = vmatprep.mubr.f32.mxu0 0.0
    %382 = vmatmul.mubr.f32.gmra.mrb[0].mxu0 %v114
    %v383 = vpop.f32.mrb[0].mxu0
    %v384 = vadd.f32 %v98, %v383
    %v385 = vpop.f32.mrb[0].mxu0
    %386 = vmatprep.mubr.f32.mxu0 0.0
    %387 = vmatmul.mubr.f32.gmra.mrb[0].mxu0 %v117
    %v388 = vpop.f32.mrb[0].mxu0
    %v389 = vadd.f32 %v98, %v388
    %v390 = vpop.f32.mrb[0].mxu0
    %391 = vmatprep.mubr.f32.mxu0 0.0
    %392 = vmatmul.mubr.f32.gmra.mrb[0].mxu0 %v120
    %v393 = vpop.f32.mrb[0].mxu0
    %v394 = vadd.f32 %v98, %v393
    %v395 = vpop.f32.mrb[0].mxu0
    %396 = vmatprep.mubr.f32.mxu0 0.0
    %397 = vmatmul.mubr.f32.gmra.mrb[0].mxu0 %v123
    %v398 = vpop.f32.mrb[0].mxu0
    %v399 = vadd.f32 %v98, %v398
    %v400 = vpop.f32.mrb[0].mxu0
    %401 = vmatprep.mubr.f32.mxu0 0.0
    %402 = vmatmul.mubr.f32.gmra.mrb[0].mxu0 %v126
    %v403 = vpop.f32.mrb[0].mxu0
    %v404 = vadd.f32 %v98, %v403
    %v405 = vpop.f32.mrb[0].mxu0
    %406 = vmatprep.mubr.f32.mxu0 0.0
    %407 = vmatmul.mubr.f32.gmra.mrb[0].mxu0 %v129
    %v408 = vpop.f32.mrb[0].mxu0
    %v409 = vadd.f32 %v98, %v408
    %v410 = vpop.f32.mrb[0].mxu0
    %411 = vmatprep.mubr.f32.mxu0 0.0
    %412 = vmatmul.mubr.f32.gmra.mrb[0].mxu0 %v132
    %v413 = vpop.f32.mrb[0].mxu0
    %v414 = vadd.f32 %v98, %v413
    %v415 = vpop.f32.mrb[0].mxu0
    %416 = vmatprep.mubr.f32.mxu0 0.0
    %417 = vmatmul.mubr.f32.gmra.mrb[0].mxu0 %v135
    %v418 = vpop.f32.mrb[0].mxu0
    %v419 = vadd.f32 %v98, %v418
    %v420 = vpop.f32.mrb[0].mxu0
    %421 = vmatprep.mubr.f32.mxu0 0.0
    %422 = vmatmul.mubr.f32.gmra.mrb[0].mxu0 %v138
    %v423 = vpop.f32.mrb[0].mxu0
    %v424 = vadd.f32 %v98, %v423
    %v425 = vpop.f32.mrb[0].mxu0
    %426 = vmatprep.mubr.f32.mxu0 0.0
    %427 = vmatmul.mubr.f32.gmra.mrb[0].mxu0 %v141
    %v428 = vpop.f32.mrb[0].mxu0
    %v429 = vadd.f32 %v98, %v428
    %v430 = vpop.f32.mrb[0].mxu0
    %431 = vmatprep.mubr.f32.mxu0 0.0
    %432 = vmatmul.mubr.f32.gmra.mrb[0].mxu0 %v144
    %v433 = vpop.f32.mrb[0].mxu0
    %v434 = vadd.f32 %v98, %v433
    %v435 = vpop.f32.mrb[0].mxu0
    %436 = vmatprep.mubr.f32.mxu0 0.0
    %437 = vmatmul.mubr.f32.gmra.mrb[0].mxu0 %v147
    %v438 = vpop.f32.mrb[0].mxu0
    %v439 = vadd.f32 %v98, %v438
    %v440 = vpop.f32.mrb[0].mxu0
    %441 = vmatprep.mubr.f32.mxu0 0.0
    %442 = vmatmul.mubr.f32.gmra.mrb[0].mxu0 %v150
    %v443 = vpop.f32.mrb[0].mxu0
    %v444 = vadd.f32 %v98, %v443
    %v445 = vpop.f32.mrb[0].mxu0
    %446 = vmatprep.mubr.f32.mxu0 0.0
    %447 = vmatmul.mubr.f32.gmra.mrb[0].mxu0 %v153
    %v448 = vpop.f32.mrb[0].mxu0
    %v449 = vadd.f32 %v98, %v448
    %v450 = vpop.f32.mrb[0].mxu0
    %451 = vmatprep.mubr.f32.mxu0 0.0
    %452 = vmatmul.mubr.f32.gmra.mrb[0].mxu0 %v156
    %v453 = vpop.f32.mrb[0].mxu0
    %v454 = vadd.f32 %v98, %v453
    %v455 = vpop.f32.mrb[0].mxu0
    %456 = vmatprep.mubr.f32.mxu0 0.0
    %457 = vmatmul.mubr.f32.gmra.mrb[0].mxu0 %v159
    %v458 = vpop.f32.mrb[0].mxu0
    %v459 = vadd.f32 %v98, %v458
    %v460 = vpop.f32.mrb[0].mxu0
    %461 = vmatprep.mubr.f32.mxu0 0.0
    %462 = vmatmul.mubr.f32.gmra.mrb[0].mxu0 %v162
    %v463 = vpop.f32.mrb[0].mxu0
    %v464 = vadd.f32 %v98, %v463
    %v465 = vpop.f32.mrb[0].mxu0
    %466 = vmatprep.mubr.f32.mxu0 0.0
    %467 = vmatmul.mubr.f32.gmra.mrb[0].mxu0 %v165
    %v468 = vpop.f32.mrb[0].mxu0
    %v469 = vadd.f32 %v98, %v468
    %v470 = vpop.f32.mrb[0].mxu0
    %471 = vmatprep.mubr.f32.mxu0 0.0
    %472 = vmatmul.mubr.f32.gmra.mrb[0].mxu0 %v168
    %v473 = vpop.f32.mrb[0].mxu0
    %v474 = vadd.f32 %v98, %v473
    %v475 = vpop.f32.mrb[0].mxu0
    %476 = vmatprep.mubr.f32.mxu0 0.0
    %477 = vmatmul.mubr.f32.gmra.mrb[0].mxu0 %v171
    %v478 = vpop.f32.mrb[0].mxu0
    %v479 = vadd.f32 %v98, %v478
    %v480 = vpop.f32.mrb[0].mxu0
    %481 = vmatprep.mubr.f32.mxu0 0.0
    %482 = vmatmul.mubr.f32.gmra.mrb[0].mxu0 %v174
    %v483 = vpop.f32.mrb[0].mxu0
    %v484 = vadd.f32 %v98, %v483
    %v485 = vpop.f32.mrb[0].mxu0
    %486 = vmatprep.mubr.f32.mxu0 0.0
    %487 = vmatmul.mubr.f32.gmra.mrb[0].mxu0 %v177
    %v488 = vpop.f32.mrb[0].mxu0
    %v489 = vadd.f32 %v98, %v488
    %v490 = vpop.f32.mrb[0].mxu0
    %491 = vmatprep.mubr.f32.mxu0 0.0
    %492 = vmatmul.mubr.f32.gmra.mrb[0].mxu0 %v180
    %v493 = vpop.f32.mrb[0].mxu0
    %v494 = vadd.f32 %v98, %v493
    %v495 = vpop.f32.mrb[0].mxu0
    %496 = vmatprep.mubr.f32.mxu0 0.0
    %497 = vmatmul.mubr.f32.gmra.mrb[0].mxu0 %v183
    %v498 = vpop.f32.mrb[0].mxu0
    %v499 = vadd.f32 %v98, %v498
    %v500 = vpop.f32.mrb[0].mxu0
    %501 = vmatprep.mubr.f32.mxu0 0.0
    %502 = vmatmul.mubr.f32.gmra.mrb[0].mxu0 %v186
    %v503 = vpop.f32.mrb[0].mxu0
    %v504 = vadd.f32 %v98, %v503
    %v505 = vpop.f32.mrb[0].mxu0
    %506 = vmatprep.mubr.f32.mxu0 0.0
    %507 = vmatmul.mubr.f32.gmra.mrb[0].mxu0 %v189
    %v508 = vpop.f32.mrb[0].mxu0
    %v509 = vadd.f32 %v98, %v508
    %v510 = vpop.f32.mrb[0].mxu0
    %511 = vmatprep.mubr.f32.mxu0 0.0
    %512 = vmatmul.mubr.f32.gmra.mrb[0].mxu0 %v192
    %v513 = vpop.f32.mrb[0].mxu0
    %v514 = vadd.f32 %v98, %v513
    %v515 = vpop.f32.mrb[0].mxu0
    %516 = vmatprep.mubr.f32.mxu0 0.0
    %517 = vmatmul.mubr.f32.gmra.mrb[0].mxu0 %v195
    %v518 = vpop.f32.mrb[0].mxu0
    %v519 = vadd.f32 %v98, %v518
    %v520 = vpop.f32.mrb[0].mxu0
    %521 = vmatprep.mubr.f32.mxu0 0.0
    %522 = vmatmul.mubr.f32.gmra.mrb[0].mxu0 %v198
    %v523 = vpop.f32.mrb[0].mxu0
    %v524 = vadd.f32 %v98, %v523
    %v525 = vpop.f32.mrb[0].mxu0
    %526 = vmatprep.mubr.f32.mxu0 0.0
    %527 = vmatmul.mubr.f32.gmra.mrb[0].mxu0 %v201
    %v528 = vpop.f32.mrb[0].mxu0
    %v529 = vadd.f32 %v98, %v528
    %v530 = vpop.f32.mrb[0].mxu0
    %531 = vmatprep.mubr.f32.mxu0 0.0
    %532 = vmatmul.mubr.f32.gmra.mrb[0].mxu0 %v204
    %v533 = vpop.f32.mrb[0].mxu0
    %v534 = vadd.f32 %v98, %v533
    %v535 = vpop.f32.mrb[0].mxu0
    %536 = vmatprep.mubr.f32.mxu0 0.0
    %537 = vmatmul.mubr.f32.gmra.mrb[0].mxu0 %v207
    %v538 = vpop.f32.mrb[0].mxu0
    %v539 = vadd.f32 %v98, %v538
    %v540 = vpop.f32.mrb[0].mxu0
    %541 = vmatprep.mubr.f32.mxu0 0.0
    %542 = vmatmul.mubr.f32.gmra.mrb[0].mxu0 %v210
    %v543 = vpop.f32.mrb[0].mxu0
    %v544 = vadd.f32 %v98, %v543
    %v545 = vpop.f32.mrb[0].mxu0
    %546 = vmatprep.mubr.f32.mxu0 0.0
    %547 = vmatmul.mubr.f32.gmra.mrb[0].mxu0 %v213
    %v548 = vpop.f32.mrb[0].mxu0
    %v549 = vadd.f32 %v98, %v548
    %v550 = vpop.f32.mrb[0].mxu0
    %551 = vmatprep.mubr.f32.mxu0 0.0
    %552 = vmatmul.mubr.f32.gmra.mrb[0].mxu0 %v216
    %v553 = vpop.f32.mrb[0].mxu0
    %v554 = vadd.f32 %v98, %v553
    %v555 = vpop.f32.mrb[0].mxu0
    %556 = vmatprep.mubr.f32.mxu0 0.0
    %557 = vmatmul.mubr.f32.gmra.mrb[0].mxu0 %v219
    %v558 = vpop.f32.mrb[0].mxu0
    %v559 = vadd.f32 %v98, %v558
    %v560 = vpop.f32.mrb[0].mxu0
    %561 = vmatprep.mubr.f32.mxu0 0.0
    %562 = vmatmul.mubr.f32.gmra.mrb[0].mxu0 %v222
    %v563 = vpop.f32.mrb[0].mxu0
    %v564 = vadd.f32 %v98, %v563
    %v565 = vpop.f32.mrb[0].mxu0
    %566 = vmatprep.mubr.f32.mxu0 0.0
    %567 = vmatmul.mubr.f32.gmra.mrb[0].mxu0 %v225
    %v568 = vpop.f32.mrb[0].mxu0
    %v569 = vadd.f32 %v98, %v568
    %v570 = vpop.f32.mrb[0].mxu0
    %571 = vmatprep.mubr.f32.mxu0 0.0
    %572 = vmatmul.mubr.f32.gmra.mrb[0].mxu0 %v228
    %v573 = vpop.f32.mrb[0].mxu0
    %v574 = vadd.f32 %v98, %v573
    %v575 = vpop.f32.mrb[0].mxu0
    %576 = vmatprep.mubr.f32.mxu0 0.0
    %577 = vmatmul.mubr.f32.gmra.mrb[0].mxu0 %v231
    %v578 = vpop.f32.mrb[0].mxu0
    %v579 = vadd.f32 %v98, %v578
    %v580 = vpop.f32.mrb[0].mxu0
    %581 = vmatprep.mubr.f32.mxu0 0.0
    %582 = vmatmul.mubr.f32.gmra.mrb[0].mxu0 %v234
    %v583 = vpop.f32.mrb[0].mxu0
    %v584 = vadd.f32 %v98, %v583
    %v585 = vpop.f32.mrb[0].mxu0
    %586 = vmatprep.mubr.f32.mxu0 0.0
    %587 = vmatmul.mubr.f32.gmra.mrb[0].mxu0 %v237
    %v588 = vpop.f32.mrb[0].mxu0
    %v589 = vadd.f32 %v98, %v588
    %v590 = vpop.f32.mrb[0].mxu0
    %591 = vmatprep.mubr.f32.mxu0 0.0
    %592 = vmatmul.mubr.f32.gmra.mrb[0].mxu0 %v240
    %v593 = vpop.f32.mrb[0].mxu0
    %v594 = vadd.f32 %v98, %v593
    %v595 = vpop.f32.mrb[0].mxu0
    %596 = vmatprep.mubr.f32.mxu0 0.0
    %597 = vmatmul.mubr.f32.gmra.mrb[0].mxu0 %v243
    %v598 = vpop.f32.mrb[0].mxu0
    %v599 = vadd.f32 %v98, %v598
    %v600 = vpop.f32.mrb[0].mxu0
    %601 = vmatprep.mubr.f32.mxu0 0.0
    %602 = vmatmul.mubr.f32.gmra.mrb[0].mxu0 %v246
    %v603 = vpop.f32.mrb[0].mxu0
    %v604 = vadd.f32 %v98, %v603
    %v605 = vpop.f32.mrb[0].mxu0
    %606 = vmatprep.mubr.f32.mxu0 0.0
    %607 = vmatmul.mubr.f32.gmra.mrb[0].mxu0 %v249
    %v608 = vpop.f32.mrb[0].mxu0
    %v609 = vadd.f32 %v98, %v608
    %v610 = vpop.f32.mrb[0].mxu0
    %611 = vmatprep.mubr.f32.mxu0 0.0
    %612 = vmatmul.mubr.f32.gmra.mrb[0].mxu0 %v252
    %v613 = vpop.f32.mrb[0].mxu0
    %v614 = vadd.f32 %v98, %v613
    %v615 = vpop.f32.mrb[0].mxu0
    %616 = vmatprep.mubr.f32.mxu0 0.0
    %617 = vmatmul.mubr.f32.gmra.mrb[0].mxu0 %v255
    %v618 = vpop.f32.mrb[0].mxu0
    %v619 = vadd.f32 %v98, %v618
    %v620 = vpop.f32.mrb[0].mxu0
    %621 = vmatprep.mubr.f32.mxu0 0.0
    %622 = vmatmul.mubr.f32.gmra.mrb[0].mxu0 %v258
    %v623 = vpop.f32.mrb[0].mxu0
    %v624 = vadd.f32 %v98, %v623
    %v625 = vpop.f32.mrb[0].mxu0
    %626 = vmatprep.mubr.f32.mxu0 0.0
    %627 = vmatmul.mubr.f32.gmra.mrb[0].mxu0 %v261
    %v628 = vpop.f32.mrb[0].mxu0
    %v629 = vadd.f32 %v98, %v628
    %v630 = vpop.f32.mrb[0].mxu0
    %631 = vmatprep.mubr.f32.mxu0 0.0
    %632 = vmatmul.mubr.f32.gmra.mrb[0].mxu0 %v264
    %v633 = vpop.f32.mrb[0].mxu0
    %v634 = vadd.f32 %v98, %v633
    %v635 = vpop.f32.mrb[0].mxu0
    %636 = vmatprep.mubr.f32.mxu0 0.0
    %637 = vmatmul.mubr.f32.gmra.mrb[0].mxu0 %v267
    %v638 = vpop.f32.mrb[0].mxu0
    %v639 = vadd.f32 %v98, %v638
    %v640 = vpop.f32.mrb[0].mxu0
    %641 = vmatprep.mubr.f32.mxu0 0.0
    %642 = vmatmul.mubr.f32.gmra.mrb[0].mxu0 %v270
    %v643 = vpop.f32.mrb[0].mxu0
    %v644 = vadd.f32 %v98, %v643
    %v645 = vpop.f32.mrb[0].mxu0
    %646 = vmatprep.mubr.f32.mxu0 0.0
    %647 = vmatmul.mubr.f32.gmra.mrb[0].mxu0 %v273
    %v648 = vpop.f32.mrb[0].mxu0
    %v649 = vadd.f32 %v98, %v648
    %v650 = vpop.f32.mrb[0].mxu0
    %651 = vmatprep.mubr.f32.mxu0 0.0
    %652 = vmatmul.mubr.f32.gmra.mrb[0].mxu0 %v276
    %v653 = vpop.f32.mrb[0].mxu0
    %v654 = vadd.f32 %v98, %v653
    %v655 = vpop.f32.mrb[0].mxu0
    %656 = vmatprep.mubr.f32.mxu0 0.0
    %657 = vmatmul.mubr.f32.gmra.mrb[0].mxu0 %v279
    %v658 = vpop.f32.mrb[0].mxu0
    %v659 = vadd.f32 %v98, %v658
    %v660 = vpop.f32.mrb[0].mxu0
    %661 = vmatprep.mubr.f32.mxu0 0.0
    %662 = vmatmul.mubr.f32.gmra.mrb[0].mxu0 %v282
    %v663 = vpop.f32.mrb[0].mxu0
    %v664 = vadd.f32 %v98, %v663
    %v665 = vpop.f32.mrb[0].mxu0
    %666 = vmatprep.mubr.f32.mxu0 0.0
    %667 = vmatmul.mubr.f32.gmra.mrb[0].mxu0 %v285
    %v668 = vpop.f32.mrb[0].mxu0
    %v669 = vadd.f32 %v98, %v668
    %v670 = vpop.f32.mrb[0].mxu0
    %671 = vmatprep.mubr.f32.mxu0 0.0
    %672 = vmatmul.mubr.f32.gmra.mrb[0].mxu0 %v288
    %v673 = vpop.f32.mrb[0].mxu0
    %v674 = vadd.f32 %v98, %v673
    %v675 = vpop.f32.mrb[0].mxu0
    %676 = vmatprep.mubr.f32.mxu0 0.0
    %677 = vmatmul.mubr.f32.gmra.mrb[0].mxu0 %v291
    %v678 = vpop.f32.mrb[0].mxu0
    %v679 = vadd.f32 %v98, %v678
    %v680 = vpop.f32.mrb[0].mxu0
    %681 = vdwg.mxu0
    %v682 = vmax.f32 %v364, 0.0
    %v683 = vmax.f32 %v369, 0.0
    %v684 = vmax.f32 %v374, 0.0
    %v685 = vmax.f32 %v379, 0.0
    %v686 = vmax.f32 %v384, 0.0
    %v687 = vmax.f32 %v389, 0.0
    %v688 = vmax.f32 %v394, 0.0
    %v689 = vmax.f32 %v399, 0.0
    %v690 = vmax.f32 %v404, 0.0
    %v691 = vmax.f32 %v409, 0.0
    %v692 = vmax.f32 %v414, 0.0
    %v693 = vmax.f32 %v419, 0.0
    %v694 = vmax.f32 %v424, 0.0
    %v695 = vmax.f32 %v429, 0.0
    %v696 = vmax.f32 %v434, 0.0
    %v697 = vmax.f32 %v439, 0.0
    %v698 = vmax.f32 %v444, 0.0
    %v699 = vmax.f32 %v449, 0.0
    %v700 = vmax.f32 %v454, 0.0
    %v701 = vmax.f32 %v459, 0.0
    %v702 = vmax.f32 %v464, 0.0
    %v703 = vmax.f32 %v469, 0.0
    %v704 = vmax.f32 %v474, 0.0
    %v705 = vmax.f32 %v479, 0.0
    %v706 = vmax.f32 %v484, 0.0
    %v707 = vmax.f32 %v489, 0.0
    %v708 = vmax.f32 %v494, 0.0
    %v709 = vmax.f32 %v499, 0.0
    %v710 = vmax.f32 %v504, 0.0
    %v711 = vmax.f32 %v509, 0.0
    %v712 = vmax.f32 %v514, 0.0
    %v713 = vmax.f32 %v519, 0.0
    %v714 = vmax.f32 %v524, 0.0
    %v715 = vmax.f32 %v529, 0.0
    %v716 = vmax.f32 %v534, 0.0
    %v717 = vmax.f32 %v539, 0.0
    %v718 = vmax.f32 %v544, 0.0
    %v719 = vmax.f32 %v549, 0.0
    %v720 = vmax.f32 %v554, 0.0
    %v721 = vmax.f32 %v559, 0.0
    %v722 = vmax.f32 %v564, 0.0
    %v723 = vmax.f32 %v569, 0.0
    %v724 = vmax.f32 %v574, 0.0
    %v725 = vmax.f32 %v579, 0.0
    %v726 = vmax.f32 %v584, 0.0
    %v727 = vmax.f32 %v589, 0.0
    %v728 = vmax.f32 %v594, 0.0
    %v729 = vmax.f32 %v599, 0.0
    %v730 = vmax.f32 %v604, 0.0
    %v731 = vmax.f32 %v609, 0.0
    %v732 = vmax.f32 %v614, 0.0
    %v733 = vmax.f32 %v619, 0.0
    %v734 = vmax.f32 %v624, 0.0
    %v735 = vmax.f32 %v629, 0.0
    %v736 = vmax.f32 %v634, 0.0
    %v737 = vmax.f32 %v639, 0.0
    %v738 = vmax.f32 %v644, 0.0
    %v739 = vmax.f32 %v649, 0.0
    %v740 = vmax.f32 %v654, 0.0
    %v741 = vmax.f32 %v659, 0.0
    %v742 = vmax.f32 %v664, 0.0
    %v743 = vmax.f32 %v669, 0.0
    %v744 = vmax.f32 %v674, 0.0
    %v745 = vmax.f32 %v679, 0.0
    %v746 = vld [vmem:[%s3] sm:$0xff]
    %v747 = vld [vmem:[%s3 + $0x8] sm:$0xff]
    %v748 = vld [vmem:[%s3 + $0x10] sm:$0xff]
    %v749 = vld [vmem:[%s3 + $0x18] sm:$0xff]
    %v750 = vld [vmem:[%s3 + $0x20] sm:$0xff]
    %v751 = vld [vmem:[%s3 + $0x28] sm:$0xff]
    %v752 = vld [vmem:[%s3 + $0x30] sm:$0xff]
    %v753 = vld [vmem:[%s3 + $0x38] sm:$0xff]
    %v754 = vld [vmem:[%s3 + $0x40] sm:$0xff]
    %v755 = vld [vmem:[%s3 + $0x48] sm:$0xff]
    %v756 = vld [vmem:[%s3 + $0x50] sm:$0xff]
    %v757 = vld [vmem:[%s3 + $0x58] sm:$0xff]
    %v758 = vld [vmem:[%s3 + $0x60] sm:$0xff]
    %v759 = vld [vmem:[%s3 + $0x68] sm:$0xff]
    %v760 = vld [vmem:[%s3 + $0x70] sm:$0xff]
    %v761 = vld [vmem:[%s3 + $0x78] sm:$0xff]
    %v762 = vld [vmem:[%s4] sm:$0x1]
    %v764 = vlaneseq
    %v765 = vshrl.u32 %v764, 7
    %v766 = vsub.s32 0, %v765
    %v767 = vrot.slane %v762, %v766
    %769 = vmatprep.subr.mxu0 0.0
    %770 = vmatpush1.msra.mxu0 %v746
    %771 = vmatprep.subr.mxu0 0.0
    %772 = vmatpush1.msra.mxu0 %v747
    %773 = vmatprep.subr.mxu0 0.0
    %774 = vmatpush1.msra.mxu0 %v748
    %775 = vmatprep.subr.mxu0 0.0
    %776 = vmatpush1.msra.mxu0 %v749
    %777 = vmatprep.subr.mxu0 0.0
    %778 = vmatpush1.msra.mxu0 %v750
    %779 = vmatprep.subr.mxu0 0.0
    %780 = vmatpush1.msra.mxu0 %v751
    %781 = vmatprep.subr.mxu0 0.0
    %782 = vmatpush1.msra.mxu0 %v752
    %783 = vmatprep.subr.mxu0 0.0
    %784 = vmatpush1.msra.mxu0 %v753
    %785 = vmatprep.subr.mxu0 0.0
    %786 = vmatpush1.msra.mxu0 %v754
    %787 = vmatprep.subr.mxu0 0.0
    %788 = vmatpush1.msra.mxu0 %v755
    %789 = vmatprep.subr.mxu0 0.0
    %790 = vmatpush1.msra.mxu0 %v756
    %791 = vmatprep.subr.mxu0 0.0
    %792 = vmatpush1.msra.mxu0 %v757
    %793 = vmatprep.subr.mxu0 0.0
    %794 = vmatpush1.msra.mxu0 %v758
    %795 = vmatprep.subr.mxu0 0.0
    %796 = vmatpush1.msra.mxu0 %v759
    %797 = vmatprep.subr.mxu0 0.0
    %798 = vmatpush1.msra.mxu0 %v760
    %799 = vmatprep.subr.mxu0 0.0
    %800 = vmatpush1.msra.mxu0 %v761
    %801 = vmatprep.subr.mxu0 0.0
    %802 = vmatpush1.msra.mxu0 0.0
    %803 = vmatprep.subr.mxu0 0.0
    %804 = vmatpush1.msra.mxu0 0.0
    %805 = vmatprep.subr.mxu0 0.0
    %806 = vmatpush1.msra.mxu0 0.0
    %807 = vmatprep.subr.mxu0 0.0
    %808 = vmatpush1.msra.mxu0 0.0
    %809 = vmatprep.subr.mxu0 0.0
    %810 = vmatpush1.msra.mxu0 0.0
    %811 = vmatprep.subr.mxu0 0.0
    %812 = vmatpush1.msra.mxu0 0.0
    %813 = vmatprep.subr.mxu0 0.0
    %814 = vmatpush1.msra.mxu0 0.0
    %815 = vmatprep.subr.mxu0 0.0
    %816 = vmatpush1.msra.mxu0 0.0
    %817 = vmatprep.subr.mxu0 0.0
    %818 = vmatpush1.msra.mxu0 0.0
    %819 = vmatprep.subr.mxu0 0.0
    %820 = vmatpush1.msra.mxu0 0.0
    %821 = vmatprep.subr.mxu0 0.0
    %822 = vmatpush1.msra.mxu0 0.0
    %823 = vmatprep.subr.mxu0 0.0
    %824 = vmatpush1.msra.mxu0 0.0
    %825 = vmatprep.subr.mxu0 0.0
    %826 = vmatpush1.msra.mxu0 0.0
    %827 = vmatprep.subr.mxu0 0.0
    %828 = vmatpush1.msra.mxu0 0.0
    %829 = vmatprep.subr.mxu0 0.0
    %830 = vmatpush1.msra.mxu0 0.0
    %831 = vmatprep.subr.mxu0 0.0
    %832 = vmatpush1.msra.mxu0 0.0
    %833 = vmatprep.mubr.f32.mxu0 0.0
    %834 = vmatmul.mubr.f32.gmra.mrb[0].mxu0 %v682
    %v835 = vpop.f32.mrb[0].mxu0
    %v836 = vadd.f32 %v767, %v835
    %v837 = vpop.f32.mrb[0].mxu0
    %838 = vmatprep.mubr.f32.mxu0 0.0
    %839 = vmatmul.mubr.f32.gmra.mrb[0].mxu0 %v683
    %v840 = vpop.f32.mrb[0].mxu0
    %v841 = vadd.f32 %v767, %v840
    %v842 = vpop.f32.mrb[0].mxu0
    %843 = vmatprep.mubr.f32.mxu0 0.0
    %844 = vmatmul.mubr.f32.gmra.mrb[0].mxu0 %v684
    %v845 = vpop.f32.mrb[0].mxu0
    %v846 = vadd.f32 %v767, %v845
    %v847 = vpop.f32.mrb[0].mxu0
    %848 = vmatprep.mubr.f32.mxu0 0.0
    %849 = vmatmul.mubr.f32.gmra.mrb[0].mxu0 %v685
    %v850 = vpop.f32.mrb[0].mxu0
    %v851 = vadd.f32 %v767, %v850
    %v852 = vpop.f32.mrb[0].mxu0
    %853 = vmatprep.mubr.f32.mxu0 0.0
    %854 = vmatmul.mubr.f32.gmra.mrb[0].mxu0 %v686
    %v855 = vpop.f32.mrb[0].mxu0
    %v856 = vadd.f32 %v767, %v855
    %v857 = vpop.f32.mrb[0].mxu0
    %858 = vmatprep.mubr.f32.mxu0 0.0
    %859 = vmatmul.mubr.f32.gmra.mrb[0].mxu0 %v687
    %v860 = vpop.f32.mrb[0].mxu0
    %v861 = vadd.f32 %v767, %v860
    %v862 = vpop.f32.mrb[0].mxu0
    %863 = vmatprep.mubr.f32.mxu0 0.0
    %864 = vmatmul.mubr.f32.gmra.mrb[0].mxu0 %v688
    %v865 = vpop.f32.mrb[0].mxu0
    %v866 = vadd.f32 %v767, %v865
    %v867 = vpop.f32.mrb[0].mxu0
    %868 = vmatprep.mubr.f32.mxu0 0.0
    %869 = vmatmul.mubr.f32.gmra.mrb[0].mxu0 %v689
    %v870 = vpop.f32.mrb[0].mxu0
    %v871 = vadd.f32 %v767, %v870
    %v872 = vpop.f32.mrb[0].mxu0
    %873 = vmatprep.mubr.f32.mxu0 0.0
    %874 = vmatmul.mubr.f32.gmra.mrb[0].mxu0 %v690
    %v875 = vpop.f32.mrb[0].mxu0
    %v876 = vadd.f32 %v767, %v875
    %v877 = vpop.f32.mrb[0].mxu0
    %878 = vmatprep.mubr.f32.mxu0 0.0
    %879 = vmatmul.mubr.f32.gmra.mrb[0].mxu0 %v691
    %v880 = vpop.f32.mrb[0].mxu0
    %v881 = vadd.f32 %v767, %v880
    %v882 = vpop.f32.mrb[0].mxu0
    %883 = vmatprep.mubr.f32.mxu0 0.0
    %884 = vmatmul.mubr.f32.gmra.mrb[0].mxu0 %v692
    %v885 = vpop.f32.mrb[0].mxu0
    %v886 = vadd.f32 %v767, %v885
    %v887 = vpop.f32.mrb[0].mxu0
    %888 = vmatprep.mubr.f32.mxu0 0.0
    %889 = vmatmul.mubr.f32.gmra.mrb[0].mxu0 %v693
    %v890 = vpop.f32.mrb[0].mxu0
    %v891 = vadd.f32 %v767, %v890
    %v892 = vpop.f32.mrb[0].mxu0
    %893 = vmatprep.mubr.f32.mxu0 0.0
    %894 = vmatmul.mubr.f32.gmra.mrb[0].mxu0 %v694
    %v895 = vpop.f32.mrb[0].mxu0
    %v896 = vadd.f32 %v767, %v895
    %v897 = vpop.f32.mrb[0].mxu0
    %898 = vmatprep.mubr.f32.mxu0 0.0
    %899 = vmatmul.mubr.f32.gmra.mrb[0].mxu0 %v695
    %v900 = vpop.f32.mrb[0].mxu0
    %v901 = vadd.f32 %v767, %v900
    %v902 = vpop.f32.mrb[0].mxu0
    %903 = vmatprep.mubr.f32.mxu0 0.0
    %904 = vmatmul.mubr.f32.gmra.mrb[0].mxu0 %v696
    %v905 = vpop.f32.mrb[0].mxu0
    %v906 = vadd.f32 %v767, %v905
    %v907 = vpop.f32.mrb[0].mxu0
    %908 = vmatprep.mubr.f32.mxu0 0.0
    %909 = vmatmul.mubr.f32.gmra.mrb[0].mxu0 %v697
    %v910 = vpop.f32.mrb[0].mxu0
    %v911 = vadd.f32 %v767, %v910
    %v912 = vpop.f32.mrb[0].mxu0
    %913 = vmatprep.mubr.f32.mxu0 0.0
    %914 = vmatmul.mubr.f32.gmra.mrb[0].mxu0 %v698
    %v915 = vpop.f32.mrb[0].mxu0
    %v916 = vadd.f32 %v767, %v915
    %v917 = vpop.f32.mrb[0].mxu0
    %918 = vmatprep.mubr.f32.mxu0 0.0
    %919 = vmatmul.mubr.f32.gmra.mrb[0].mxu0 %v699
    %v920 = vpop.f32.mrb[0].mxu0
    %v921 = vadd.f32 %v767, %v920
    %v922 = vpop.f32.mrb[0].mxu0
    %923 = vmatprep.mubr.f32.mxu0 0.0
    %924 = vmatmul.mubr.f32.gmra.mrb[0].mxu0 %v700
    %v925 = vpop.f32.mrb[0].mxu0
    %v926 = vadd.f32 %v767, %v925
    %v927 = vpop.f32.mrb[0].mxu0
    %928 = vmatprep.mubr.f32.mxu0 0.0
    %929 = vmatmul.mubr.f32.gmra.mrb[0].mxu0 %v701
    %v930 = vpop.f32.mrb[0].mxu0
    %v931 = vadd.f32 %v767, %v930
    %v932 = vpop.f32.mrb[0].mxu0
    %933 = vmatprep.mubr.f32.mxu0 0.0
    %934 = vmatmul.mubr.f32.gmra.mrb[0].mxu0 %v702
    %v935 = vpop.f32.mrb[0].mxu0
    %v936 = vadd.f32 %v767, %v935
    %v937 = vpop.f32.mrb[0].mxu0
    %938 = vmatprep.mubr.f32.mxu0 0.0
    %939 = vmatmul.mubr.f32.gmra.mrb[0].mxu0 %v703
    %v940 = vpop.f32.mrb[0].mxu0
    %v941 = vadd.f32 %v767, %v940
    %v942 = vpop.f32.mrb[0].mxu0
    %943 = vmatprep.mubr.f32.mxu0 0.0
    %944 = vmatmul.mubr.f32.gmra.mrb[0].mxu0 %v704
    %v945 = vpop.f32.mrb[0].mxu0
    %v946 = vadd.f32 %v767, %v945
    %v947 = vpop.f32.mrb[0].mxu0
    %948 = vmatprep.mubr.f32.mxu0 0.0
    %949 = vmatmul.mubr.f32.gmra.mrb[0].mxu0 %v705
    %v950 = vpop.f32.mrb[0].mxu0
    %v951 = vadd.f32 %v767, %v950
    %v952 = vpop.f32.mrb[0].mxu0
    %953 = vmatprep.mubr.f32.mxu0 0.0
    %954 = vmatmul.mubr.f32.gmra.mrb[0].mxu0 %v706
    %v955 = vpop.f32.mrb[0].mxu0
    %v956 = vadd.f32 %v767, %v955
    %v957 = vpop.f32.mrb[0].mxu0
    %958 = vmatprep.mubr.f32.mxu0 0.0
    %959 = vmatmul.mubr.f32.gmra.mrb[0].mxu0 %v707
    %v960 = vpop.f32.mrb[0].mxu0
    %v961 = vadd.f32 %v767, %v960
    %v962 = vpop.f32.mrb[0].mxu0
    %963 = vmatprep.mubr.f32.mxu0 0.0
    %964 = vmatmul.mubr.f32.gmra.mrb[0].mxu0 %v708
    %v965 = vpop.f32.mrb[0].mxu0
    %v966 = vadd.f32 %v767, %v965
    %v967 = vpop.f32.mrb[0].mxu0
    %968 = vmatprep.mubr.f32.mxu0 0.0
    %969 = vmatmul.mubr.f32.gmra.mrb[0].mxu0 %v709
    %v970 = vpop.f32.mrb[0].mxu0
    %v971 = vadd.f32 %v767, %v970
    %v972 = vpop.f32.mrb[0].mxu0
    %973 = vmatprep.mubr.f32.mxu0 0.0
    %974 = vmatmul.mubr.f32.gmra.mrb[0].mxu0 %v710
    %v975 = vpop.f32.mrb[0].mxu0
    %v976 = vadd.f32 %v767, %v975
    %v977 = vpop.f32.mrb[0].mxu0
    %978 = vmatprep.mubr.f32.mxu0 0.0
    %979 = vmatmul.mubr.f32.gmra.mrb[0].mxu0 %v711
    %v980 = vpop.f32.mrb[0].mxu0
    %v981 = vadd.f32 %v767, %v980
    %v982 = vpop.f32.mrb[0].mxu0
    %983 = vmatprep.mubr.f32.mxu0 0.0
    %984 = vmatmul.mubr.f32.gmra.mrb[0].mxu0 %v712
    %v985 = vpop.f32.mrb[0].mxu0
    %v986 = vadd.f32 %v767, %v985
    %v987 = vpop.f32.mrb[0].mxu0
    %988 = vmatprep.mubr.f32.mxu0 0.0
    %989 = vmatmul.mubr.f32.gmra.mrb[0].mxu0 %v713
    %v990 = vpop.f32.mrb[0].mxu0
    %v991 = vadd.f32 %v767, %v990
    %v992 = vpop.f32.mrb[0].mxu0
    %993 = vmatprep.mubr.f32.mxu0 0.0
    %994 = vmatmul.mubr.f32.gmra.mrb[0].mxu0 %v714
    %v995 = vpop.f32.mrb[0].mxu0
    %v996 = vadd.f32 %v767, %v995
    %v997 = vpop.f32.mrb[0].mxu0
    %998 = vmatprep.mubr.f32.mxu0 0.0
    %999 = vmatmul.mubr.f32.gmra.mrb[0].mxu0 %v715
    %v1000 = vpop.f32.mrb[0].mxu0
    %v1001 = vadd.f32 %v767, %v1000
    %v1002 = vpop.f32.mrb[0].mxu0
    %1003 = vmatprep.mubr.f32.mxu0 0.0
    %1004 = vmatmul.mubr.f32.gmra.mrb[0].mxu0 %v716
    %v1005 = vpop.f32.mrb[0].mxu0
    %v1006 = vadd.f32 %v767, %v1005
    %v1007 = vpop.f32.mrb[0].mxu0
    %1008 = vmatprep.mubr.f32.mxu0 0.0
    %1009 = vmatmul.mubr.f32.gmra.mrb[0].mxu0 %v717
    %v1010 = vpop.f32.mrb[0].mxu0
    %v1011 = vadd.f32 %v767, %v1010
    %v1012 = vpop.f32.mrb[0].mxu0
    %1013 = vmatprep.mubr.f32.mxu0 0.0
    %1014 = vmatmul.mubr.f32.gmra.mrb[0].mxu0 %v718
    %v1015 = vpop.f32.mrb[0].mxu0
    %v1016 = vadd.f32 %v767, %v1015
    %v1017 = vpop.f32.mrb[0].mxu0
    %1018 = vmatprep.mubr.f32.mxu0 0.0
    %1019 = vmatmul.mubr.f32.gmra.mrb[0].mxu0 %v719
    %v1020 = vpop.f32.mrb[0].mxu0
    %v1021 = vadd.f32 %v767, %v1020
    %v1022 = vpop.f32.mrb[0].mxu0
    %1023 = vmatprep.mubr.f32.mxu0 0.0
    %1024 = vmatmul.mubr.f32.gmra.mrb[0].mxu0 %v720
    %v1025 = vpop.f32.mrb[0].mxu0
    %v1026 = vadd.f32 %v767, %v1025
    %v1027 = vpop.f32.mrb[0].mxu0
    %1028 = vmatprep.mubr.f32.mxu0 0.0
    %1029 = vmatmul.mubr.f32.gmra.mrb[0].mxu0 %v721
    %v1030 = vpop.f32.mrb[0].mxu0
    %v1031 = vadd.f32 %v767, %v1030
    %v1032 = vpop.f32.mrb[0].mxu0
    %1033 = vmatprep.mubr.f32.mxu0 0.0
    %1034 = vmatmul.mubr.f32.gmra.mrb[0].mxu0 %v722
    %v1035 = vpop.f32.mrb[0].mxu0
    %v1036 = vadd.f32 %v767, %v1035
    %v1037 = vpop.f32.mrb[0].mxu0
    %1038 = vmatprep.mubr.f32.mxu0 0.0
    %1039 = vmatmul.mubr.f32.gmra.mrb[0].mxu0 %v723
    %v1040 = vpop.f32.mrb[0].mxu0
    %v1041 = vadd.f32 %v767, %v1040
    %v1042 = vpop.f32.mrb[0].mxu0
    %1043 = vmatprep.mubr.f32.mxu0 0.0
    %1044 = vmatmul.mubr.f32.gmra.mrb[0].mxu0 %v724
    %v1045 = vpop.f32.mrb[0].mxu0
    %v1046 = vadd.f32 %v767, %v1045
    %v1047 = vpop.f32.mrb[0].mxu0
    %1048 = vmatprep.mubr.f32.mxu0 0.0
    %1049 = vmatmul.mubr.f32.gmra.mrb[0].mxu0 %v725
    %v1050 = vpop.f32.mrb[0].mxu0
    %v1051 = vadd.f32 %v767, %v1050
    %v1052 = vpop.f32.mrb[0].mxu0
    %1053 = vmatprep.mubr.f32.mxu0 0.0
    %1054 = vmatmul.mubr.f32.gmra.mrb[0].mxu0 %v726
    %v1055 = vpop.f32.mrb[0].mxu0
    %v1056 = vadd.f32 %v767, %v1055
    %v1057 = vpop.f32.mrb[0].mxu0
    %1058 = vmatprep.mubr.f32.mxu0 0.0
    %1059 = vmatmul.mubr.f32.gmra.mrb[0].mxu0 %v727
    %v1060 = vpop.f32.mrb[0].mxu0
    %v1061 = vadd.f32 %v767, %v1060
    %v1062 = vpop.f32.mrb[0].mxu0
    %1063 = vmatprep.mubr.f32.mxu0 0.0
    %1064 = vmatmul.mubr.f32.gmra.mrb[0].mxu0 %v728
    %v1065 = vpop.f32.mrb[0].mxu0
    %v1066 = vadd.f32 %v767, %v1065
    %v1067 = vpop.f32.mrb[0].mxu0
    %1068 = vmatprep.mubr.f32.mxu0 0.0
    %1069 = vmatmul.mubr.f32.gmra.mrb[0].mxu0 %v729
    %v1070 = vpop.f32.mrb[0].mxu0
    %v1071 = vadd.f32 %v767, %v1070
    %v1072 = vpop.f32.mrb[0].mxu0
    %1073 = vmatprep.mubr.f32.mxu0 0.0
    %1074 = vmatmul.mubr.f32.gmra.mrb[0].mxu0 %v730
    %v1075 = vpop.f32.mrb[0].mxu0
    %v1076 = vadd.f32 %v767, %v1075
    %v1077 = vpop.f32.mrb[0].mxu0
    %1078 = vmatprep.mubr.f32.mxu0 0.0
    %1079 = vmatmul.mubr.f32.gmra.mrb[0].mxu0 %v731
    %v1080 = vpop.f32.mrb[0].mxu0
    %v1081 = vadd.f32 %v767, %v1080
    %v1082 = vpop.f32.mrb[0].mxu0
    %1083 = vmatprep.mubr.f32.mxu0 0.0
    %1084 = vmatmul.mubr.f32.gmra.mrb[0].mxu0 %v732
    %v1085 = vpop.f32.mrb[0].mxu0
    %v1086 = vadd.f32 %v767, %v1085
    %v1087 = vpop.f32.mrb[0].mxu0
    %1088 = vmatprep.mubr.f32.mxu0 0.0
    %1089 = vmatmul.mubr.f32.gmra.mrb[0].mxu0 %v733
    %v1090 = vpop.f32.mrb[0].mxu0
    %v1091 = vadd.f32 %v767, %v1090
    %v1092 = vpop.f32.mrb[0].mxu0
    %1093 = vmatprep.mubr.f32.mxu0 0.0
    %1094 = vmatmul.mubr.f32.gmra.mrb[0].mxu0 %v734
    %v1095 = vpop.f32.mrb[0].mxu0
    %v1096 = vadd.f32 %v767, %v1095
    %v1097 = vpop.f32.mrb[0].mxu0
    %1098 = vmatprep.mubr.f32.mxu0 0.0
    %1099 = vmatmul.mubr.f32.gmra.mrb[0].mxu0 %v735
    %v1100 = vpop.f32.mrb[0].mxu0
    %v1101 = vadd.f32 %v767, %v1100
    %v1102 = vpop.f32.mrb[0].mxu0
    %1103 = vmatprep.mubr.f32.mxu0 0.0
    %1104 = vmatmul.mubr.f32.gmra.mrb[0].mxu0 %v736
    %v1105 = vpop.f32.mrb[0].mxu0
    %v1106 = vadd.f32 %v767, %v1105
    %v1107 = vpop.f32.mrb[0].mxu0
    %1108 = vmatprep.mubr.f32.mxu0 0.0
    %1109 = vmatmul.mubr.f32.gmra.mrb[0].mxu0 %v737
    %v1110 = vpop.f32.mrb[0].mxu0
    %v1111 = vadd.f32 %v767, %v1110
    %v1112 = vpop.f32.mrb[0].mxu0
    %1113 = vmatprep.mubr.f32.mxu0 0.0
    %1114 = vmatmul.mubr.f32.gmra.mrb[0].mxu0 %v738
    %v1115 = vpop.f32.mrb[0].mxu0
    %v1116 = vadd.f32 %v767, %v1115
    %v1117 = vpop.f32.mrb[0].mxu0
    %1118 = vmatprep.mubr.f32.mxu0 0.0
    %1119 = vmatmul.mubr.f32.gmra.mrb[0].mxu0 %v739
    %v1120 = vpop.f32.mrb[0].mxu0
    %v1121 = vadd.f32 %v767, %v1120
    %v1122 = vpop.f32.mrb[0].mxu0
    %1123 = vmatprep.mubr.f32.mxu0 0.0
    %1124 = vmatmul.mubr.f32.gmra.mrb[0].mxu0 %v740
    %v1125 = vpop.f32.mrb[0].mxu0
    %v1126 = vadd.f32 %v767, %v1125
    %v1127 = vpop.f32.mrb[0].mxu0
    %1128 = vmatprep.mubr.f32.mxu0 0.0
    %1129 = vmatmul.mubr.f32.gmra.mrb[0].mxu0 %v741
    %v1130 = vpop.f32.mrb[0].mxu0
    %v1131 = vadd.f32 %v767, %v1130
    %v1132 = vpop.f32.mrb[0].mxu0
    %1133 = vmatprep.mubr.f32.mxu0 0.0
    %1134 = vmatmul.mubr.f32.gmra.mrb[0].mxu0 %v742
    %v1135 = vpop.f32.mrb[0].mxu0
    %v1136 = vadd.f32 %v767, %v1135
    %v1137 = vpop.f32.mrb[0].mxu0
    %1138 = vmatprep.mubr.f32.mxu0 0.0
    %1139 = vmatmul.mubr.f32.gmra.mrb[0].mxu0 %v743
    %v1140 = vpop.f32.mrb[0].mxu0
    %v1141 = vadd.f32 %v767, %v1140
    %v1142 = vpop.f32.mrb[0].mxu0
    %1143 = vmatprep.mubr.f32.mxu0 0.0
    %1144 = vmatmul.mubr.f32.gmra.mrb[0].mxu0 %v744
    %v1145 = vpop.f32.mrb[0].mxu0
    %v1146 = vadd.f32 %v767, %v1145
    %v1147 = vpop.f32.mrb[0].mxu0
    %1148 = vmatprep.mubr.f32.mxu0 0.0
    %1149 = vmatmul.mubr.f32.gmra.mrb[0].mxu0 %v745
    %v1150 = vpop.f32.mrb[0].mxu0
    %v1151 = vadd.f32 %v767, %v1150
    %v1152 = vpop.f32.mrb[0].mxu0
    %1153 = vdwg.mxu0
    %v1154 = vmax.f32 %v836, 0.0
    %v1155 = vmax.f32 %v841, 0.0
    %v1156 = vmax.f32 %v846, 0.0
    %v1157 = vmax.f32 %v851, 0.0
    %v1158 = vmax.f32 %v856, 0.0
    %v1159 = vmax.f32 %v861, 0.0
    %v1160 = vmax.f32 %v866, 0.0
    %v1161 = vmax.f32 %v871, 0.0
    %v1162 = vmax.f32 %v876, 0.0
    %v1163 = vmax.f32 %v881, 0.0
    %v1164 = vmax.f32 %v886, 0.0
    %v1165 = vmax.f32 %v891, 0.0
    %v1166 = vmax.f32 %v896, 0.0
    %v1167 = vmax.f32 %v901, 0.0
    %v1168 = vmax.f32 %v906, 0.0
    %v1169 = vmax.f32 %v911, 0.0
    %v1170 = vmax.f32 %v916, 0.0
    %v1171 = vmax.f32 %v921, 0.0
    %v1172 = vmax.f32 %v926, 0.0
    %v1173 = vmax.f32 %v931, 0.0
    %v1174 = vmax.f32 %v936, 0.0
    %v1175 = vmax.f32 %v941, 0.0
    %v1176 = vmax.f32 %v946, 0.0
    %v1177 = vmax.f32 %v951, 0.0
    %v1178 = vmax.f32 %v956, 0.0
    %v1179 = vmax.f32 %v961, 0.0
    %v1180 = vmax.f32 %v966, 0.0
    %v1181 = vmax.f32 %v971, 0.0
    %v1182 = vmax.f32 %v976, 0.0
    %v1183 = vmax.f32 %v981, 0.0
    %v1184 = vmax.f32 %v986, 0.0
    %v1185 = vmax.f32 %v991, 0.0
    %v1186 = vmax.f32 %v996, 0.0
    %v1187 = vmax.f32 %v1001, 0.0
    %v1188 = vmax.f32 %v1006, 0.0
    %v1189 = vmax.f32 %v1011, 0.0
    %v1190 = vmax.f32 %v1016, 0.0
    %v1191 = vmax.f32 %v1021, 0.0
    %v1192 = vmax.f32 %v1026, 0.0
    %v1193 = vmax.f32 %v1031, 0.0
    %v1194 = vmax.f32 %v1036, 0.0
    %v1195 = vmax.f32 %v1041, 0.0
    %v1196 = vmax.f32 %v1046, 0.0
    %v1197 = vmax.f32 %v1051, 0.0
    %v1198 = vmax.f32 %v1056, 0.0
    %v1199 = vmax.f32 %v1061, 0.0
    %v1200 = vmax.f32 %v1066, 0.0
    %v1201 = vmax.f32 %v1071, 0.0
    %v1202 = vmax.f32 %v1076, 0.0
    %v1203 = vmax.f32 %v1081, 0.0
    %v1204 = vmax.f32 %v1086, 0.0
    %v1205 = vmax.f32 %v1091, 0.0
    %v1206 = vmax.f32 %v1096, 0.0
    %v1207 = vmax.f32 %v1101, 0.0
    %v1208 = vmax.f32 %v1106, 0.0
    %v1209 = vmax.f32 %v1111, 0.0
    %v1210 = vmax.f32 %v1116, 0.0
    %v1211 = vmax.f32 %v1121, 0.0
    %v1212 = vmax.f32 %v1126, 0.0
    %v1213 = vmax.f32 %v1131, 0.0
    %v1214 = vmax.f32 %v1136, 0.0
    %v1215 = vmax.f32 %v1141, 0.0
    %v1216 = vmax.f32 %v1146, 0.0
    %v1217 = vmax.f32 %v1151, 0.0
    %v1218 = vld [vmem:[%s5] sm:$0xff]
    %v1219 = vld [vmem:[%s5 + $0x8] sm:$0xff]
    %v1220 = vld [vmem:[%s5 + $0x10] sm:$0xff]
    %v1221 = vld [vmem:[%s5 + $0x18] sm:$0xff]
    %v1222 = vld [vmem:[%s5 + $0x20] sm:$0xff]
    %v1223 = vld [vmem:[%s5 + $0x28] sm:$0xff]
    %v1224 = vld [vmem:[%s5 + $0x30] sm:$0xff]
    %v1225 = vld [vmem:[%s5 + $0x38] sm:$0xff]
    %v1226 = vld [vmem:[%s5 + $0x40] sm:$0xff]
    %v1227 = vld [vmem:[%s5 + $0x48] sm:$0xff]
    %v1228 = vld [vmem:[%s5 + $0x50] sm:$0xff]
    %v1229 = vld [vmem:[%s5 + $0x58] sm:$0xff]
    %v1230 = vld [vmem:[%s5 + $0x60] sm:$0xff]
    %v1231 = vld [vmem:[%s5 + $0x68] sm:$0xff]
    %v1232 = vld [vmem:[%s5 + $0x70] sm:$0xff]
    %v1233 = vld [vmem:[%s5 + $0x78] sm:$0xff]
    %v1234 = vld [vmem:[%s6] sm:$0x1]
    %v1236 = vlaneseq
    %v1237 = vshrl.u32 %v1236, 7
    %v1238 = vsub.s32 0, %v1237
    %v1239 = vrot.slane %v1234, %v1238
    %1241 = vmatprep.subr.mxu0 0.0
    %1242 = vmatpush1.msra.mxu0 %v1218
    %1243 = vmatprep.subr.mxu0 0.0
    %1244 = vmatpush1.msra.mxu0 %v1219
    %1245 = vmatprep.subr.mxu0 0.0
    %1246 = vmatpush1.msra.mxu0 %v1220
    %1247 = vmatprep.subr.mxu0 0.0
    %1248 = vmatpush1.msra.mxu0 %v1221
    %1249 = vmatprep.subr.mxu0 0.0
    %1250 = vmatpush1.msra.mxu0 %v1222
    %1251 = vmatprep.subr.mxu0 0.0
    %1252 = vmatpush1.msra.mxu0 %v1223
    %1253 = vmatprep.subr.mxu0 0.0
    %1254 = vmatpush1.msra.mxu0 %v1224
    %1255 = vmatprep.subr.mxu0 0.0
    %1256 = vmatpush1.msra.mxu0 %v1225
    %1257 = vmatprep.subr.mxu0 0.0
    %1258 = vmatpush1.msra.mxu0 %v1226
    %1259 = vmatprep.subr.mxu0 0.0
    %1260 = vmatpush1.msra.mxu0 %v1227
    %1261 = vmatprep.subr.mxu0 0.0
    %1262 = vmatpush1.msra.mxu0 %v1228
    %1263 = vmatprep.subr.mxu0 0.0
    %1264 = vmatpush1.msra.mxu0 %v1229
    %1265 = vmatprep.subr.mxu0 0.0
    %1266 = vmatpush1.msra.mxu0 %v1230
    %1267 = vmatprep.subr.mxu0 0.0
    %1268 = vmatpush1.msra.mxu0 %v1231
    %1269 = vmatprep.subr.mxu0 0.0
    %1270 = vmatpush1.msra.mxu0 %v1232
    %1271 = vmatprep.subr.mxu0 0.0
    %1272 = vmatpush1.msra.mxu0 %v1233
    %1273 = vmatprep.subr.mxu0 0.0
    %1274 = vmatpush1.msra.mxu0 0.0
    %1275 = vmatprep.subr.mxu0 0.0
    %1276 = vmatpush1.msra.mxu0 0.0
    %1277 = vmatprep.subr.mxu0 0.0
    %1278 = vmatpush1.msra.mxu0 0.0
    %1279 = vmatprep.subr.mxu0 0.0
    %1280 = vmatpush1.msra.mxu0 0.0
    %1281 = vmatprep.subr.mxu0 0.0
    %1282 = vmatpush1.msra.mxu0 0.0
    %1283 = vmatprep.subr.mxu0 0.0
    %1284 = vmatpush1.msra.mxu0 0.0
    %1285 = vmatprep.subr.mxu0 0.0
    %1286 = vmatpush1.msra.mxu0 0.0
    %1287 = vmatprep.subr.mxu0 0.0
    %1288 = vmatpush1.msra.mxu0 0.0
    %1289 = vmatprep.subr.mxu0 0.0
    %1290 = vmatpush1.msra.mxu0 0.0
    %1291 = vmatprep.subr.mxu0 0.0
    %1292 = vmatpush1.msra.mxu0 0.0
    %1293 = vmatprep.subr.mxu0 0.0
    %1294 = vmatpush1.msra.mxu0 0.0
    %1295 = vmatprep.subr.mxu0 0.0
    %1296 = vmatpush1.msra.mxu0 0.0
    %1297 = vmatprep.subr.mxu0 0.0
    %1298 = vmatpush1.msra.mxu0 0.0
    %1299 = vmatprep.subr.mxu0 0.0
    %1300 = vmatpush1.msra.mxu0 0.0
    %1301 = vmatprep.subr.mxu0 0.0
    %1302 = vmatpush1.msra.mxu0 0.0
    %1303 = vmatprep.subr.mxu0 0.0
    %1304 = vmatpush1.msra.mxu0 0.0
    %1305 = vmatprep.mubr.f32.mxu0 0.0
    %1306 = vmatmul.mubr.f32.gmra.mrb[0].mxu0 %v1154
    %v1307 = vpop.f32.mrb[0].mxu0
    %v1308 = vadd.f32 %v1239, %v1307
    %v1309 = vpop.f32.mrb[0].mxu0
    %1310 = vmatprep.mubr.f32.mxu0 0.0
    %1311 = vmatmul.mubr.f32.gmra.mrb[0].mxu0 %v1155
    %v1312 = vpop.f32.mrb[0].mxu0
    %v1313 = vadd.f32 %v1239, %v1312
    %v1314 = vpop.f32.mrb[0].mxu0
    %1315 = vmatprep.mubr.f32.mxu0 0.0
    %1316 = vmatmul.mubr.f32.gmra.mrb[0].mxu0 %v1156
    %v1317 = vpop.f32.mrb[0].mxu0
    %v1318 = vadd.f32 %v1239, %v1317
    %v1319 = vpop.f32.mrb[0].mxu0
    %1320 = vmatprep.mubr.f32.mxu0 0.0
    %1321 = vmatmul.mubr.f32.gmra.mrb[0].mxu0 %v1157
    %v1322 = vpop.f32.mrb[0].mxu0
    %v1323 = vadd.f32 %v1239, %v1322
    %v1324 = vpop.f32.mrb[0].mxu0
    %1325 = vmatprep.mubr.f32.mxu0 0.0
    %1326 = vmatmul.mubr.f32.gmra.mrb[0].mxu0 %v1158
    %v1327 = vpop.f32.mrb[0].mxu0
    %v1328 = vadd.f32 %v1239, %v1327
    %v1329 = vpop.f32.mrb[0].mxu0
    %1330 = vmatprep.mubr.f32.mxu0 0.0
    %1331 = vmatmul.mubr.f32.gmra.mrb[0].mxu0 %v1159
    %v1332 = vpop.f32.mrb[0].mxu0
    %v1333 = vadd.f32 %v1239, %v1332
    %v1334 = vpop.f32.mrb[0].mxu0
    %1335 = vmatprep.mubr.f32.mxu0 0.0
    %1336 = vmatmul.mubr.f32.gmra.mrb[0].mxu0 %v1160
    %v1337 = vpop.f32.mrb[0].mxu0
    %v1338 = vadd.f32 %v1239, %v1337
    %v1339 = vpop.f32.mrb[0].mxu0
    %1340 = vmatprep.mubr.f32.mxu0 0.0
    %1341 = vmatmul.mubr.f32.gmra.mrb[0].mxu0 %v1161
    %v1342 = vpop.f32.mrb[0].mxu0
    %v1343 = vadd.f32 %v1239, %v1342
    %v1344 = vpop.f32.mrb[0].mxu0
    %1345 = vmatprep.mubr.f32.mxu0 0.0
    %1346 = vmatmul.mubr.f32.gmra.mrb[0].mxu0 %v1162
    %v1347 = vpop.f32.mrb[0].mxu0
    %v1348 = vadd.f32 %v1239, %v1347
    %v1349 = vpop.f32.mrb[0].mxu0
    %1350 = vmatprep.mubr.f32.mxu0 0.0
    %1351 = vmatmul.mubr.f32.gmra.mrb[0].mxu0 %v1163
    %v1352 = vpop.f32.mrb[0].mxu0
    %v1353 = vadd.f32 %v1239, %v1352
    %v1354 = vpop.f32.mrb[0].mxu0
    %1355 = vmatprep.mubr.f32.mxu0 0.0
    %1356 = vmatmul.mubr.f32.gmra.mrb[0].mxu0 %v1164
    %v1357 = vpop.f32.mrb[0].mxu0
    %v1358 = vadd.f32 %v1239, %v1357
    %v1359 = vpop.f32.mrb[0].mxu0
    %1360 = vmatprep.mubr.f32.mxu0 0.0
    %1361 = vmatmul.mubr.f32.gmra.mrb[0].mxu0 %v1165
    %v1362 = vpop.f32.mrb[0].mxu0
    %v1363 = vadd.f32 %v1239, %v1362
    %v1364 = vpop.f32.mrb[0].mxu0
    %1365 = vmatprep.mubr.f32.mxu0 0.0
    %1366 = vmatmul.mubr.f32.gmra.mrb[0].mxu0 %v1166
    %v1367 = vpop.f32.mrb[0].mxu0
    %v1368 = vadd.f32 %v1239, %v1367
    %v1369 = vpop.f32.mrb[0].mxu0
    %1370 = vmatprep.mubr.f32.mxu0 0.0
    %1371 = vmatmul.mubr.f32.gmra.mrb[0].mxu0 %v1167
    %v1372 = vpop.f32.mrb[0].mxu0
    %v1373 = vadd.f32 %v1239, %v1372
    %v1374 = vpop.f32.mrb[0].mxu0
    %1375 = vmatprep.mubr.f32.mxu0 0.0
    %1376 = vmatmul.mubr.f32.gmra.mrb[0].mxu0 %v1168
    %v1377 = vpop.f32.mrb[0].mxu0
    %v1378 = vadd.f32 %v1239, %v1377
    %v1379 = vpop.f32.mrb[0].mxu0
    %1380 = vmatprep.mubr.f32.mxu0 0.0
    %1381 = vmatmul.mubr.f32.gmra.mrb[0].mxu0 %v1169
    %v1382 = vpop.f32.mrb[0].mxu0
    %v1383 = vadd.f32 %v1239, %v1382
    %v1384 = vpop.f32.mrb[0].mxu0
    %1385 = vmatprep.mubr.f32.mxu0 0.0
    %1386 = vmatmul.mubr.f32.gmra.mrb[0].mxu0 %v1170
    %v1387 = vpop.f32.mrb[0].mxu0
    %v1388 = vadd.f32 %v1239, %v1387
    %v1389 = vpop.f32.mrb[0].mxu0
    %1390 = vmatprep.mubr.f32.mxu0 0.0
    %1391 = vmatmul.mubr.f32.gmra.mrb[0].mxu0 %v1171
    %v1392 = vpop.f32.mrb[0].mxu0
    %v1393 = vadd.f32 %v1239, %v1392
    %v1394 = vpop.f32.mrb[0].mxu0
    %1395 = vmatprep.mubr.f32.mxu0 0.0
    %1396 = vmatmul.mubr.f32.gmra.mrb[0].mxu0 %v1172
    %v1397 = vpop.f32.mrb[0].mxu0
    %v1398 = vadd.f32 %v1239, %v1397
    %v1399 = vpop.f32.mrb[0].mxu0
    %1400 = vmatprep.mubr.f32.mxu0 0.0
    %1401 = vmatmul.mubr.f32.gmra.mrb[0].mxu0 %v1173
    %v1402 = vpop.f32.mrb[0].mxu0
    %v1403 = vadd.f32 %v1239, %v1402
    %v1404 = vpop.f32.mrb[0].mxu0
    %1405 = vmatprep.mubr.f32.mxu0 0.0
    %1406 = vmatmul.mubr.f32.gmra.mrb[0].mxu0 %v1174
    %v1407 = vpop.f32.mrb[0].mxu0
    %v1408 = vadd.f32 %v1239, %v1407
    %v1409 = vpop.f32.mrb[0].mxu0
    %1410 = vmatprep.mubr.f32.mxu0 0.0
    %1411 = vmatmul.mubr.f32.gmra.mrb[0].mxu0 %v1175
    %v1412 = vpop.f32.mrb[0].mxu0
    %v1413 = vadd.f32 %v1239, %v1412
    %v1414 = vpop.f32.mrb[0].mxu0
    %1415 = vmatprep.mubr.f32.mxu0 0.0
    %1416 = vmatmul.mubr.f32.gmra.mrb[0].mxu0 %v1176
    %v1417 = vpop.f32.mrb[0].mxu0
    %v1418 = vadd.f32 %v1239, %v1417
    %v1419 = vpop.f32.mrb[0].mxu0
    %1420 = vmatprep.mubr.f32.mxu0 0.0
    %1421 = vmatmul.mubr.f32.gmra.mrb[0].mxu0 %v1177
    %v1422 = vpop.f32.mrb[0].mxu0
    %v1423 = vadd.f32 %v1239, %v1422
    %v1424 = vpop.f32.mrb[0].mxu0
    %1425 = vmatprep.mubr.f32.mxu0 0.0
    %1426 = vmatmul.mubr.f32.gmra.mrb[0].mxu0 %v1178
    %v1427 = vpop.f32.mrb[0].mxu0
    %v1428 = vadd.f32 %v1239, %v1427
    %v1429 = vpop.f32.mrb[0].mxu0
    %1430 = vmatprep.mubr.f32.mxu0 0.0
    %1431 = vmatmul.mubr.f32.gmra.mrb[0].mxu0 %v1179
    %v1432 = vpop.f32.mrb[0].mxu0
    %v1433 = vadd.f32 %v1239, %v1432
    %v1434 = vpop.f32.mrb[0].mxu0
    %1435 = vmatprep.mubr.f32.mxu0 0.0
    %1436 = vmatmul.mubr.f32.gmra.mrb[0].mxu0 %v1180
    %v1437 = vpop.f32.mrb[0].mxu0
    %v1438 = vadd.f32 %v1239, %v1437
    %v1439 = vpop.f32.mrb[0].mxu0
    %1440 = vmatprep.mubr.f32.mxu0 0.0
    %1441 = vmatmul.mubr.f32.gmra.mrb[0].mxu0 %v1181
    %v1442 = vpop.f32.mrb[0].mxu0
    %v1443 = vadd.f32 %v1239, %v1442
    %v1444 = vpop.f32.mrb[0].mxu0
    %1445 = vmatprep.mubr.f32.mxu0 0.0
    %1446 = vmatmul.mubr.f32.gmra.mrb[0].mxu0 %v1182
    %v1447 = vpop.f32.mrb[0].mxu0
    %v1448 = vadd.f32 %v1239, %v1447
    %v1449 = vpop.f32.mrb[0].mxu0
    %1450 = vmatprep.mubr.f32.mxu0 0.0
    %1451 = vmatmul.mubr.f32.gmra.mrb[0].mxu0 %v1183
    %v1452 = vpop.f32.mrb[0].mxu0
    %v1453 = vadd.f32 %v1239, %v1452
    %v1454 = vpop.f32.mrb[0].mxu0
    %1455 = vmatprep.mubr.f32.mxu0 0.0
    %1456 = vmatmul.mubr.f32.gmra.mrb[0].mxu0 %v1184
    %v1457 = vpop.f32.mrb[0].mxu0
    %v1458 = vadd.f32 %v1239, %v1457
    %v1459 = vpop.f32.mrb[0].mxu0
    %1460 = vmatprep.mubr.f32.mxu0 0.0
    %1461 = vmatmul.mubr.f32.gmra.mrb[0].mxu0 %v1185
    %v1462 = vpop.f32.mrb[0].mxu0
    %v1463 = vadd.f32 %v1239, %v1462
    %v1464 = vpop.f32.mrb[0].mxu0
    %1465 = vmatprep.mubr.f32.mxu0 0.0
    %1466 = vmatmul.mubr.f32.gmra.mrb[0].mxu0 %v1186
    %v1467 = vpop.f32.mrb[0].mxu0
    %v1468 = vadd.f32 %v1239, %v1467
    %v1469 = vpop.f32.mrb[0].mxu0
    %1470 = vmatprep.mubr.f32.mxu0 0.0
    %1471 = vmatmul.mubr.f32.gmra.mrb[0].mxu0 %v1187
    %v1472 = vpop.f32.mrb[0].mxu0
    %v1473 = vadd.f32 %v1239, %v1472
    %v1474 = vpop.f32.mrb[0].mxu0
    %1475 = vmatprep.mubr.f32.mxu0 0.0
    %1476 = vmatmul.mubr.f32.gmra.mrb[0].mxu0 %v1188
    %v1477 = vpop.f32.mrb[0].mxu0
    %v1478 = vadd.f32 %v1239, %v1477
    %v1479 = vpop.f32.mrb[0].mxu0
    %1480 = vmatprep.mubr.f32.mxu0 0.0
    %1481 = vmatmul.mubr.f32.gmra.mrb[0].mxu0 %v1189
    %v1482 = vpop.f32.mrb[0].mxu0
    %v1483 = vadd.f32 %v1239, %v1482
    %v1484 = vpop.f32.mrb[0].mxu0
    %1485 = vmatprep.mubr.f32.mxu0 0.0
    %1486 = vmatmul.mubr.f32.gmra.mrb[0].mxu0 %v1190
    %v1487 = vpop.f32.mrb[0].mxu0
    %v1488 = vadd.f32 %v1239, %v1487
    %v1489 = vpop.f32.mrb[0].mxu0
    %1490 = vmatprep.mubr.f32.mxu0 0.0
    %1491 = vmatmul.mubr.f32.gmra.mrb[0].mxu0 %v1191
    %v1492 = vpop.f32.mrb[0].mxu0
    %v1493 = vadd.f32 %v1239, %v1492
    %v1494 = vpop.f32.mrb[0].mxu0
    %1495 = vmatprep.mubr.f32.mxu0 0.0
    %1496 = vmatmul.mubr.f32.gmra.mrb[0].mxu0 %v1192
    %v1497 = vpop.f32.mrb[0].mxu0
    %v1498 = vadd.f32 %v1239, %v1497
    %v1499 = vpop.f32.mrb[0].mxu0
    %1500 = vmatprep.mubr.f32.mxu0 0.0
    %1501 = vmatmul.mubr.f32.gmra.mrb[0].mxu0 %v1193
    %v1502 = vpop.f32.mrb[0].mxu0
    %v1503 = vadd.f32 %v1239, %v1502
    %v1504 = vpop.f32.mrb[0].mxu0
    %1505 = vmatprep.mubr.f32.mxu0 0.0
    %1506 = vmatmul.mubr.f32.gmra.mrb[0].mxu0 %v1194
    %v1507 = vpop.f32.mrb[0].mxu0
    %v1508 = vadd.f32 %v1239, %v1507
    %v1509 = vpop.f32.mrb[0].mxu0
    %1510 = vmatprep.mubr.f32.mxu0 0.0
    %1511 = vmatmul.mubr.f32.gmra.mrb[0].mxu0 %v1195
    %v1512 = vpop.f32.mrb[0].mxu0
    %v1513 = vadd.f32 %v1239, %v1512
    %v1514 = vpop.f32.mrb[0].mxu0
    %1515 = vmatprep.mubr.f32.mxu0 0.0
    %1516 = vmatmul.mubr.f32.gmra.mrb[0].mxu0 %v1196
    %v1517 = vpop.f32.mrb[0].mxu0
    %v1518 = vadd.f32 %v1239, %v1517
    %v1519 = vpop.f32.mrb[0].mxu0
    %1520 = vmatprep.mubr.f32.mxu0 0.0
    %1521 = vmatmul.mubr.f32.gmra.mrb[0].mxu0 %v1197
    %v1522 = vpop.f32.mrb[0].mxu0
    %v1523 = vadd.f32 %v1239, %v1522
    %v1524 = vpop.f32.mrb[0].mxu0
    %1525 = vmatprep.mubr.f32.mxu0 0.0
    %1526 = vmatmul.mubr.f32.gmra.mrb[0].mxu0 %v1198
    %v1527 = vpop.f32.mrb[0].mxu0
    %v1528 = vadd.f32 %v1239, %v1527
    %v1529 = vpop.f32.mrb[0].mxu0
    %1530 = vmatprep.mubr.f32.mxu0 0.0
    %1531 = vmatmul.mubr.f32.gmra.mrb[0].mxu0 %v1199
    %v1532 = vpop.f32.mrb[0].mxu0
    %v1533 = vadd.f32 %v1239, %v1532
    %v1534 = vpop.f32.mrb[0].mxu0
    %1535 = vmatprep.mubr.f32.mxu0 0.0
    %1536 = vmatmul.mubr.f32.gmra.mrb[0].mxu0 %v1200
    %v1537 = vpop.f32.mrb[0].mxu0
    %v1538 = vadd.f32 %v1239, %v1537
    %v1539 = vpop.f32.mrb[0].mxu0
    %1540 = vmatprep.mubr.f32.mxu0 0.0
    %1541 = vmatmul.mubr.f32.gmra.mrb[0].mxu0 %v1201
    %v1542 = vpop.f32.mrb[0].mxu0
    %v1543 = vadd.f32 %v1239, %v1542
    %v1544 = vpop.f32.mrb[0].mxu0
    %1545 = vmatprep.mubr.f32.mxu0 0.0
    %1546 = vmatmul.mubr.f32.gmra.mrb[0].mxu0 %v1202
    %v1547 = vpop.f32.mrb[0].mxu0
    %v1548 = vadd.f32 %v1239, %v1547
    %v1549 = vpop.f32.mrb[0].mxu0
    %1550 = vmatprep.mubr.f32.mxu0 0.0
    %1551 = vmatmul.mubr.f32.gmra.mrb[0].mxu0 %v1203
    %v1552 = vpop.f32.mrb[0].mxu0
    %v1553 = vadd.f32 %v1239, %v1552
    %v1554 = vpop.f32.mrb[0].mxu0
    %1555 = vmatprep.mubr.f32.mxu0 0.0
    %1556 = vmatmul.mubr.f32.gmra.mrb[0].mxu0 %v1204
    %v1557 = vpop.f32.mrb[0].mxu0
    %v1558 = vadd.f32 %v1239, %v1557
    %v1559 = vpop.f32.mrb[0].mxu0
    %1560 = vmatprep.mubr.f32.mxu0 0.0
    %1561 = vmatmul.mubr.f32.gmra.mrb[0].mxu0 %v1205
    %v1562 = vpop.f32.mrb[0].mxu0
    %v1563 = vadd.f32 %v1239, %v1562
    %v1564 = vpop.f32.mrb[0].mxu0
    %1565 = vmatprep.mubr.f32.mxu0 0.0
    %1566 = vmatmul.mubr.f32.gmra.mrb[0].mxu0 %v1206
    %v1567 = vpop.f32.mrb[0].mxu0
    %v1568 = vadd.f32 %v1239, %v1567
    %v1569 = vpop.f32.mrb[0].mxu0
    %1570 = vmatprep.mubr.f32.mxu0 0.0
    %1571 = vmatmul.mubr.f32.gmra.mrb[0].mxu0 %v1207
    %v1572 = vpop.f32.mrb[0].mxu0
    %v1573 = vadd.f32 %v1239, %v1572
    %v1574 = vpop.f32.mrb[0].mxu0
    %1575 = vmatprep.mubr.f32.mxu0 0.0
    %1576 = vmatmul.mubr.f32.gmra.mrb[0].mxu0 %v1208
    %v1577 = vpop.f32.mrb[0].mxu0
    %v1578 = vadd.f32 %v1239, %v1577
    %v1579 = vpop.f32.mrb[0].mxu0
    %1580 = vmatprep.mubr.f32.mxu0 0.0
    %1581 = vmatmul.mubr.f32.gmra.mrb[0].mxu0 %v1209
    %v1582 = vpop.f32.mrb[0].mxu0
    %v1583 = vadd.f32 %v1239, %v1582
    %v1584 = vpop.f32.mrb[0].mxu0
    %1585 = vmatprep.mubr.f32.mxu0 0.0
    %1586 = vmatmul.mubr.f32.gmra.mrb[0].mxu0 %v1210
    %v1587 = vpop.f32.mrb[0].mxu0
    %v1588 = vadd.f32 %v1239, %v1587
    %v1589 = vpop.f32.mrb[0].mxu0
    %1590 = vmatprep.mubr.f32.mxu0 0.0
    %1591 = vmatmul.mubr.f32.gmra.mrb[0].mxu0 %v1211
    %v1592 = vpop.f32.mrb[0].mxu0
    %v1593 = vadd.f32 %v1239, %v1592
    %v1594 = vpop.f32.mrb[0].mxu0
    %1595 = vmatprep.mubr.f32.mxu0 0.0
    %1596 = vmatmul.mubr.f32.gmra.mrb[0].mxu0 %v1212
    %v1597 = vpop.f32.mrb[0].mxu0
    %v1598 = vadd.f32 %v1239, %v1597
    %v1599 = vpop.f32.mrb[0].mxu0
    %1600 = vmatprep.mubr.f32.mxu0 0.0
    %1601 = vmatmul.mubr.f32.gmra.mrb[0].mxu0 %v1213
    %v1602 = vpop.f32.mrb[0].mxu0
    %v1603 = vadd.f32 %v1239, %v1602
    %v1604 = vpop.f32.mrb[0].mxu0
    %1605 = vmatprep.mubr.f32.mxu0 0.0
    %1606 = vmatmul.mubr.f32.gmra.mrb[0].mxu0 %v1214
    %v1607 = vpop.f32.mrb[0].mxu0
    %v1608 = vadd.f32 %v1239, %v1607
    %v1609 = vpop.f32.mrb[0].mxu0
    %1610 = vmatprep.mubr.f32.mxu0 0.0
    %1611 = vmatmul.mubr.f32.gmra.mrb[0].mxu0 %v1215
    %v1612 = vpop.f32.mrb[0].mxu0
    %v1613 = vadd.f32 %v1239, %v1612
    %v1614 = vpop.f32.mrb[0].mxu0
    %1615 = vmatprep.mubr.f32.mxu0 0.0
    %1616 = vmatmul.mubr.f32.gmra.mrb[0].mxu0 %v1216
    %v1617 = vpop.f32.mrb[0].mxu0
    %v1618 = vadd.f32 %v1239, %v1617
    %v1619 = vpop.f32.mrb[0].mxu0
    %1620 = vmatprep.mubr.f32.mxu0 0.0
    %1621 = vmatmul.mubr.f32.gmra.mrb[0].mxu0 %v1217
    %v1622 = vpop.f32.mrb[0].mxu0
    %v1623 = vadd.f32 %v1239, %v1622
    %v1624 = vpop.f32.mrb[0].mxu0
    %1625 = vdwg.mxu0
    %1626 = vst [vmem:[#allocation2] sm:$0xff] %v1308
    %1627 = vst [vmem:[#allocation2 + $0x8] sm:$0xff] %v1313
    %1628 = vst [vmem:[#allocation2 + $0x10] sm:$0xff] %v1318
    %1629 = vst [vmem:[#allocation2 + $0x18] sm:$0xff] %v1323
    %1630 = vst [vmem:[#allocation2 + $0x20] sm:$0xff] %v1328
    %1631 = vst [vmem:[#allocation2 + $0x28] sm:$0xff] %v1333
    %1632 = vst [vmem:[#allocation2 + $0x30] sm:$0xff] %v1338
    %1633 = vst [vmem:[#allocation2 + $0x38] sm:$0xff] %v1343
    %1634 = vst [vmem:[#allocation2 + $0x40] sm:$0xff] %v1348
    %1635 = vst [vmem:[#allocation2 + $0x48] sm:$0xff] %v1353
    %1636 = vst [vmem:[#allocation2 + $0x50] sm:$0xff] %v1358
    %1637 = vst [vmem:[#allocation2 + $0x58] sm:$0xff] %v1363
    %1638 = vst [vmem:[#allocation2 + $0x60] sm:$0xff] %v1368
    %1639 = vst [vmem:[#allocation2 + $0x68] sm:$0xff] %v1373
    %1640 = vst [vmem:[#allocation2 + $0x70] sm:$0xff] %v1378
    %1641 = vst [vmem:[#allocation2 + $0x78] sm:$0xff] %v1383
    %1642 = vst [vmem:[#allocation2 + $0x80] sm:$0xff] %v1388
    %1643 = vst [vmem:[#allocation2 + $0x88] sm:$0xff] %v1393
    %1644 = vst [vmem:[#allocation2 + $0x90] sm:$0xff] %v1398
    %1645 = vst [vmem:[#allocation2 + $0x98] sm:$0xff] %v1403
    %1646 = vst [vmem:[#allocation2 + $0xa0] sm:$0xff] %v1408
    %1647 = vst [vmem:[#allocation2 + $0xa8] sm:$0xff] %v1413
    %1648 = vst [vmem:[#allocation2 + $0xb0] sm:$0xff] %v1418
    %1649 = vst [vmem:[#allocation2 + $0xb8] sm:$0xff] %v1423
    %1650 = vst [vmem:[#allocation2 + $0xc0] sm:$0xff] %v1428
    %1651 = vst [vmem:[#allocation2 + $0xc8] sm:$0xff] %v1433
    %1652 = vst [vmem:[#allocation2 + $0xd0] sm:$0xff] %v1438
    %1653 = vst [vmem:[#allocation2 + $0xd8] sm:$0xff] %v1443
    %1654 = vst [vmem:[#allocation2 + $0xe0] sm:$0xff] %v1448
    %1655 = vst [vmem:[#allocation2 + $0xe8] sm:$0xff] %v1453
    %1656 = vst [vmem:[#allocation2 + $0xf0] sm:$0xff] %v1458
    %1657 = vst [vmem:[#allocation2 + $0xf8] sm:$0xff] %v1463
    %1658 = vst [vmem:[#allocation2 + $0x100] sm:$0xff] %v1468
    %1659 = vst [vmem:[#allocation2 + $0x108] sm:$0xff] %v1473
    %1660 = vst [vmem:[#allocation2 + $0x110] sm:$0xff] %v1478
    %1661 = vst [vmem:[#allocation2 + $0x118] sm:$0xff] %v1483
    %1662 = vst [vmem:[#allocation2 + $0x120] sm:$0xff] %v1488
    %1663 = vst [vmem:[#allocation2 + $0x128] sm:$0xff] %v1493
    %1664 = vst [vmem:[#allocation2 + $0x130] sm:$0xff] %v1498
    %1665 = vst [vmem:[#allocation2 + $0x138] sm:$0xff] %v1503
    %1666 = vst [vmem:[#allocation2 + $0x140] sm:$0xff] %v1508
    %1667 = vst [vmem:[#allocation2 + $0x148] sm:$0xff] %v1513
    %1668 = vst [vmem:[#allocation2 + $0x150] sm:$0xff] %v1518
    %1669 = vst [vmem:[#allocation2 + $0x158] sm:$0xff] %v1523
    %1670 = vst [vmem:[#allocation2 + $0x160] sm:$0xff] %v1528
    %1671 = vst [vmem:[#allocation2 + $0x168] sm:$0xff] %v1533
    %1672 = vst [vmem:[#allocation2 + $0x170] sm:$0xff] %v1538
    %1673 = vst [vmem:[#allocation2 + $0x178] sm:$0xff] %v1543
    %1674 = vst [vmem:[#allocation2 + $0x180] sm:$0xff] %v1548
    %1675 = vst [vmem:[#allocation2 + $0x188] sm:$0xff] %v1553
    %1676 = vst [vmem:[#allocation2 + $0x190] sm:$0xff] %v1558
    %1677 = vst [vmem:[#allocation2 + $0x198] sm:$0xff] %v1563
    %1678 = vst [vmem:[#allocation2 + $0x1a0] sm:$0xff] %v1568
    %1679 = vst [vmem:[#allocation2 + $0x1a8] sm:$0xff] %v1573
    %1680 = vst [vmem:[#allocation2 + $0x1b0] sm:$0xff] %v1578
    %1681 = vst [vmem:[#allocation2 + $0x1b8] sm:$0xff] %v1583
    %1682 = vst [vmem:[#allocation2 + $0x1c0] sm:$0xff] %v1588
    %1683 = vst [vmem:[#allocation2 + $0x1c8] sm:$0xff] %v1593
    %1684 = vst [vmem:[#allocation2 + $0x1d0] sm:$0xff] %v1598
    %1685 = vst [vmem:[#allocation2 + $0x1d8] sm:$0xff] %v1603
    %1686 = vst [vmem:[#allocation2 + $0x1e0] sm:$0xff] %v1608
    %1687 = vst [vmem:[#allocation2 + $0x1e8] sm:$0xff] %v1613
    %1688 = vst [vmem:[#allocation2 + $0x1f0] sm:$0xff] %v1618
    %1689 = vst [vmem:[#allocation2 + $0x1f8] sm:$0xff] %v1623
    // Predicated region
    $region30: #{tpu_custom_call.1} parent=1 // pred_check
      _
    $region31: #{tpu_custom_call.1} parent=1 // pred_check_branch
      %1691 = sbr.rel (0) target = $region33
    $region32: #{tpu_custom_call.1} parent=1 // pred_region
      %s1693 = ssub.s32 8192, 8192
      %1694 = vsyncadd [#allocation3], %s1693
      %s1695 = sshll.u32 [#allocation2], 4
      %s1696 = int_to_ptr.vmem [resolvable:$true] %s1695
      %1701 = dma.vmem_to_hbm [thread:$0]  %s1696, 8192, %s7, [#allocation3], 128, 128, 8
    $region33: #{tpu_custom_call.1} parent=1 // pred_fallthru
      _
    // Predicated region
    $region34: #{tpu_custom_call.1} parent=1 // pred_check
      _
    $region35: #{tpu_custom_call.1} parent=1 // pred_check_branch
      %1703 = sbr.rel (0) target = $region37
    $region36: #{tpu_custom_call.1} parent=1 // pred_region
      %1704 = dma.done [#allocation3], 8192
    $region37: #{tpu_custom_call.1} parent=1 // pred_fallthru
      _
    %1705 = vsyncpa [#allocation3], 1

</llo_original>
